<compile_context>
chip_gen: v7x
topology: tpu7x:2x2x1
jax: 0.10.0
libtpu: 0.0.40
codegen_flags: <defaults>
</compile_context>

<pallas_src>
import jax
import jax.numpy as jnp
from jax.experimental import pallas as pl
from jax.experimental.pallas import tpu as pltpu


INPUT_DIM = 100
H1, H2, H3 = 256, 512, 1024
OUT_DIM = 28 * 28          # 784 (equals full array dim -> lane store is fine)

IN_PAD = 128               # 100 padded up to a full lane group


def _round_up(x, m):
    return ((x + m - 1) // m) * m


def _choose_batch_tiling(B):
    """Return (tile_rows, padded_batch, n_tiles).

    Snugly covers B (waste < one tile), prefers an even number of grid steps
    whenever B > 8 (v7x has 2 TensorCores split over the 'parallel' axis),
    caps per-step tiles at 256 rows (512 for very large batches)."""
    if B <= 8:
        return 8, 8, 1                      # weight-DMA-bound regime
    cap = 512 if B >= 2048 else 256
    n = -(-B // cap)                        # ceil(B / cap)
    if n % 2:                               # even step count -> both v7x TCs busy
        n += 1
    tb = _round_up(-(-B // n), 8)           # snug tile, multiple of 8 sublanes
    return tb, n * tb, n


def _generator_kernel(x_ref,
                      w1_ref, b1_ref,
                      w2_ref, b2_ref,
                      w3_ref, b3_ref,
                      w4_ref, b4_ref,
                      o_ref):
    # All four matmuls + activations for one batch tile, fully in VMEM.
    # Matmul inputs are bf16 (weights pre-cast on host, activations cast
    # after each ReLU); accumulation is f32 on the MXU.
    x = x_ref[...]                                                   # bf16

    h = jnp.dot(x, w1_ref[...], preferred_element_type=jnp.float32) + b1_ref[...]
    h = jnp.maximum(h, 0.0).astype(jnp.bfloat16)

    h = jnp.dot(h, w2_ref[...], preferred_element_type=jnp.float32) + b2_ref[...]
    h = jnp.maximum(h, 0.0).astype(jnp.bfloat16)

    h = jnp.dot(h, w3_ref[...], preferred_element_type=jnp.float32) + b3_ref[...]
    h = jnp.maximum(h, 0.0).astype(jnp.bfloat16)

    h = jnp.dot(h, w4_ref[...], preferred_element_type=jnp.float32) + b4_ref[...]
    o_ref[...] = jnp.tanh(h)                                         # f32 out


def generator_forward(x, params, *, batch_tile=None):
    """x: (B, INPUT_DIM) float32 -> (B, 1, 28, 28) float32."""
    (w1, b1), (w2, b2), (w3, b3), (w4, b4) = params
    B = x.shape[0]

    if batch_tile is None:
        tb, Bp, n_tiles = _choose_batch_tiling(B)
    else:
        tb = _round_up(batch_tile, 8)
        Bp = _round_up(B, tb)
        n_tiles = Bp // tb

    # --- Host-side padding / dtype prep (cheap, done once under jit) -------
    # x: pad batch rows to Bp, feature cols 100 -> 128; cast to bf16.
    xp = jnp.zeros((Bp, IN_PAD), jnp.float32)
    xp = xp.at[:B, :INPUT_DIM].set(x).astype(jnp.bfloat16)

    # w1: pad input rows 100 -> 128 with zeros. Other weights unchanged.
    w1p = jnp.zeros((IN_PAD, H1), jnp.float32).at[:INPUT_DIM, :].set(w1)

    # Weights in bf16 (halves HBM/VMEM traffic, ~2-3x MXU throughput);
    # biases stay f32 (added to the f32 accumulator).
    w1b, w2b, w3b, w4b = (w.astype(jnp.bfloat16) for w in (w1p, w2, w3, w4))

    # Grid-invariant weights/biases: same block every step -> single-buffered.
    resident = lambda r, c: pl.BlockSpec((r, c), lambda i: (0, 0),
                                         pipeline_mode=pl.Buffered(1))

    flops = 2 * Bp * (IN_PAD * H1 + H1 * H2 + H2 * H3 + H3 * OUT_DIM)
    bytes_accessed = (
        Bp * IN_PAD * 2 + Bp * OUT_DIM * 4
        + 2 * (IN_PAD * H1 + H1 * H2 + H2 * H3 + H3 * OUT_DIM)
        + 4 * (H1 + H2 + H3 + OUT_DIM))

    out = pl.pallas_call(
        _generator_kernel,
        out_shape=jax.ShapeDtypeStruct((Bp, OUT_DIM), jnp.float32),
        grid_spec=pltpu.PrefetchScalarGridSpec(
            num_scalar_prefetch=0,
            grid=(n_tiles,),
            in_specs=[
                pl.BlockSpec((tb, IN_PAD), lambda i: (i, 0)),
                resident(IN_PAD, H1), resident(1, H1),
                resident(H1, H2), resident(1, H2),
                resident(H2, H3), resident(1, H3),
                resident(H3, OUT_DIM), resident(1, OUT_DIM),
            ],
            out_specs=pl.BlockSpec((tb, OUT_DIM), lambda i: (i, 0)),
        ),
        compiler_params=pltpu.CompilerParams(
            dimension_semantics=("parallel",),
            vmem_limit_bytes=32 * 1024 * 1024,
        ),
        cost_estimate=pl.CostEstimate(
            flops=flops,
            transcendentals=Bp * OUT_DIM,
            bytes_accessed=bytes_accessed,
        ),
    )(xp, w1b, b1, w2b, b2, w3b, b3, w4b, b4)

    if Bp != B:
        out = out[:B]
    return out.reshape(B, 1, 28, 28)


def init_params(key):
    """Deterministic synthetic weights (shapes match the nn.Linear layers).
    Weight is stored as (in_features, out_features) so the kernel does x @ W."""
    dims = [(INPUT_DIM, H1), (H1, H2), (H2, H3), (H3, OUT_DIM)]
    params = []
    for (fan_in, fan_out) in dims:
        key, kw, kb = jax.random.split(key, 3)
        bound = 1.0 / (fan_in ** 0.5)  # same scale as torch default init
        w = jax.random.uniform(kw, (fan_in, fan_out), jnp.float32, -bound, bound)
        b = jax.random.uniform(kb, (1, fan_out), jnp.float32, -bound, bound)
        params.append((w, b))
    return params


def _reference_forward_f32(x, params):
    h = x
    for idx, (w, b) in enumerate(params):
        h = h @ w + b
        h = jnp.maximum(h, 0.0) if idx < 3 else jnp.tanh(h)
    return h.reshape(-1, 1, 28, 28)


def _reference_forward_bf16(x, params):
    # Mirrors the kernel's precision: bf16 matmul inputs, f32 accumulation.
    h = x.astype(jnp.bfloat16)
    for idx, (w, b) in enumerate(params):
        h = jnp.dot(h, w.astype(jnp.bfloat16),
                    preferred_element_type=jnp.float32) + b
        h = jnp.maximum(h, 0.0).astype(jnp.bfloat16) if idx < 3 else jnp.tanh(h)
    return h.reshape(-1, 1, 28, 28)


if __name__ == "__main__":
    key = jax.random.PRNGKey(0)
    params = init_params(key)

    # B=16 exercises the multi-step (2 x 8) grid; B=5 exercises row padding.
    for B in (16, 5):
        key, kx = jax.random.split(key)
        x = jax.random.normal(kx, (B, INPUT_DIM), jnp.float32)

        out = generator_forward(x, params)
        out = jax.block_until_ready(out)
        assert out.shape == (B, 1, 28, 28), out.shape

        # Tight check vs. a reference that mirrors the kernel's bf16 precision.
        ref_bf16 = _reference_forward_bf16(x, params)
        err_bf16 = float(jnp.max(jnp.abs(out - ref_bf16)))
        assert err_bf16 < 5e-3, err_bf16

        # Loose check vs. the full-f32 reference (bf16 matmul quantization).
        ref_f32 = _reference_forward_f32(x, params)
        err_f32 = float(jnp.max(jnp.abs(out - ref_f32)))
        assert err_f32 < 5e-2, err_f32

    print("KERNEL_OK")
</pallas_src>

<mosaic_0001>
module attributes {stable_mosaic.version = 11 : i64} {
  func.func @_generator_kernel(%arg0: i32, %arg1: memref<8x128xbf16, #tpu.memory_space<vmem>>, %arg2: memref<128x256xbf16, #tpu.memory_space<vmem>>, %arg3: memref<1x256xf32, #tpu.memory_space<vmem>>, %arg4: memref<256x512xbf16, #tpu.memory_space<vmem>>, %arg5: memref<1x512xf32, #tpu.memory_space<vmem>>, %arg6: memref<512x1024xbf16, #tpu.memory_space<vmem>>, %arg7: memref<1x1024xf32, #tpu.memory_space<vmem>>, %arg8: memref<1024x784xbf16, #tpu.memory_space<vmem>>, %arg9: memref<1x784xf32, #tpu.memory_space<vmem>>, %arg10: memref<8x784xf32, #tpu.memory_space<vmem>>) attributes {dimension_semantics = [#tpu.dimension_semantics<parallel>], iteration_bounds = array<i64: 2>, scalar_prefetch = 0 : i64, scratch_operands = 0 : i64, tpu.core_type = #tpu.core_type<tc>, window_params = [{transform_indices = @transform_0, window_bounds = array<i64: 8, 128>}, {pipeline_mode = #tpu.pipeline_mode<synchronous>, transform_indices = @transform_1, window_bounds = array<i64: 128, 256>}, {pipeline_mode = #tpu.pipeline_mode<synchronous>, transform_indices = @transform_2, window_bounds = array<i64: 1, 256>}, {pipeline_mode = #tpu.pipeline_mode<synchronous>, transform_indices = @transform_3, window_bounds = array<i64: 256, 512>}, {pipeline_mode = #tpu.pipeline_mode<synchronous>, transform_indices = @transform_4, window_bounds = array<i64: 1, 512>}, {pipeline_mode = #tpu.pipeline_mode<synchronous>, transform_indices = @transform_5, window_bounds = array<i64: 512, 1024>}, {pipeline_mode = #tpu.pipeline_mode<synchronous>, transform_indices = @transform_6, window_bounds = array<i64: 1, 1024>}, {pipeline_mode = #tpu.pipeline_mode<synchronous>, transform_indices = @transform_7, window_bounds = array<i64: 1024, 784>}, {pipeline_mode = #tpu.pipeline_mode<synchronous>, transform_indices = @transform_8, window_bounds = array<i64: 1, 784>}, {transform_indices = @transform_9, window_bounds = array<i64: 8, 784>}]} {
    %c0 = arith.constant 0 : index
    %c0_0 = arith.constant 0 : index
    %0 = vector.load %arg1[%c0, %c0_0] : memref<8x128xbf16, #tpu.memory_space<vmem>>, vector<8x128xbf16>
    %c0_1 = arith.constant 0 : index
    %c0_2 = arith.constant 0 : index
    %1 = vector.load %arg2[%c0_1, %c0_2] : memref<128x256xbf16, #tpu.memory_space<vmem>>, vector<128x256xbf16>
    %cst = arith.constant dense<0.000000e+00> : vector<8x256xf32>
    %2 = tpu.matmul %0, %1, %cst {dimension_numbers = #tpu.dot_dimension_numbers<[1], [0], [0], [1], [0, 0, 1, 1], [], []>} : vector<8x128xbf16>, vector<128x256xbf16>, vector<8x256xf32> -> vector<8x256xf32>
    %c0_3 = arith.constant 0 : index
    %c0_4 = arith.constant 0 : index
    %3 = vector.load %arg3[%c0_3, %c0_4] : memref<1x256xf32, #tpu.memory_space<vmem>>, vector<1x256xf32>
    %4 = vector.broadcast %3 : vector<1x256xf32> to vector<8x256xf32>
    %5 = arith.addf %2, %4 : vector<8x256xf32>
    %cst_5 = arith.constant 0.000000e+00 : f32
    %6 = vector.broadcast %cst_5 : f32 to vector<8x256xf32>
    %7 = arith.maximumf %5, %6 : vector<8x256xf32>
    %8 = arith.truncf %7 : vector<8x256xf32> to vector<8x256xbf16>
    %c0_6 = arith.constant 0 : index
    %c0_7 = arith.constant 0 : index
    %9 = vector.load %arg4[%c0_6, %c0_7] : memref<256x512xbf16, #tpu.memory_space<vmem>>, vector<256x512xbf16>
    %cst_8 = arith.constant dense<0.000000e+00> : vector<8x512xf32>
    %10 = tpu.matmul %8, %9, %cst_8 {dimension_numbers = #tpu.dot_dimension_numbers<[1], [0], [0], [1], [0, 0, 1, 1], [], []>} : vector<8x256xbf16>, vector<256x512xbf16>, vector<8x512xf32> -> vector<8x512xf32>
    %c0_9 = arith.constant 0 : index
    %c0_10 = arith.constant 0 : index
    %11 = vector.load %arg5[%c0_9, %c0_10] : memref<1x512xf32, #tpu.memory_space<vmem>>, vector<1x512xf32>
    %12 = vector.broadcast %11 : vector<1x512xf32> to vector<8x512xf32>
    %13 = arith.addf %10, %12 : vector<8x512xf32>
    %cst_11 = arith.constant 0.000000e+00 : f32
    %14 = vector.broadcast %cst_11 : f32 to vector<8x512xf32>
    %15 = arith.maximumf %13, %14 : vector<8x512xf32>
    %16 = arith.truncf %15 : vector<8x512xf32> to vector<8x512xbf16>
    %c0_12 = arith.constant 0 : index
    %c0_13 = arith.constant 0 : index
    %17 = vector.load %arg6[%c0_12, %c0_13] : memref<512x1024xbf16, #tpu.memory_space<vmem>>, vector<512x1024xbf16>
    %cst_14 = arith.constant dense<0.000000e+00> : vector<8x1024xf32>
    %18 = tpu.matmul %16, %17, %cst_14 {dimension_numbers = #tpu.dot_dimension_numbers<[1], [0], [0], [1], [0, 0, 1, 1], [], []>} : vector<8x512xbf16>, vector<512x1024xbf16>, vector<8x1024xf32> -> vector<8x1024xf32>
    %c0_15 = arith.constant 0 : index
    %c0_16 = arith.constant 0 : index
    %19 = vector.load %arg7[%c0_15, %c0_16] : memref<1x1024xf32, #tpu.memory_space<vmem>>, vector<1x1024xf32>
    %20 = vector.broadcast %19 : vector<1x1024xf32> to vector<8x1024xf32>
    %21 = arith.addf %18, %20 : vector<8x1024xf32>
    %cst_17 = arith.constant 0.000000e+00 : f32
    %22 = vector.broadcast %cst_17 : f32 to vector<8x1024xf32>
    %23 = arith.maximumf %21, %22 : vector<8x1024xf32>
    %24 = arith.truncf %23 : vector<8x1024xf32> to vector<8x1024xbf16>
    %c0_18 = arith.constant 0 : index
    %c0_19 = arith.constant 0 : index
    %25 = vector.load %arg8[%c0_18, %c0_19] : memref<1024x784xbf16, #tpu.memory_space<vmem>>, vector<1024x784xbf16>
    %cst_20 = arith.constant dense<0.000000e+00> : vector<8x784xf32>
    %26 = tpu.matmul %24, %25, %cst_20 {dimension_numbers = #tpu.dot_dimension_numbers<[1], [0], [0], [1], [0, 0, 1, 1], [], []>} : vector<8x1024xbf16>, vector<1024x784xbf16>, vector<8x784xf32> -> vector<8x784xf32>
    %c0_21 = arith.constant 0 : index
    %c0_22 = arith.constant 0 : index
    %27 = vector.load %arg9[%c0_21, %c0_22] : memref<1x784xf32, #tpu.memory_space<vmem>>, vector<1x784xf32>
    %28 = vector.broadcast %27 : vector<1x784xf32> to vector<8x784xf32>
    %29 = arith.addf %26, %28 : vector<8x784xf32>
    %30 = math.tanh %29 : vector<8x784xf32>
    %c0_23 = arith.constant 0 : index
    %c0_24 = arith.constant 0 : index
    %31 = vector.load %arg10[%c0_23, %c0_24] : memref<8x784xf32, #tpu.memory_space<vmem>>, vector<8x784xf32>
    tpu.vector_store %arg10[%c0_23, %c0_24], %30 {strides = array<i32>} : memref<8x784xf32, #tpu.memory_space<vmem>>, vector<8x784xf32>,
    return
  }
  func.func @transform_0(%arg0: i32) -> (i32, i32) {
    %c0_i32 = arith.constant 0 : i32
    %c0_i32_0 = arith.constant 0 : i32
    return %arg0, %c0_i32 : i32, i32
  }
  func.func @transform_1(%arg0: i32) -> (i32, i32) {
    %c0_i32 = arith.constant 0 : i32
    %c0_i32_0 = arith.constant 0 : i32
    %c0_i32_1 = arith.constant 0 : i32
    return %c0_i32, %c0_i32_0 : i32, i32
  }
  func.func @transform_2(%arg0: i32) -> (i32, i32) {
    %c0_i32 = arith.constant 0 : i32
    %c0_i32_0 = arith.constant 0 : i32
    %c0_i32_1 = arith.constant 0 : i32
    return %c0_i32, %c0_i32_0 : i32, i32
  }
  func.func @transform_3(%arg0: i32) -> (i32, i32) {
    %c0_i32 = arith.constant 0 : i32
    %c0_i32_0 = arith.constant 0 : i32
    %c0_i32_1 = arith.constant 0 : i32
    return %c0_i32, %c0_i32_0 : i32, i32
  }
  func.func @transform_4(%arg0: i32) -> (i32, i32) {
    %c0_i32 = arith.constant 0 : i32
    %c0_i32_0 = arith.constant 0 : i32
    %c0_i32_1 = arith.constant 0 : i32
    return %c0_i32, %c0_i32_0 : i32, i32
  }
  func.func @transform_5(%arg0: i32) -> (i32, i32) {
    %c0_i32 = arith.constant 0 : i32
    %c0_i32_0 = arith.constant 0 : i32
    %c0_i32_1 = arith.constant 0 : i32
    return %c0_i32, %c0_i32_0 : i32, i32
  }
  func.func @transform_6(%arg0: i32) -> (i32, i32) {
    %c0_i32 = arith.constant 0 : i32
    %c0_i32_0 = arith.constant 0 : i32
    %c0_i32_1 = arith.constant 0 : i32
    return %c0_i32, %c0_i32_0 : i32, i32
  }
  func.func @transform_7(%arg0: i32) -> (i32, i32) {
    %c0_i32 = arith.constant 0 : i32
    %c0_i32_0 = arith.constant 0 : i32
    %c0_i32_1 = arith.constant 0 : i32
    return %c0_i32, %c0_i32_0 : i32, i32
  }
  func.func @transform_8(%arg0: i32) -> (i32, i32) {
    %c0_i32 = arith.constant 0 : i32
    %c0_i32_0 = arith.constant 0 : i32
    %c0_i32_1 = arith.constant 0 : i32
    return %c0_i32, %c0_i32_0 : i32, i32
  }
  func.func @transform_9(%arg0: i32) -> (i32, i32) {
    %c0_i32 = arith.constant 0 : i32
    %c0_i32_0 = arith.constant 0 : i32
    return %arg0, %c0_i32 : i32, i32
  }
}

</mosaic_0001>

<llo_original>
// kernel: tpu_custom_call.1
$region0: #{tpu_custom_call.1}
  #allocation0 [shape = 'u32[]', space=smem, size = 0x4, offset = 0x4, fixed_abs, tag = 'smem constant byte address 0x4 - core index']
  #allocation1 [shape = 'u32[144,128]{1,0:T(1,128)}', space=vmem, size = 0x12000, scoped, tag = 'internal scratch']
  %s0 = inlined_call_operand.vmem [shape: bf16[16,128], index: 0, kind: input, shape index: {}]
  %s1 = inlined_call_operand.vmem [shape: bf16[128,256], index: 1, kind: input, shape index: {}]
  %s2 = inlined_call_operand.vmem [shape: f32[1,256], index: 2, kind: input, shape index: {}]
  %s3 = inlined_call_operand.vmem [shape: bf16[256,512], index: 3, kind: input, shape index: {}]
  %s4 = inlined_call_operand.vmem [shape: f32[1,512], index: 4, kind: input, shape index: {}]
  %s5 = inlined_call_operand.vmem [shape: bf16[512,1024], index: 5, kind: input, shape index: {}]
  %s6 = inlined_call_operand.vmem [shape: f32[1,1024], index: 6, kind: input, shape index: {}]
  %s7 = inlined_call_operand.vmem [shape: bf16[1024,784], index: 7, kind: input, shape index: {}]
  %s8 = inlined_call_operand.vmem [shape: f32[1,784], index: 8, kind: input, shape index: {}]
  %s9 = inlined_call_operand.hbm [shape: f32[16,784], index: 9, kind: output, shape index: {}]
  %s10 = sld [smem:[#allocation0]]
  $region69: #{tpu_custom_call.1} parent=0
    _
  %s12 = ssub.s32 1, %s10
  %s13 = scalar_select 0, %s12, %s10
  $region1: #{tpu_custom_call.1} parent=0
    #allocation2 [shape = 'u8[57344]{0}', space=vmem, size = 0xe000, scoped, tag = 'output window, operand 0']
    #allocation3 [shape = 's32[2]{0}', space=sflag, size = 0x8, scoped, tag = 'scoped memory for tpu_custom_call.1']
    %14 = vsyncpa [#allocation3], 0
    %s15 = scalar_lea.sflag [#allocation3], 1
    %16 = vsyncpa %s15, 0
    loop: start=0, step=1, limit=4
    $region2: #{tpu_custom_call.1} parent=1 // loop_pre_header
      _
    $region3: #{tpu_custom_call.1} parent=1 // loop_header
      %s18 = sphi 0, %s22
      %p19 = scmp.ge.s32.totalorder %s18, 4
      %s28 = sphi 0, %s30
      %s31 = sphi 0, %s28
      %s32 = sphi 0, %s31
      %s48 = sphi 0, %s32
      %s52 = sphi 0, %s52
      %s54 = sphi 0, %s52
      %s55 = sphi 0, %s54
      %s69 = sphi 0, %s55
      %s73 = sphi 0, %s73
      %s75 = sphi 0, %s73
      %s76 = sphi 0, %s75
      %s90 = sphi 0, %s76
      %s94 = sphi 0, %s94
      %s96 = sphi 0, %s94
      %s97 = sphi 0, %s96
      %s111 = sphi 0, %s97
      %s115 = sphi 0, %s115
      %s117 = sphi 0, %s115
      %s118 = sphi 0, %s117
      %s132 = sphi 0, %s118
      %s136 = sphi 0, %s136
      %s138 = sphi 0, %s136
      %s139 = sphi 0, %s138
      %s153 = sphi 0, %s139
      %s157 = sphi 0, %s157
      %s159 = sphi 0, %s157
      %s160 = sphi 0, %s159
      %s174 = sphi 0, %s160
      %s178 = sphi 0, %s178
      %s180 = sphi 0, %s178
      %s181 = sphi 0, %s180
      %s195 = sphi 0, %s181
      %s199 = sphi 0, %s199
      %s201 = sphi 0, %s199
      %s202 = sphi 0, %s201
      %s216 = sphi 0, %s202
      %s222 = sphi 0, %s224
      %s225 = sphi 0, %s222
      %s226 = sphi 0, %s225
      %s242 = sphi 0, %s226
    $region4: #{tpu_custom_call.1} parent=1 // loop_header_branch
      %21 = sbr.rel (%p19) target = $region8
    $region5: #{tpu_custom_call.1} parent=1 // loop_body
      %s23 = ssub.s32 %s18, 1
      %s24 = ssub.s32 %s18, 2
      %s25 = sadd.s32 %s18, 1
      %s26 = ssub.s32 %s18, %s25
      %p27 = scmp.eq.s32.totalorder %s26, 0
      %s29 = sadd.s32 %s28, 1
      %s30 = scalar_select %p27, %s28, %s29
      %p33 = pneg %p27
      %p34 = scmp.eq.s32.totalorder %s18, 1
      %p35 = por %p33, %p34
      %p36 = scmp.ne.s32.totalorder %s28, %s31
      %p37 = scmp.eq.s32.totalorder %s18, 0
      %p38 = por %p36, %p37
      %p39 = scmp.ne.s32.totalorder %s28, %s31
      %p40 = scmp.eq.s32.totalorder %s23, 1
      %p41 = por %p39, %p40
      %p42 = scmp.ne.s32.totalorder %s31, %s32
      %p43 = scmp.eq.s32.totalorder %s23, 0
      %p44 = por %p42, %p43
      %p45 = scmp.ne.s32.totalorder %s31, %s32
      %p46 = scmp.eq.s32.totalorder %s24, 1
      %p47 = por %p45, %p46
      %p49 = scmp.ne.s32.totalorder %s32, %s48
      %p50 = scmp.eq.s32.totalorder %s24, 0
      %p51 = por %p49, %p50
      %s53 = sadd.s32 %s52, 1
      %p56 = scmp.eq.s32.totalorder %s18, 1
      %p57 = scmp.ne.s32.totalorder %s52, %s54
      %p58 = scmp.eq.s32.totalorder %s18, 0
      %p59 = por %p57, %p58
      %p60 = scmp.ne.s32.totalorder %s52, %s54
      %p61 = scmp.eq.s32.totalorder %s23, 1
      %p62 = por %p60, %p61
      %p63 = scmp.ne.s32.totalorder %s54, %s55
      %p64 = scmp.eq.s32.totalorder %s23, 0
      %p65 = por %p63, %p64
      %p66 = scmp.ne.s32.totalorder %s54, %s55
      %p67 = scmp.eq.s32.totalorder %s24, 1
      %p68 = por %p66, %p67
      %p70 = scmp.ne.s32.totalorder %s55, %s69
      %p71 = scmp.eq.s32.totalorder %s24, 0
      %p72 = por %p70, %p71
      %s74 = sadd.s32 %s73, 1
      %p77 = scmp.eq.s32.totalorder %s18, 1
      %p78 = scmp.ne.s32.totalorder %s73, %s75
      %p79 = scmp.eq.s32.totalorder %s18, 0
      %p80 = por %p78, %p79
      %p81 = scmp.ne.s32.totalorder %s73, %s75
      %p82 = scmp.eq.s32.totalorder %s23, 1
      %p83 = por %p81, %p82
      %p84 = scmp.ne.s32.totalorder %s75, %s76
      %p85 = scmp.eq.s32.totalorder %s23, 0
      %p86 = por %p84, %p85
      %p87 = scmp.ne.s32.totalorder %s75, %s76
      %p88 = scmp.eq.s32.totalorder %s24, 1
      %p89 = por %p87, %p88
      %p91 = scmp.ne.s32.totalorder %s76, %s90
      %p92 = scmp.eq.s32.totalorder %s24, 0
      %p93 = por %p91, %p92
      %s95 = sadd.s32 %s94, 1
      %p98 = scmp.eq.s32.totalorder %s18, 1
      %p99 = scmp.ne.s32.totalorder %s94, %s96
      %p100 = scmp.eq.s32.totalorder %s18, 0
      %p101 = por %p99, %p100
      %p102 = scmp.ne.s32.totalorder %s94, %s96
      %p103 = scmp.eq.s32.totalorder %s23, 1
      %p104 = por %p102, %p103
      %p105 = scmp.ne.s32.totalorder %s96, %s97
      %p106 = scmp.eq.s32.totalorder %s23, 0
      %p107 = por %p105, %p106
      %p108 = scmp.ne.s32.totalorder %s96, %s97
      %p109 = scmp.eq.s32.totalorder %s24, 1
      %p110 = por %p108, %p109
      %p112 = scmp.ne.s32.totalorder %s97, %s111
      %p113 = scmp.eq.s32.totalorder %s24, 0
      %p114 = por %p112, %p113
      %s116 = sadd.s32 %s115, 1
      %p119 = scmp.eq.s32.totalorder %s18, 1
      %p120 = scmp.ne.s32.totalorder %s115, %s117
      %p121 = scmp.eq.s32.totalorder %s18, 0
      %p122 = por %p120, %p121
      %p123 = scmp.ne.s32.totalorder %s115, %s117
      %p124 = scmp.eq.s32.totalorder %s23, 1
      %p125 = por %p123, %p124
      %p126 = scmp.ne.s32.totalorder %s117, %s118
      %p127 = scmp.eq.s32.totalorder %s23, 0
      %p128 = por %p126, %p127
      %p129 = scmp.ne.s32.totalorder %s117, %s118
      %p130 = scmp.eq.s32.totalorder %s24, 1
      %p131 = por %p129, %p130
      %p133 = scmp.ne.s32.totalorder %s118, %s132
      %p134 = scmp.eq.s32.totalorder %s24, 0
      %p135 = por %p133, %p134
      %s137 = sadd.s32 %s136, 1
      %p140 = scmp.eq.s32.totalorder %s18, 1
      %p141 = scmp.ne.s32.totalorder %s136, %s138
      %p142 = scmp.eq.s32.totalorder %s18, 0
      %p143 = por %p141, %p142
      %p144 = scmp.ne.s32.totalorder %s136, %s138
      %p145 = scmp.eq.s32.totalorder %s23, 1
      %p146 = por %p144, %p145
      %p147 = scmp.ne.s32.totalorder %s138, %s139
      %p148 = scmp.eq.s32.totalorder %s23, 0
      %p149 = por %p147, %p148
      %p150 = scmp.ne.s32.totalorder %s138, %s139
      %p151 = scmp.eq.s32.totalorder %s24, 1
      %p152 = por %p150, %p151
      %p154 = scmp.ne.s32.totalorder %s139, %s153
      %p155 = scmp.eq.s32.totalorder %s24, 0
      %p156 = por %p154, %p155
      %s158 = sadd.s32 %s157, 1
      %p161 = scmp.eq.s32.totalorder %s18, 1
      %p162 = scmp.ne.s32.totalorder %s157, %s159
      %p163 = scmp.eq.s32.totalorder %s18, 0
      %p164 = por %p162, %p163
      %p165 = scmp.ne.s32.totalorder %s157, %s159
      %p166 = scmp.eq.s32.totalorder %s23, 1
      %p167 = por %p165, %p166
      %p168 = scmp.ne.s32.totalorder %s159, %s160
      %p169 = scmp.eq.s32.totalorder %s23, 0
      %p170 = por %p168, %p169
      %p171 = scmp.ne.s32.totalorder %s159, %s160
      %p172 = scmp.eq.s32.totalorder %s24, 1
      %p173 = por %p171, %p172
      %p175 = scmp.ne.s32.totalorder %s160, %s174
      %p176 = scmp.eq.s32.totalorder %s24, 0
      %p177 = por %p175, %p176
      %s179 = sadd.s32 %s178, 1
      %p182 = scmp.eq.s32.totalorder %s18, 1
      %p183 = scmp.ne.s32.totalorder %s178, %s180
      %p184 = scmp.eq.s32.totalorder %s18, 0
      %p185 = por %p183, %p184
      %p186 = scmp.ne.s32.totalorder %s178, %s180
      %p187 = scmp.eq.s32.totalorder %s23, 1
      %p188 = por %p186, %p187
      %p189 = scmp.ne.s32.totalorder %s180, %s181
      %p190 = scmp.eq.s32.totalorder %s23, 0
      %p191 = por %p189, %p190
      %p192 = scmp.ne.s32.totalorder %s180, %s181
      %p193 = scmp.eq.s32.totalorder %s24, 1
      %p194 = por %p192, %p193
      %p196 = scmp.ne.s32.totalorder %s181, %s195
      %p197 = scmp.eq.s32.totalorder %s24, 0
      %p198 = por %p196, %p197
      %s200 = sadd.s32 %s199, 1
      %p203 = scmp.eq.s32.totalorder %s18, 1
      %p204 = scmp.ne.s32.totalorder %s199, %s201
      %p205 = scmp.eq.s32.totalorder %s18, 0
      %p206 = por %p204, %p205
      %p207 = scmp.ne.s32.totalorder %s199, %s201
      %p208 = scmp.eq.s32.totalorder %s23, 1
      %p209 = por %p207, %p208
      %p210 = scmp.ne.s32.totalorder %s201, %s202
      %p211 = scmp.eq.s32.totalorder %s23, 0
      %p212 = por %p210, %p211
      %p213 = scmp.ne.s32.totalorder %s201, %s202
      %p214 = scmp.eq.s32.totalorder %s24, 1
      %p215 = por %p213, %p214
      %p217 = scmp.ne.s32.totalorder %s202, %s216
      %p218 = scmp.eq.s32.totalorder %s24, 0
      %p219 = por %p217, %p218
      %s220 = ssub.s32 %s18, %s25
      %p221 = scmp.eq.s32.totalorder %s220, 0
      %s223 = sadd.s32 %s222, 1
      %s224 = scalar_select %p221, %s222, %s223
      %p227 = pneg %p221
      %p228 = scmp.eq.s32.totalorder %s18, 1
      %p229 = por %p227, %p228
      %p230 = scmp.ne.s32.totalorder %s222, %s225
      %p231 = scmp.eq.s32.totalorder %s18, 0
      %p232 = por %p230, %p231
      %p233 = scmp.ne.s32.totalorder %s222, %s225
      %p234 = scmp.eq.s32.totalorder %s23, 1
      %p235 = por %p233, %p234
      %p236 = scmp.ne.s32.totalorder %s225, %s226
      %p237 = scmp.eq.s32.totalorder %s23, 0
      %p238 = por %p236, %p237
      %p239 = scmp.ne.s32.totalorder %s225, %s226
      %p240 = scmp.eq.s32.totalorder %s24, 1
      %p241 = por %p239, %p240
      %p243 = scmp.ne.s32.totalorder %s226, %s242
      %p244 = scmp.eq.s32.totalorder %s24, 0
      %p245 = por %p243, %p244
      %p246 = scmp.le.s32.totalorder 1, %s18
      %p247 = scmp.lt.s32.totalorder %s18, 3
      %p248 = pnand %p246, %p247
      %p249 = pneg %p248
      // Predicated region
      $region9: #{tpu_custom_call.1} parent=5 // pred_check
        _
      $region10: #{tpu_custom_call.1} parent=5 // pred_check_branch
        %251 = sbr.rel (%p248) target = $region12
      $region11: #{tpu_custom_call.1} parent=5 // pred_region
        %s252 = ssub.s32 %s18, 1
        // Predicated region
        $region13: #{tpu_custom_call.1} parent=11 // pred_check
          %p253 = pneg %p65
        $region14: #{tpu_custom_call.1} parent=11 // pred_check_branch
          %255 = sbr.rel (%p253) target = $region16
        $region15: #{tpu_custom_call.1} parent=11 // pred_region
          _
        $region16: #{tpu_custom_call.1} parent=11 // pred_fallthru
          _
        // Predicated region
        $region17: #{tpu_custom_call.1} parent=11 // pred_check
          %p256 = pneg %p86
        $region18: #{tpu_custom_call.1} parent=11 // pred_check_branch
          %258 = sbr.rel (%p256) target = $region20
        $region19: #{tpu_custom_call.1} parent=11 // pred_region
          _
        $region20: #{tpu_custom_call.1} parent=11 // pred_fallthru
          _
        // Predicated region
        $region21: #{tpu_custom_call.1} parent=11 // pred_check
          %p259 = pneg %p107
        $region22: #{tpu_custom_call.1} parent=11 // pred_check_branch
          %261 = sbr.rel (%p259) target = $region24
        $region23: #{tpu_custom_call.1} parent=11 // pred_region
          _
        $region24: #{tpu_custom_call.1} parent=11 // pred_fallthru
          _
        // Predicated region
        $region25: #{tpu_custom_call.1} parent=11 // pred_check
          %p262 = pneg %p128
        $region26: #{tpu_custom_call.1} parent=11 // pred_check_branch
          %264 = sbr.rel (%p262) target = $region28
        $region27: #{tpu_custom_call.1} parent=11 // pred_region
          _
        $region28: #{tpu_custom_call.1} parent=11 // pred_fallthru
          _
        // Predicated region
        $region29: #{tpu_custom_call.1} parent=11 // pred_check
          %p265 = pneg %p149
        $region30: #{tpu_custom_call.1} parent=11 // pred_check_branch
          %267 = sbr.rel (%p265) target = $region32
        $region31: #{tpu_custom_call.1} parent=11 // pred_region
          _
        $region32: #{tpu_custom_call.1} parent=11 // pred_fallthru
          _
        // Predicated region
        $region33: #{tpu_custom_call.1} parent=11 // pred_check
          %p268 = pneg %p170
        $region34: #{tpu_custom_call.1} parent=11 // pred_check_branch
          %270 = sbr.rel (%p268) target = $region36
        $region35: #{tpu_custom_call.1} parent=11 // pred_region
          _
        $region36: #{tpu_custom_call.1} parent=11 // pred_fallthru
          _
        // Predicated region
        $region37: #{tpu_custom_call.1} parent=11 // pred_check
          %p271 = pneg %p191
        $region38: #{tpu_custom_call.1} parent=11 // pred_check_branch
          %273 = sbr.rel (%p271) target = $region40
        $region39: #{tpu_custom_call.1} parent=11 // pred_region
          _
        $region40: #{tpu_custom_call.1} parent=11 // pred_fallthru
          _
        // Predicated region
        $region41: #{tpu_custom_call.1} parent=11 // pred_check
          %p274 = pneg %p212
        $region42: #{tpu_custom_call.1} parent=11 // pred_check_branch
          %276 = sbr.rel (%p274) target = $region44
        $region43: #{tpu_custom_call.1} parent=11 // pred_region
          _
        $region44: #{tpu_custom_call.1} parent=11 // pred_fallthru
          _
      $region12: #{tpu_custom_call.1} parent=5 // pred_fallthru
        _
      %p277 = scmp.lt.s32.totalorder %s18, 2
      // Predicated region
      $region45: #{tpu_custom_call.1} parent=5 // pred_check
        %p278 = pneg %p277
      $region46: #{tpu_custom_call.1} parent=5 // pred_check_branch
        %280 = sbr.rel (%p278) target = $region48
      $region47: #{tpu_custom_call.1} parent=5 // pred_region
        // Predicated region
        $region49: #{tpu_custom_call.1} parent=47 // pred_check
          %p281 = pneg %p38
        $region50: #{tpu_custom_call.1} parent=47 // pred_check_branch
          %283 = sbr.rel (%p281) target = $region52
        $region51: #{tpu_custom_call.1} parent=47 // pred_region
          %p284 = scmp.lt.s32.totalorder %s18, 1
          %s285 = scalar_select %p284, %s18, 1
          %s286 = smul.addr %s285, 4
          %s287 = scalar_lea.vmem %s0, %s286
        $region52: #{tpu_custom_call.1} parent=47 // pred_fallthru
          _
      $region48: #{tpu_custom_call.1} parent=5 // pred_fallthru
        _
      %p288 = scmp.le.s32.totalorder 1, %s18
      %p289 = scmp.lt.s32.totalorder %s18, 3
      %p290 = pnand %p288, %p289
      %p291 = pneg %p290
      // Predicated region
      $region53: #{tpu_custom_call.1} parent=5 // pred_check
        _
      $region54: #{tpu_custom_call.1} parent=5 // pred_check_branch
        %293 = sbr.rel (%p290) target = $region56
      $region55: #{tpu_custom_call.1} parent=5 // pred_region
        %s294 = ssub.s32 %s18, 1
        %p295 = scmp.lt.s32.totalorder %s23, 1
        %s296 = scalar_select %p295, %s23, 1
        %s297 = smul.addr %s296, 4
        %s298 = scalar_lea.vmem %s0, %s297
        %p299 = pneg %p44
        %p300 = pneg %p41
        %p301 = pneg %p65
        %p302 = pneg %p62
        %p303 = pneg %p86
        %p304 = pneg %p83
        %p305 = pneg %p107
        %p306 = pneg %p104
        %p307 = pneg %p128
        %p308 = pneg %p125
        %p309 = pneg %p149
        %p310 = pneg %p146
        %p311 = pneg %p170
        %p312 = pneg %p167
        %p313 = pneg %p191
        %p314 = pneg %p188
        %p315 = pneg %p212
        %p316 = pneg %p209
        %p317 = pneg %p238
        %p318 = pneg %p235
        %s319 = sand.u32 %s225, 1
        %s320 = scalar_lea.sflag [#allocation3], %s319
        %s321 = sand.u32 %s225, 1
        %s322 = smul.addr %s321, 56
        %s323 = scalar_lea.vmem [#allocation2], %s322
        %p324 = scmp.lt.s32.totalorder %s23, 1
        %s325 = scalar_select %p324, %s23, 1
        %s326 = smul.addr %s325, 4
        %s327 = scalar_lea.vmem %s0, %s326
        %v329 = vld [vmem:[%s327] sm:$0xf]
        %v330 = vld [vmem:[%s1] sm:$0xff]
        %v331 = vld [vmem:[%s1 + $0x8] sm:$0xff]
        %v332 = vld [vmem:[%s1 + $0x10] sm:$0xff]
        %v333 = vld [vmem:[%s1 + $0x18] sm:$0xff]
        %v334 = vld [vmem:[%s1 + $0x20] sm:$0xff]
        %v335 = vld [vmem:[%s1 + $0x28] sm:$0xff]
        %v336 = vld [vmem:[%s1 + $0x30] sm:$0xff]
        %v337 = vld [vmem:[%s1 + $0x38] sm:$0xff]
        %v338 = vld [vmem:[%s1 + $0x40] sm:$0xff]
        %v339 = vld [vmem:[%s1 + $0x48] sm:$0xff]
        %v340 = vld [vmem:[%s1 + $0x50] sm:$0xff]
        %v341 = vld [vmem:[%s1 + $0x58] sm:$0xff]
        %v342 = vld [vmem:[%s1 + $0x60] sm:$0xff]
        %v343 = vld [vmem:[%s1 + $0x68] sm:$0xff]
        %v344 = vld [vmem:[%s1 + $0x70] sm:$0xff]
        %v345 = vld [vmem:[%s1 + $0x78] sm:$0xff]
        %v346 = vld [vmem:[%s2] sm:$0x3]
        %v348 = vlaneseq
        %v349 = vshrl.u32 %v348, 7
        %v350 = vsub.s32 0, %v349
        %v351 = vrot.slane %v346, %v350
        %v352 = vlaneseq
        %v353 = vshrl.u32 %v352, 7
        %v354 = vsub.s32 1, %v353
        %v355 = vrot.slane %v346, %v354
        %v374 = vunpack.c.l.b16 %v330
        %v375 = vunpack.c.h.b16 %v330
        %v376 = vunpack.c.l.b16 %v331
        %v377 = vunpack.c.h.b16 %v331
        %v378 = vunpack.c.l.b16 %v332
        %v379 = vunpack.c.h.b16 %v332
        %v380 = vunpack.c.l.b16 %v333
        %v381 = vunpack.c.h.b16 %v333
        %v382 = vunpack.c.l.b16 %v334
        %v383 = vunpack.c.h.b16 %v334
        %v384 = vunpack.c.l.b16 %v335
        %v385 = vunpack.c.h.b16 %v335
        %v386 = vunpack.c.l.b16 %v336
        %v387 = vunpack.c.h.b16 %v336
        %v388 = vunpack.c.l.b16 %v337
        %v389 = vunpack.c.h.b16 %v337
        %v390 = vunpack.c.l.b16 %v338
        %v391 = vunpack.c.h.b16 %v338
        %v392 = vunpack.c.l.b16 %v339
        %v393 = vunpack.c.h.b16 %v339
        %v394 = vunpack.c.l.b16 %v340
        %v395 = vunpack.c.h.b16 %v340
        %v396 = vunpack.c.l.b16 %v341
        %v397 = vunpack.c.h.b16 %v341
        %v398 = vunpack.c.l.b16 %v342
        %v399 = vunpack.c.h.b16 %v342
        %v400 = vunpack.c.l.b16 %v343
        %v401 = vunpack.c.h.b16 %v343
        %v402 = vunpack.c.l.b16 %v344
        %v403 = vunpack.c.h.b16 %v344
        %v404 = vunpack.c.l.b16 %v345
        %v405 = vunpack.c.h.b16 %v345
        %v406 = vpack.c.b16 %v376, %v374
        %v407 = vpack.c.b16 %v377, %v375
        %v408 = vpack.c.b16 %v380, %v378
        %v409 = vpack.c.b16 %v381, %v379
        %v410 = vpack.c.b16 %v384, %v382
        %v411 = vpack.c.b16 %v385, %v383
        %v412 = vpack.c.b16 %v388, %v386
        %v413 = vpack.c.b16 %v389, %v387
        %v414 = vpack.c.b16 %v392, %v390
        %v415 = vpack.c.b16 %v393, %v391
        %v416 = vpack.c.b16 %v396, %v394
        %v417 = vpack.c.b16 %v397, %v395
        %v418 = vpack.c.b16 %v400, %v398
        %v419 = vpack.c.b16 %v401, %v399
        %v420 = vpack.c.b16 %v404, %v402
        %v421 = vpack.c.b16 %v405, %v403
        %438 = vmatprep.subr.bf16.mxu0 %v407
        %439 = vmatpush1.bf16.msra.mxu0 %v406
        %440 = vmatprep.subr.bf16.mxu0 %v409
        %441 = vmatpush1.bf16.msra.mxu0 %v408
        %442 = vmatprep.subr.bf16.mxu0 %v411
        %443 = vmatpush1.bf16.msra.mxu0 %v410
        %444 = vmatprep.subr.bf16.mxu0 %v413
        %445 = vmatpush1.bf16.msra.mxu0 %v412
        %446 = vmatprep.subr.bf16.mxu0 %v415
        %447 = vmatpush1.bf16.msra.mxu0 %v414
        %448 = vmatprep.subr.bf16.mxu0 %v417
        %449 = vmatpush1.bf16.msra.mxu0 %v416
        %450 = vmatprep.subr.bf16.mxu0 %v419
        %451 = vmatpush1.bf16.msra.mxu0 %v418
        %452 = vmatprep.subr.bf16.mxu0 %v421
        %453 = vmatpush1.bf16.msra.mxu0 %v420
        %454 = vmatprep.subr.bf16.mxu0 0
        %455 = vmatpush1.bf16.msra.mxu0 0
        %456 = vmatprep.subr.bf16.mxu0 0
        %457 = vmatpush1.bf16.msra.mxu0 0
        %458 = vmatprep.subr.bf16.mxu0 0
        %459 = vmatpush1.bf16.msra.mxu0 0
        %460 = vmatprep.subr.bf16.mxu0 0
        %461 = vmatpush1.bf16.msra.mxu0 0
        %462 = vmatprep.subr.bf16.mxu0 0
        %463 = vmatpush1.bf16.msra.mxu0 0
        %464 = vmatprep.subr.bf16.mxu0 0
        %465 = vmatpush1.bf16.msra.mxu0 0
        %466 = vmatprep.subr.bf16.mxu0 0
        %467 = vmatpush1.bf16.msra.mxu0 0
        %468 = vmatprep.subr.bf16.mxu0 0
        %469 = vmatpush1.bf16.msra.mxu0 0
        %470 = vmatprep.mubr.bf16.mxu0 0
        %471 = vmatmul.mubr.bf16.gmra.mrb[0].mxu0 %v329
        %v472 = vpop.f32.mrb[0].mxu0
        %v473 = vadd.f32 %v351, %v472
        %v474 = vpop.f32.mrb[0].mxu0
        %v475 = vadd.f32 %v355, %v474
        %v476 = vpop.f32.mrb[0].mxu0
        %v477 = vpop.f32.mrb[0].mxu0
        %478 = vdwg.mxu0
        %v479 = vmax.f32 %v473, 0.0
        %v480 = vmax.f32 %v475, 0.0
        %v481 = vpack.c.bf16 %v479, %v479
        %v482 = vpack.c.bf16 %v480, %v480
        %v483 = vld [vmem:[%s3] sm:$0xff]
        %v484 = vld [vmem:[%s3 + $0x8] sm:$0xff]
        %v485 = vld [vmem:[%s3 + $0x10] sm:$0xff]
        %v486 = vld [vmem:[%s3 + $0x18] sm:$0xff]
        %v487 = vld [vmem:[%s3 + $0x20] sm:$0xff]
        %v488 = vld [vmem:[%s3 + $0x28] sm:$0xff]
        %v489 = vld [vmem:[%s3 + $0x30] sm:$0xff]
        %v490 = vld [vmem:[%s3 + $0x38] sm:$0xff]
        %v491 = vld [vmem:[%s3 + $0x40] sm:$0xff]
        %v492 = vld [vmem:[%s3 + $0x48] sm:$0xff]
        %v493 = vld [vmem:[%s3 + $0x50] sm:$0xff]
        %v494 = vld [vmem:[%s3 + $0x58] sm:$0xff]
        %v495 = vld [vmem:[%s3 + $0x60] sm:$0xff]
        %v496 = vld [vmem:[%s3 + $0x68] sm:$0xff]
        %v497 = vld [vmem:[%s3 + $0x70] sm:$0xff]
        %v498 = vld [vmem:[%s3 + $0x78] sm:$0xff]
        %v499 = vld [vmem:[%s3 + $0x80] sm:$0xff]
        %v500 = vld [vmem:[%s3 + $0x88] sm:$0xff]
        %v501 = vld [vmem:[%s3 + $0x90] sm:$0xff]
        %v502 = vld [vmem:[%s3 + $0x98] sm:$0xff]
        %v503 = vld [vmem:[%s3 + $0xa0] sm:$0xff]
        %v504 = vld [vmem:[%s3 + $0xa8] sm:$0xff]
        %v505 = vld [vmem:[%s3 + $0xb0] sm:$0xff]
        %v506 = vld [vmem:[%s3 + $0xb8] sm:$0xff]
        %v507 = vld [vmem:[%s3 + $0xc0] sm:$0xff]
        %v508 = vld [vmem:[%s3 + $0xc8] sm:$0xff]
        %v509 = vld [vmem:[%s3 + $0xd0] sm:$0xff]
        %v510 = vld [vmem:[%s3 + $0xd8] sm:$0xff]
        %v511 = vld [vmem:[%s3 + $0xe0] sm:$0xff]
        %v512 = vld [vmem:[%s3 + $0xe8] sm:$0xff]
        %v513 = vld [vmem:[%s3 + $0xf0] sm:$0xff]
        %v514 = vld [vmem:[%s3 + $0xf8] sm:$0xff]
        %v515 = vld [vmem:[%s3 + $0x100] sm:$0xff]
        %v516 = vld [vmem:[%s3 + $0x108] sm:$0xff]
        %v517 = vld [vmem:[%s3 + $0x110] sm:$0xff]
        %v518 = vld [vmem:[%s3 + $0x118] sm:$0xff]
        %v519 = vld [vmem:[%s3 + $0x120] sm:$0xff]
        %v520 = vld [vmem:[%s3 + $0x128] sm:$0xff]
        %v521 = vld [vmem:[%s3 + $0x130] sm:$0xff]
        %v522 = vld [vmem:[%s3 + $0x138] sm:$0xff]
        %v523 = vld [vmem:[%s3 + $0x140] sm:$0xff]
        %v524 = vld [vmem:[%s3 + $0x148] sm:$0xff]
        %v525 = vld [vmem:[%s3 + $0x150] sm:$0xff]
        %v526 = vld [vmem:[%s3 + $0x158] sm:$0xff]
        %v527 = vld [vmem:[%s3 + $0x160] sm:$0xff]
        %v528 = vld [vmem:[%s3 + $0x168] sm:$0xff]
        %v529 = vld [vmem:[%s3 + $0x170] sm:$0xff]
        %v530 = vld [vmem:[%s3 + $0x178] sm:$0xff]
        %v531 = vld [vmem:[%s3 + $0x180] sm:$0xff]
        %v532 = vld [vmem:[%s3 + $0x188] sm:$0xff]
        %v533 = vld [vmem:[%s3 + $0x190] sm:$0xff]
        %v534 = vld [vmem:[%s3 + $0x198] sm:$0xff]
        %v535 = vld [vmem:[%s3 + $0x1a0] sm:$0xff]
        %v536 = vld [vmem:[%s3 + $0x1a8] sm:$0xff]
        %v537 = vld [vmem:[%s3 + $0x1b0] sm:$0xff]
        %v538 = vld [vmem:[%s3 + $0x1b8] sm:$0xff]
        %v539 = vld [vmem:[%s3 + $0x1c0] sm:$0xff]
        %v540 = vld [vmem:[%s3 + $0x1c8] sm:$0xff]
        %v541 = vld [vmem:[%s3 + $0x1d0] sm:$0xff]
        %v542 = vld [vmem:[%s3 + $0x1d8] sm:$0xff]
        %v543 = vld [vmem:[%s3 + $0x1e0] sm:$0xff]
        %v544 = vld [vmem:[%s3 + $0x1e8] sm:$0xff]
        %v545 = vld [vmem:[%s3 + $0x1f0] sm:$0xff]
        %v546 = vld [vmem:[%s3 + $0x1f8] sm:$0xff]
        %v547 = vld [vmem:[%s4] sm:$0xf]
        %v549 = vlaneseq
        %v550 = vshrl.u32 %v549, 7
        %v551 = vsub.s32 0, %v550
        %v552 = vrot.slane %v547, %v551
        %v553 = vlaneseq
        %v554 = vshrl.u32 %v553, 7
        %v555 = vsub.s32 1, %v554
        %v556 = vrot.slane %v547, %v555
        %v557 = vlaneseq
        %v558 = vshrl.u32 %v557, 7
        %v559 = vsub.s32 2, %v558
        %v560 = vrot.slane %v547, %v559
        %v561 = vlaneseq
        %v562 = vshrl.u32 %v561, 7
        %v563 = vsub.s32 3, %v562
        %v564 = vrot.slane %v547, %v563
        %v633 = vunpack.c.l.b16 %v483
        %v634 = vunpack.c.h.b16 %v483
        %v635 = vunpack.c.l.b16 %v484
        %v636 = vunpack.c.h.b16 %v484
        %v637 = vunpack.c.l.b16 %v485
        %v638 = vunpack.c.h.b16 %v485
        %v639 = vunpack.c.l.b16 %v486
        %v640 = vunpack.c.h.b16 %v486
        %v641 = vunpack.c.l.b16 %v487
        %v642 = vunpack.c.h.b16 %v487
        %v643 = vunpack.c.l.b16 %v488
        %v644 = vunpack.c.h.b16 %v488
        %v645 = vunpack.c.l.b16 %v489
        %v646 = vunpack.c.h.b16 %v489
        %v647 = vunpack.c.l.b16 %v490
        %v648 = vunpack.c.h.b16 %v490
        %v649 = vunpack.c.l.b16 %v491
        %v650 = vunpack.c.h.b16 %v491
        %v651 = vunpack.c.l.b16 %v492
        %v652 = vunpack.c.h.b16 %v492
        %v653 = vunpack.c.l.b16 %v493
        %v654 = vunpack.c.h.b16 %v493
        %v655 = vunpack.c.l.b16 %v494
        %v656 = vunpack.c.h.b16 %v494
        %v657 = vunpack.c.l.b16 %v495
        %v658 = vunpack.c.h.b16 %v495
        %v659 = vunpack.c.l.b16 %v496
        %v660 = vunpack.c.h.b16 %v496
        %v661 = vunpack.c.l.b16 %v497
        %v662 = vunpack.c.h.b16 %v497
        %v663 = vunpack.c.l.b16 %v498
        %v664 = vunpack.c.h.b16 %v498
        %v665 = vunpack.c.l.b16 %v499
        %v666 = vunpack.c.h.b16 %v499
        %v667 = vunpack.c.l.b16 %v500
        %v668 = vunpack.c.h.b16 %v500
        %v669 = vunpack.c.l.b16 %v501
        %v670 = vunpack.c.h.b16 %v501
        %v671 = vunpack.c.l.b16 %v502
        %v672 = vunpack.c.h.b16 %v502
        %v673 = vunpack.c.l.b16 %v503
        %v674 = vunpack.c.h.b16 %v503
        %v675 = vunpack.c.l.b16 %v504
        %v676 = vunpack.c.h.b16 %v504
        %v677 = vunpack.c.l.b16 %v505
        %v678 = vunpack.c.h.b16 %v505
        %v679 = vunpack.c.l.b16 %v506
        %v680 = vunpack.c.h.b16 %v506
        %v681 = vunpack.c.l.b16 %v507
        %v682 = vunpack.c.h.b16 %v507
        %v683 = vunpack.c.l.b16 %v508
        %v684 = vunpack.c.h.b16 %v508
        %v685 = vunpack.c.l.b16 %v509
        %v686 = vunpack.c.h.b16 %v509
        %v687 = vunpack.c.l.b16 %v510
        %v688 = vunpack.c.h.b16 %v510
        %v689 = vunpack.c.l.b16 %v511
        %v690 = vunpack.c.h.b16 %v511
        %v691 = vunpack.c.l.b16 %v512
        %v692 = vunpack.c.h.b16 %v512
        %v693 = vunpack.c.l.b16 %v513
        %v694 = vunpack.c.h.b16 %v513
        %v695 = vunpack.c.l.b16 %v514
        %v696 = vunpack.c.h.b16 %v514
        %v697 = vunpack.c.l.b16 %v515
        %v698 = vunpack.c.h.b16 %v515
        %v699 = vunpack.c.l.b16 %v516
        %v700 = vunpack.c.h.b16 %v516
        %v701 = vunpack.c.l.b16 %v517
        %v702 = vunpack.c.h.b16 %v517
        %v703 = vunpack.c.l.b16 %v518
        %v704 = vunpack.c.h.b16 %v518
        %v705 = vunpack.c.l.b16 %v519
        %v706 = vunpack.c.h.b16 %v519
        %v707 = vunpack.c.l.b16 %v520
        %v708 = vunpack.c.h.b16 %v520
        %v709 = vunpack.c.l.b16 %v521
        %v710 = vunpack.c.h.b16 %v521
        %v711 = vunpack.c.l.b16 %v522
        %v712 = vunpack.c.h.b16 %v522
        %v713 = vunpack.c.l.b16 %v523
        %v714 = vunpack.c.h.b16 %v523
        %v715 = vunpack.c.l.b16 %v524
        %v716 = vunpack.c.h.b16 %v524
        %v717 = vunpack.c.l.b16 %v525
        %v718 = vunpack.c.h.b16 %v525
        %v719 = vunpack.c.l.b16 %v526
        %v720 = vunpack.c.h.b16 %v526
        %v721 = vunpack.c.l.b16 %v527
        %v722 = vunpack.c.h.b16 %v527
        %v723 = vunpack.c.l.b16 %v528
        %v724 = vunpack.c.h.b16 %v528
        %v725 = vunpack.c.l.b16 %v529
        %v726 = vunpack.c.h.b16 %v529
        %v727 = vunpack.c.l.b16 %v530
        %v728 = vunpack.c.h.b16 %v530
        %v729 = vunpack.c.l.b16 %v531
        %v730 = vunpack.c.h.b16 %v531
        %v731 = vunpack.c.l.b16 %v532
        %v732 = vunpack.c.h.b16 %v532
        %v733 = vunpack.c.l.b16 %v533
        %v734 = vunpack.c.h.b16 %v533
        %v735 = vunpack.c.l.b16 %v534
        %v736 = vunpack.c.h.b16 %v534
        %v737 = vunpack.c.l.b16 %v535
        %v738 = vunpack.c.h.b16 %v535
        %v739 = vunpack.c.l.b16 %v536
        %v740 = vunpack.c.h.b16 %v536
        %v741 = vunpack.c.l.b16 %v537
        %v742 = vunpack.c.h.b16 %v537
        %v743 = vunpack.c.l.b16 %v538
        %v744 = vunpack.c.h.b16 %v538
        %v745 = vunpack.c.l.b16 %v539
        %v746 = vunpack.c.h.b16 %v539
        %v747 = vunpack.c.l.b16 %v540
        %v748 = vunpack.c.h.b16 %v540
        %v749 = vunpack.c.l.b16 %v541
        %v750 = vunpack.c.h.b16 %v541
        %v751 = vunpack.c.l.b16 %v542
        %v752 = vunpack.c.h.b16 %v542
        %v753 = vunpack.c.l.b16 %v543
        %v754 = vunpack.c.h.b16 %v543
        %v755 = vunpack.c.l.b16 %v544
        %v756 = vunpack.c.h.b16 %v544
        %v757 = vunpack.c.l.b16 %v545
        %v758 = vunpack.c.h.b16 %v545
        %v759 = vunpack.c.l.b16 %v546
        %v760 = vunpack.c.h.b16 %v546
        %v761 = vpack.c.b16 %v637, %v633
        %v762 = vpack.c.b16 %v638, %v634
        %v763 = vpack.c.b16 %v639, %v635
        %v764 = vpack.c.b16 %v640, %v636
        %v765 = vpack.c.b16 %v645, %v641
        %v766 = vpack.c.b16 %v646, %v642
        %v767 = vpack.c.b16 %v647, %v643
        %v768 = vpack.c.b16 %v648, %v644
        %v769 = vpack.c.b16 %v653, %v649
        %v770 = vpack.c.b16 %v654, %v650
        %v771 = vpack.c.b16 %v655, %v651
        %v772 = vpack.c.b16 %v656, %v652
        %v773 = vpack.c.b16 %v661, %v657
        %v774 = vpack.c.b16 %v662, %v658
        %v775 = vpack.c.b16 %v663, %v659
        %v776 = vpack.c.b16 %v664, %v660
        %v777 = vpack.c.b16 %v669, %v665
        %v778 = vpack.c.b16 %v670, %v666
        %v779 = vpack.c.b16 %v671, %v667
        %v780 = vpack.c.b16 %v672, %v668
        %v781 = vpack.c.b16 %v677, %v673
        %v782 = vpack.c.b16 %v678, %v674
        %v783 = vpack.c.b16 %v679, %v675
        %v784 = vpack.c.b16 %v680, %v676
        %v785 = vpack.c.b16 %v685, %v681
        %v786 = vpack.c.b16 %v686, %v682
        %v787 = vpack.c.b16 %v687, %v683
        %v788 = vpack.c.b16 %v688, %v684
        %v789 = vpack.c.b16 %v693, %v689
        %v790 = vpack.c.b16 %v694, %v690
        %v791 = vpack.c.b16 %v695, %v691
        %v792 = vpack.c.b16 %v696, %v692
        %v793 = vpack.c.b16 %v701, %v697
        %v794 = vpack.c.b16 %v702, %v698
        %v795 = vpack.c.b16 %v703, %v699
        %v796 = vpack.c.b16 %v704, %v700
        %v797 = vpack.c.b16 %v709, %v705
        %v798 = vpack.c.b16 %v710, %v706
        %v799 = vpack.c.b16 %v711, %v707
        %v800 = vpack.c.b16 %v712, %v708
        %v801 = vpack.c.b16 %v717, %v713
        %v802 = vpack.c.b16 %v718, %v714
        %v803 = vpack.c.b16 %v719, %v715
        %v804 = vpack.c.b16 %v720, %v716
        %v805 = vpack.c.b16 %v725, %v721
        %v806 = vpack.c.b16 %v726, %v722
        %v807 = vpack.c.b16 %v727, %v723
        %v808 = vpack.c.b16 %v728, %v724
        %v809 = vpack.c.b16 %v733, %v729
        %v810 = vpack.c.b16 %v734, %v730
        %v811 = vpack.c.b16 %v735, %v731
        %v812 = vpack.c.b16 %v736, %v732
        %v813 = vpack.c.b16 %v741, %v737
        %v814 = vpack.c.b16 %v742, %v738
        %v815 = vpack.c.b16 %v743, %v739
        %v816 = vpack.c.b16 %v744, %v740
        %v817 = vpack.c.b16 %v749, %v745
        %v818 = vpack.c.b16 %v750, %v746
        %v819 = vpack.c.b16 %v751, %v747
        %v820 = vpack.c.b16 %v752, %v748
        %v821 = vpack.c.b16 %v757, %v753
        %v822 = vpack.c.b16 %v758, %v754
        %v823 = vpack.c.b16 %v759, %v755
        %v824 = vpack.c.b16 %v760, %v756
        %889 = vmatprep.subr.bf16.mxu0 %v762
        %890 = vmatpush1.bf16.msra.mxu0 %v761
        %891 = vmatprep.subr.bf16.mxu0 %v766
        %892 = vmatpush1.bf16.msra.mxu0 %v765
        %893 = vmatprep.subr.bf16.mxu0 %v770
        %894 = vmatpush1.bf16.msra.mxu0 %v769
        %895 = vmatprep.subr.bf16.mxu0 %v774
        %896 = vmatpush1.bf16.msra.mxu0 %v773
        %897 = vmatprep.subr.bf16.mxu0 %v778
        %898 = vmatpush1.bf16.msra.mxu0 %v777
        %899 = vmatprep.subr.bf16.mxu0 %v782
        %900 = vmatpush1.bf16.msra.mxu0 %v781
        %901 = vmatprep.subr.bf16.mxu0 %v786
        %902 = vmatpush1.bf16.msra.mxu0 %v785
        %903 = vmatprep.subr.bf16.mxu0 %v790
        %904 = vmatpush1.bf16.msra.mxu0 %v789
        %905 = vmatprep.subr.bf16.mxu0 %v794
        %906 = vmatpush1.bf16.msra.mxu0 %v793
        %907 = vmatprep.subr.bf16.mxu0 %v798
        %908 = vmatpush1.bf16.msra.mxu0 %v797
        %909 = vmatprep.subr.bf16.mxu0 %v802
        %910 = vmatpush1.bf16.msra.mxu0 %v801
        %911 = vmatprep.subr.bf16.mxu0 %v806
        %912 = vmatpush1.bf16.msra.mxu0 %v805
        %913 = vmatprep.subr.bf16.mxu0 %v810
        %914 = vmatpush1.bf16.msra.mxu0 %v809
        %915 = vmatprep.subr.bf16.mxu0 %v814
        %916 = vmatpush1.bf16.msra.mxu0 %v813
        %917 = vmatprep.subr.bf16.mxu0 %v818
        %918 = vmatpush1.bf16.msra.mxu0 %v817
        %919 = vmatprep.subr.bf16.mxu0 %v822
        %920 = vmatpush1.bf16.msra.mxu0 %v821
        %921 = vmatprep.mubr.bf16.mxu0 %v482
        %922 = vmatmul.mubr.bf16.gmra.mrb[0].mxu0 %v481
        %v923 = vpop.f32.mrb[0].mxu0
        %v924 = vadd.f32 %v552, %v923
        %v925 = vpop.f32.mrb[0].mxu0
        %v926 = vadd.f32 %v556, %v925
        %v927 = vpop.f32.mrb[0].mxu0
        %v928 = vpop.f32.mrb[0].mxu0
        %929 = vdwg.mxu0
        %930 = vmatprep.subr.bf16.mxu0 %v764
        %931 = vmatpush1.bf16.msra.mxu0 %v763
        %932 = vmatprep.subr.bf16.mxu0 %v768
        %933 = vmatpush1.bf16.msra.mxu0 %v767
        %934 = vmatprep.subr.bf16.mxu0 %v772
        %935 = vmatpush1.bf16.msra.mxu0 %v771
        %936 = vmatprep.subr.bf16.mxu0 %v776
        %937 = vmatpush1.bf16.msra.mxu0 %v775
        %938 = vmatprep.subr.bf16.mxu0 %v780
        %939 = vmatpush1.bf16.msra.mxu0 %v779
        %940 = vmatprep.subr.bf16.mxu0 %v784
        %941 = vmatpush1.bf16.msra.mxu0 %v783
        %942 = vmatprep.subr.bf16.mxu0 %v788
        %943 = vmatpush1.bf16.msra.mxu0 %v787
        %944 = vmatprep.subr.bf16.mxu0 %v792
        %945 = vmatpush1.bf16.msra.mxu0 %v791
        %946 = vmatprep.subr.bf16.mxu0 %v796
        %947 = vmatpush1.bf16.msra.mxu0 %v795
        %948 = vmatprep.subr.bf16.mxu0 %v800
        %949 = vmatpush1.bf16.msra.mxu0 %v799
        %950 = vmatprep.subr.bf16.mxu0 %v804
        %951 = vmatpush1.bf16.msra.mxu0 %v803
        %952 = vmatprep.subr.bf16.mxu0 %v808
        %953 = vmatpush1.bf16.msra.mxu0 %v807
        %954 = vmatprep.subr.bf16.mxu0 %v812
        %955 = vmatpush1.bf16.msra.mxu0 %v811
        %956 = vmatprep.subr.bf16.mxu0 %v816
        %957 = vmatpush1.bf16.msra.mxu0 %v815
        %958 = vmatprep.subr.bf16.mxu0 %v820
        %959 = vmatpush1.bf16.msra.mxu0 %v819
        %960 = vmatprep.subr.bf16.mxu0 %v824
        %961 = vmatpush1.bf16.msra.mxu0 %v823
        %962 = vmatprep.mubr.bf16.mxu0 %v482
        %963 = vmatmul.mubr.bf16.gmra.mrb[0].mxu0 %v481
        %v964 = vpop.f32.mrb[0].mxu0
        %v965 = vadd.f32 %v560, %v964
        %v966 = vpop.f32.mrb[0].mxu0
        %v967 = vadd.f32 %v564, %v966
        %v968 = vpop.f32.mrb[0].mxu0
        %v969 = vpop.f32.mrb[0].mxu0
        %970 = vdwg.mxu0
        %v971 = vmax.f32 %v924, 0.0
        %v972 = vmax.f32 %v926, 0.0
        %v973 = vmax.f32 %v965, 0.0
        %v974 = vmax.f32 %v967, 0.0
        %v975 = vpack.c.bf16 %v971, %v971
        %v976 = vpack.c.bf16 %v972, %v972
        %v977 = vpack.c.bf16 %v973, %v973
        %v978 = vpack.c.bf16 %v974, %v974
        %v979 = vld [vmem:[%s5] sm:$0xff]
        %v980 = vld [vmem:[%s5 + $0x8] sm:$0xff]
        %v981 = vld [vmem:[%s5 + $0x10] sm:$0xff]
        %v982 = vld [vmem:[%s5 + $0x18] sm:$0xff]
        %v983 = vld [vmem:[%s5 + $0x20] sm:$0xff]
        %v984 = vld [vmem:[%s5 + $0x28] sm:$0xff]
        %v985 = vld [vmem:[%s5 + $0x30] sm:$0xff]
        %v986 = vld [vmem:[%s5 + $0x38] sm:$0xff]
        %v987 = vld [vmem:[%s5 + $0x40] sm:$0xff]
        %v988 = vld [vmem:[%s5 + $0x48] sm:$0xff]
        %v989 = vld [vmem:[%s5 + $0x50] sm:$0xff]
        %v990 = vld [vmem:[%s5 + $0x58] sm:$0xff]
        %v991 = vld [vmem:[%s5 + $0x60] sm:$0xff]
        %v992 = vld [vmem:[%s5 + $0x68] sm:$0xff]
        %v993 = vld [vmem:[%s5 + $0x70] sm:$0xff]
        %v994 = vld [vmem:[%s5 + $0x78] sm:$0xff]
        %v995 = vld [vmem:[%s5 + $0x80] sm:$0xff]
        %v996 = vld [vmem:[%s5 + $0x88] sm:$0xff]
        %v997 = vld [vmem:[%s5 + $0x90] sm:$0xff]
        %v998 = vld [vmem:[%s5 + $0x98] sm:$0xff]
        %v999 = vld [vmem:[%s5 + $0xa0] sm:$0xff]
        %v1000 = vld [vmem:[%s5 + $0xa8] sm:$0xff]
        %v1001 = vld [vmem:[%s5 + $0xb0] sm:$0xff]
        %v1002 = vld [vmem:[%s5 + $0xb8] sm:$0xff]
        %v1003 = vld [vmem:[%s5 + $0xc0] sm:$0xff]
        %v1004 = vld [vmem:[%s5 + $0xc8] sm:$0xff]
        %v1005 = vld [vmem:[%s5 + $0xd0] sm:$0xff]
        %v1006 = vld [vmem:[%s5 + $0xd8] sm:$0xff]
        %v1007 = vld [vmem:[%s5 + $0xe0] sm:$0xff]
        %v1008 = vld [vmem:[%s5 + $0xe8] sm:$0xff]
        %v1009 = vld [vmem:[%s5 + $0xf0] sm:$0xff]
        %v1010 = vld [vmem:[%s5 + $0xf8] sm:$0xff]
        %v1011 = vld [vmem:[%s5 + $0x100] sm:$0xff]
        %v1012 = vld [vmem:[%s5 + $0x108] sm:$0xff]
        %v1013 = vld [vmem:[%s5 + $0x110] sm:$0xff]
        %v1014 = vld [vmem:[%s5 + $0x118] sm:$0xff]
        %v1015 = vld [vmem:[%s5 + $0x120] sm:$0xff]
        %v1016 = vld [vmem:[%s5 + $0x128] sm:$0xff]
        %v1017 = vld [vmem:[%s5 + $0x130] sm:$0xff]
        %v1018 = vld [vmem:[%s5 + $0x138] sm:$0xff]
        %v1019 = vld [vmem:[%s5 + $0x140] sm:$0xff]
        %v1020 = vld [vmem:[%s5 + $0x148] sm:$0xff]
        %v1021 = vld [vmem:[%s5 + $0x150] sm:$0xff]
        %v1022 = vld [vmem:[%s5 + $0x158] sm:$0xff]
        %v1023 = vld [vmem:[%s5 + $0x160] sm:$0xff]
        %v1024 = vld [vmem:[%s5 + $0x168] sm:$0xff]
        %v1025 = vld [vmem:[%s5 + $0x170] sm:$0xff]
        %v1026 = vld [vmem:[%s5 + $0x178] sm:$0xff]
        %v1027 = vld [vmem:[%s5 + $0x180] sm:$0xff]
        %v1028 = vld [vmem:[%s5 + $0x188] sm:$0xff]
        %v1029 = vld [vmem:[%s5 + $0x190] sm:$0xff]
        %v1030 = vld [vmem:[%s5 + $0x198] sm:$0xff]
        %v1031 = vld [vmem:[%s5 + $0x1a0] sm:$0xff]
        %v1032 = vld [vmem:[%s5 + $0x1a8] sm:$0xff]
        %v1033 = vld [vmem:[%s5 + $0x1b0] sm:$0xff]
        %v1034 = vld [vmem:[%s5 + $0x1b8] sm:$0xff]
        %v1035 = vld [vmem:[%s5 + $0x1c0] sm:$0xff]
        %v1036 = vld [vmem:[%s5 + $0x1c8] sm:$0xff]
        %v1037 = vld [vmem:[%s5 + $0x1d0] sm:$0xff]
        %v1038 = vld [vmem:[%s5 + $0x1d8] sm:$0xff]
        %v1039 = vld [vmem:[%s5 + $0x1e0] sm:$0xff]
        %v1040 = vld [vmem:[%s5 + $0x1e8] sm:$0xff]
        %v1041 = vld [vmem:[%s5 + $0x1f0] sm:$0xff]
        %v1042 = vld [vmem:[%s5 + $0x1f8] sm:$0xff]
        %v1043 = vld [vmem:[%s5 + $0x200] sm:$0xff]
        %v1044 = vld [vmem:[%s5 + $0x208] sm:$0xff]
        %v1045 = vld [vmem:[%s5 + $0x210] sm:$0xff]
        %v1046 = vld [vmem:[%s5 + $0x218] sm:$0xff]
        %v1047 = vld [vmem:[%s5 + $0x220] sm:$0xff]
        %v1048 = vld [vmem:[%s5 + $0x228] sm:$0xff]
        %v1049 = vld [vmem:[%s5 + $0x230] sm:$0xff]
        %v1050 = vld [vmem:[%s5 + $0x238] sm:$0xff]
        %v1051 = vld [vmem:[%s5 + $0x240] sm:$0xff]
        %v1052 = vld [vmem:[%s5 + $0x248] sm:$0xff]
        %v1053 = vld [vmem:[%s5 + $0x250] sm:$0xff]
        %v1054 = vld [vmem:[%s5 + $0x258] sm:$0xff]
        %v1055 = vld [vmem:[%s5 + $0x260] sm:$0xff]
        %v1056 = vld [vmem:[%s5 + $0x268] sm:$0xff]
        %v1057 = vld [vmem:[%s5 + $0x270] sm:$0xff]
        %v1058 = vld [vmem:[%s5 + $0x278] sm:$0xff]
        %v1059 = vld [vmem:[%s5 + $0x280] sm:$0xff]
        %v1060 = vld [vmem:[%s5 + $0x288] sm:$0xff]
        %v1061 = vld [vmem:[%s5 + $0x290] sm:$0xff]
        %v1062 = vld [vmem:[%s5 + $0x298] sm:$0xff]
        %v1063 = vld [vmem:[%s5 + $0x2a0] sm:$0xff]
        %v1064 = vld [vmem:[%s5 + $0x2a8] sm:$0xff]
        %v1065 = vld [vmem:[%s5 + $0x2b0] sm:$0xff]
        %v1066 = vld [vmem:[%s5 + $0x2b8] sm:$0xff]
        %v1067 = vld [vmem:[%s5 + $0x2c0] sm:$0xff]
        %v1068 = vld [vmem:[%s5 + $0x2c8] sm:$0xff]
        %v1069 = vld [vmem:[%s5 + $0x2d0] sm:$0xff]
        %v1070 = vld [vmem:[%s5 + $0x2d8] sm:$0xff]
        %v1071 = vld [vmem:[%s5 + $0x2e0] sm:$0xff]
        %v1072 = vld [vmem:[%s5 + $0x2e8] sm:$0xff]
        %v1073 = vld [vmem:[%s5 + $0x2f0] sm:$0xff]
        %v1074 = vld [vmem:[%s5 + $0x2f8] sm:$0xff]
        %v1075 = vld [vmem:[%s5 + $0x300] sm:$0xff]
        %v1076 = vld [vmem:[%s5 + $0x308] sm:$0xff]
        %v1077 = vld [vmem:[%s5 + $0x310] sm:$0xff]
        %v1078 = vld [vmem:[%s5 + $0x318] sm:$0xff]
        %v1079 = vld [vmem:[%s5 + $0x320] sm:$0xff]
        %v1080 = vld [vmem:[%s5 + $0x328] sm:$0xff]
        %v1081 = vld [vmem:[%s5 + $0x330] sm:$0xff]
        %v1082 = vld [vmem:[%s5 + $0x338] sm:$0xff]
        %v1083 = vld [vmem:[%s5 + $0x340] sm:$0xff]
        %v1084 = vld [vmem:[%s5 + $0x348] sm:$0xff]
        %v1085 = vld [vmem:[%s5 + $0x350] sm:$0xff]
        %v1086 = vld [vmem:[%s5 + $0x358] sm:$0xff]
        %v1087 = vld [vmem:[%s5 + $0x360] sm:$0xff]
        %v1088 = vld [vmem:[%s5 + $0x368] sm:$0xff]
        %v1089 = vld [vmem:[%s5 + $0x370] sm:$0xff]
        %v1090 = vld [vmem:[%s5 + $0x378] sm:$0xff]
        %v1091 = vld [vmem:[%s5 + $0x380] sm:$0xff]
        %v1092 = vld [vmem:[%s5 + $0x388] sm:$0xff]
        %v1093 = vld [vmem:[%s5 + $0x390] sm:$0xff]
        %v1094 = vld [vmem:[%s5 + $0x398] sm:$0xff]
        %v1095 = vld [vmem:[%s5 + $0x3a0] sm:$0xff]
        %v1096 = vld [vmem:[%s5 + $0x3a8] sm:$0xff]
        %v1097 = vld [vmem:[%s5 + $0x3b0] sm:$0xff]
        %v1098 = vld [vmem:[%s5 + $0x3b8] sm:$0xff]
        %v1099 = vld [vmem:[%s5 + $0x3c0] sm:$0xff]
        %v1100 = vld [vmem:[%s5 + $0x3c8] sm:$0xff]
        %v1101 = vld [vmem:[%s5 + $0x3d0] sm:$0xff]
        %v1102 = vld [vmem:[%s5 + $0x3d8] sm:$0xff]
        %v1103 = vld [vmem:[%s5 + $0x3e0] sm:$0xff]
        %v1104 = vld [vmem:[%s5 + $0x3e8] sm:$0xff]
        %v1105 = vld [vmem:[%s5 + $0x3f0] sm:$0xff]
        %v1106 = vld [vmem:[%s5 + $0x3f8] sm:$0xff]
        %v1107 = vld [vmem:[%s5 + $0x400] sm:$0xff]
        %v1108 = vld [vmem:[%s5 + $0x408] sm:$0xff]
        %v1109 = vld [vmem:[%s5 + $0x410] sm:$0xff]
        %v1110 = vld [vmem:[%s5 + $0x418] sm:$0xff]
        %v1111 = vld [vmem:[%s5 + $0x420] sm:$0xff]
        %v1112 = vld [vmem:[%s5 + $0x428] sm:$0xff]
        %v1113 = vld [vmem:[%s5 + $0x430] sm:$0xff]
        %v1114 = vld [vmem:[%s5 + $0x438] sm:$0xff]
        %v1115 = vld [vmem:[%s5 + $0x440] sm:$0xff]
        %v1116 = vld [vmem:[%s5 + $0x448] sm:$0xff]
        %v1117 = vld [vmem:[%s5 + $0x450] sm:$0xff]
        %v1118 = vld [vmem:[%s5 + $0x458] sm:$0xff]
        %v1119 = vld [vmem:[%s5 + $0x460] sm:$0xff]
        %v1120 = vld [vmem:[%s5 + $0x468] sm:$0xff]
        %v1121 = vld [vmem:[%s5 + $0x470] sm:$0xff]
        %v1122 = vld [vmem:[%s5 + $0x478] sm:$0xff]
        %v1123 = vld [vmem:[%s5 + $0x480] sm:$0xff]
        %v1124 = vld [vmem:[%s5 + $0x488] sm:$0xff]
        %v1125 = vld [vmem:[%s5 + $0x490] sm:$0xff]
        %v1126 = vld [vmem:[%s5 + $0x498] sm:$0xff]
        %v1127 = vld [vmem:[%s5 + $0x4a0] sm:$0xff]
        %v1128 = vld [vmem:[%s5 + $0x4a8] sm:$0xff]
        %v1129 = vld [vmem:[%s5 + $0x4b0] sm:$0xff]
        %v1130 = vld [vmem:[%s5 + $0x4b8] sm:$0xff]
        %v1131 = vld [vmem:[%s5 + $0x4c0] sm:$0xff]
        %v1132 = vld [vmem:[%s5 + $0x4c8] sm:$0xff]
        %v1133 = vld [vmem:[%s5 + $0x4d0] sm:$0xff]
        %v1134 = vld [vmem:[%s5 + $0x4d8] sm:$0xff]
        %v1135 = vld [vmem:[%s5 + $0x4e0] sm:$0xff]
        %v1136 = vld [vmem:[%s5 + $0x4e8] sm:$0xff]
        %v1137 = vld [vmem:[%s5 + $0x4f0] sm:$0xff]
        %v1138 = vld [vmem:[%s5 + $0x4f8] sm:$0xff]
        %v1139 = vld [vmem:[%s5 + $0x500] sm:$0xff]
        %v1140 = vld [vmem:[%s5 + $0x508] sm:$0xff]
        %v1141 = vld [vmem:[%s5 + $0x510] sm:$0xff]
        %v1142 = vld [vmem:[%s5 + $0x518] sm:$0xff]
        %v1143 = vld [vmem:[%s5 + $0x520] sm:$0xff]
        %v1144 = vld [vmem:[%s5 + $0x528] sm:$0xff]
        %v1145 = vld [vmem:[%s5 + $0x530] sm:$0xff]
        %v1146 = vld [vmem:[%s5 + $0x538] sm:$0xff]
        %v1147 = vld [vmem:[%s5 + $0x540] sm:$0xff]
        %v1148 = vld [vmem:[%s5 + $0x548] sm:$0xff]
        %v1149 = vld [vmem:[%s5 + $0x550] sm:$0xff]
        %v1150 = vld [vmem:[%s5 + $0x558] sm:$0xff]
        %v1151 = vld [vmem:[%s5 + $0x560] sm:$0xff]
        %v1152 = vld [vmem:[%s5 + $0x568] sm:$0xff]
        %v1153 = vld [vmem:[%s5 + $0x570] sm:$0xff]
        %v1154 = vld [vmem:[%s5 + $0x578] sm:$0xff]
        %v1155 = vld [vmem:[%s5 + $0x580] sm:$0xff]
        %v1156 = vld [vmem:[%s5 + $0x588] sm:$0xff]
        %v1157 = vld [vmem:[%s5 + $0x590] sm:$0xff]
        %v1158 = vld [vmem:[%s5 + $0x598] sm:$0xff]
        %v1159 = vld [vmem:[%s5 + $0x5a0] sm:$0xff]
        %v1160 = vld [vmem:[%s5 + $0x5a8] sm:$0xff]
        %v1161 = vld [vmem:[%s5 + $0x5b0] sm:$0xff]
        %v1162 = vld [vmem:[%s5 + $0x5b8] sm:$0xff]
        %v1163 = vld [vmem:[%s5 + $0x5c0] sm:$0xff]
        %v1164 = vld [vmem:[%s5 + $0x5c8] sm:$0xff]
        %v1165 = vld [vmem:[%s5 + $0x5d0] sm:$0xff]
        %v1166 = vld [vmem:[%s5 + $0x5d8] sm:$0xff]
        %v1167 = vld [vmem:[%s5 + $0x5e0] sm:$0xff]
        %v1168 = vld [vmem:[%s5 + $0x5e8] sm:$0xff]
        %v1169 = vld [vmem:[%s5 + $0x5f0] sm:$0xff]
        %v1170 = vld [vmem:[%s5 + $0x5f8] sm:$0xff]
        %v1171 = vld [vmem:[%s5 + $0x600] sm:$0xff]
        %v1172 = vld [vmem:[%s5 + $0x608] sm:$0xff]
        %v1173 = vld [vmem:[%s5 + $0x610] sm:$0xff]
        %v1174 = vld [vmem:[%s5 + $0x618] sm:$0xff]
        %v1175 = vld [vmem:[%s5 + $0x620] sm:$0xff]
        %v1176 = vld [vmem:[%s5 + $0x628] sm:$0xff]
        %v1177 = vld [vmem:[%s5 + $0x630] sm:$0xff]
        %v1178 = vld [vmem:[%s5 + $0x638] sm:$0xff]
        %v1179 = vld [vmem:[%s5 + $0x640] sm:$0xff]
        %v1180 = vld [vmem:[%s5 + $0x648] sm:$0xff]
        %v1181 = vld [vmem:[%s5 + $0x650] sm:$0xff]
        %v1182 = vld [vmem:[%s5 + $0x658] sm:$0xff]
        %v1183 = vld [vmem:[%s5 + $0x660] sm:$0xff]
        %v1184 = vld [vmem:[%s5 + $0x668] sm:$0xff]
        %v1185 = vld [vmem:[%s5 + $0x670] sm:$0xff]
        %v1186 = vld [vmem:[%s5 + $0x678] sm:$0xff]
        %v1187 = vld [vmem:[%s5 + $0x680] sm:$0xff]
        %v1188 = vld [vmem:[%s5 + $0x688] sm:$0xff]
        %v1189 = vld [vmem:[%s5 + $0x690] sm:$0xff]
        %v1190 = vld [vmem:[%s5 + $0x698] sm:$0xff]
        %v1191 = vld [vmem:[%s5 + $0x6a0] sm:$0xff]
        %v1192 = vld [vmem:[%s5 + $0x6a8] sm:$0xff]
        %v1193 = vld [vmem:[%s5 + $0x6b0] sm:$0xff]
        %v1194 = vld [vmem:[%s5 + $0x6b8] sm:$0xff]
        %v1195 = vld [vmem:[%s5 + $0x6c0] sm:$0xff]
        %v1196 = vld [vmem:[%s5 + $0x6c8] sm:$0xff]
        %v1197 = vld [vmem:[%s5 + $0x6d0] sm:$0xff]
        %v1198 = vld [vmem:[%s5 + $0x6d8] sm:$0xff]
        %v1199 = vld [vmem:[%s5 + $0x6e0] sm:$0xff]
        %v1200 = vld [vmem:[%s5 + $0x6e8] sm:$0xff]
        %v1201 = vld [vmem:[%s5 + $0x6f0] sm:$0xff]
        %v1202 = vld [vmem:[%s5 + $0x6f8] sm:$0xff]
        %v1203 = vld [vmem:[%s5 + $0x700] sm:$0xff]
        %v1204 = vld [vmem:[%s5 + $0x708] sm:$0xff]
        %v1205 = vld [vmem:[%s5 + $0x710] sm:$0xff]
        %v1206 = vld [vmem:[%s5 + $0x718] sm:$0xff]
        %v1207 = vld [vmem:[%s5 + $0x720] sm:$0xff]
        %v1208 = vld [vmem:[%s5 + $0x728] sm:$0xff]
        %v1209 = vld [vmem:[%s5 + $0x730] sm:$0xff]
        %v1210 = vld [vmem:[%s5 + $0x738] sm:$0xff]
        %v1211 = vld [vmem:[%s5 + $0x740] sm:$0xff]
        %v1212 = vld [vmem:[%s5 + $0x748] sm:$0xff]
        %v1213 = vld [vmem:[%s5 + $0x750] sm:$0xff]
        %v1214 = vld [vmem:[%s5 + $0x758] sm:$0xff]
        %v1215 = vld [vmem:[%s5 + $0x760] sm:$0xff]
        %v1216 = vld [vmem:[%s5 + $0x768] sm:$0xff]
        %v1217 = vld [vmem:[%s5 + $0x770] sm:$0xff]
        %v1218 = vld [vmem:[%s5 + $0x778] sm:$0xff]
        %v1219 = vld [vmem:[%s5 + $0x780] sm:$0xff]
        %v1220 = vld [vmem:[%s5 + $0x788] sm:$0xff]
        %v1221 = vld [vmem:[%s5 + $0x790] sm:$0xff]
        %v1222 = vld [vmem:[%s5 + $0x798] sm:$0xff]
        %v1223 = vld [vmem:[%s5 + $0x7a0] sm:$0xff]
        %v1224 = vld [vmem:[%s5 + $0x7a8] sm:$0xff]
        %v1225 = vld [vmem:[%s5 + $0x7b0] sm:$0xff]
        %v1226 = vld [vmem:[%s5 + $0x7b8] sm:$0xff]
        %v1227 = vld [vmem:[%s5 + $0x7c0] sm:$0xff]
        %v1228 = vld [vmem:[%s5 + $0x7c8] sm:$0xff]
        %v1229 = vld [vmem:[%s5 + $0x7d0] sm:$0xff]
        %v1230 = vld [vmem:[%s5 + $0x7d8] sm:$0xff]
        %v1231 = vld [vmem:[%s5 + $0x7e0] sm:$0xff]
        %v1232 = vld [vmem:[%s5 + $0x7e8] sm:$0xff]
        %v1233 = vld [vmem:[%s5 + $0x7f0] sm:$0xff]
        %v1234 = vld [vmem:[%s5 + $0x7f8] sm:$0xff]
        %v1235 = vld [vmem:[%s6] sm:$0xff]
        %v1237 = vlaneseq
        %v1238 = vshrl.u32 %v1237, 7
        %v1239 = vsub.s32 0, %v1238
        %v1240 = vrot.slane %v1235, %v1239
        %v1241 = vlaneseq
        %v1242 = vshrl.u32 %v1241, 7
        %v1243 = vsub.s32 1, %v1242
        %v1244 = vrot.slane %v1235, %v1243
        %v1245 = vlaneseq
        %v1246 = vshrl.u32 %v1245, 7
        %v1247 = vsub.s32 2, %v1246
        %v1248 = vrot.slane %v1235, %v1247
        %v1249 = vlaneseq
        %v1250 = vshrl.u32 %v1249, 7
        %v1251 = vsub.s32 3, %v1250
        %v1252 = vrot.slane %v1235, %v1251
        %v1253 = vlaneseq
        %v1254 = vshrl.u32 %v1253, 7
        %v1255 = vsub.s32 4, %v1254
        %v1256 = vrot.slane %v1235, %v1255
        %v1257 = vlaneseq
        %v1258 = vshrl.u32 %v1257, 7
        %v1259 = vsub.s32 5, %v1258
        %v1260 = vrot.slane %v1235, %v1259
        %v1261 = vlaneseq
        %v1262 = vshrl.u32 %v1261, 7
        %v1263 = vsub.s32 6, %v1262
        %v1264 = vrot.slane %v1235, %v1263
        %v1265 = vlaneseq
        %v1266 = vshrl.u32 %v1265, 7
        %v1267 = vsub.s32 7, %v1266
        %v1268 = vrot.slane %v1235, %v1267
        %v1533 = vunpack.c.l.b16 %v979
        %v1534 = vunpack.c.h.b16 %v979
        %v1535 = vunpack.c.l.b16 %v980
        %v1536 = vunpack.c.h.b16 %v980
        %v1537 = vunpack.c.l.b16 %v981
        %v1538 = vunpack.c.h.b16 %v981
        %v1539 = vunpack.c.l.b16 %v982
        %v1540 = vunpack.c.h.b16 %v982
        %v1541 = vunpack.c.l.b16 %v983
        %v1542 = vunpack.c.h.b16 %v983
        %v1543 = vunpack.c.l.b16 %v984
        %v1544 = vunpack.c.h.b16 %v984
        %v1545 = vunpack.c.l.b16 %v985
        %v1546 = vunpack.c.h.b16 %v985
        %v1547 = vunpack.c.l.b16 %v986
        %v1548 = vunpack.c.h.b16 %v986
        %v1549 = vunpack.c.l.b16 %v987
        %v1550 = vunpack.c.h.b16 %v987
        %v1551 = vunpack.c.l.b16 %v988
        %v1552 = vunpack.c.h.b16 %v988
        %v1553 = vunpack.c.l.b16 %v989
        %v1554 = vunpack.c.h.b16 %v989
        %v1555 = vunpack.c.l.b16 %v990
        %v1556 = vunpack.c.h.b16 %v990
        %v1557 = vunpack.c.l.b16 %v991
        %v1558 = vunpack.c.h.b16 %v991
        %v1559 = vunpack.c.l.b16 %v992
        %v1560 = vunpack.c.h.b16 %v992
        %v1561 = vunpack.c.l.b16 %v993
        %v1562 = vunpack.c.h.b16 %v993
        %v1563 = vunpack.c.l.b16 %v994
        %v1564 = vunpack.c.h.b16 %v994
        %v1565 = vunpack.c.l.b16 %v995
        %v1566 = vunpack.c.h.b16 %v995
        %v1567 = vunpack.c.l.b16 %v996
        %v1568 = vunpack.c.h.b16 %v996
        %v1569 = vunpack.c.l.b16 %v997
        %v1570 = vunpack.c.h.b16 %v997
        %v1571 = vunpack.c.l.b16 %v998
        %v1572 = vunpack.c.h.b16 %v998
        %v1573 = vunpack.c.l.b16 %v999
        %v1574 = vunpack.c.h.b16 %v999
        %v1575 = vunpack.c.l.b16 %v1000
        %v1576 = vunpack.c.h.b16 %v1000
        %v1577 = vunpack.c.l.b16 %v1001
        %v1578 = vunpack.c.h.b16 %v1001
        %v1579 = vunpack.c.l.b16 %v1002
        %v1580 = vunpack.c.h.b16 %v1002
        %v1581 = vunpack.c.l.b16 %v1003
        %v1582 = vunpack.c.h.b16 %v1003
        %v1583 = vunpack.c.l.b16 %v1004
        %v1584 = vunpack.c.h.b16 %v1004
        %v1585 = vunpack.c.l.b16 %v1005
        %v1586 = vunpack.c.h.b16 %v1005
        %v1587 = vunpack.c.l.b16 %v1006
        %v1588 = vunpack.c.h.b16 %v1006
        %v1589 = vunpack.c.l.b16 %v1007
        %v1590 = vunpack.c.h.b16 %v1007
        %v1591 = vunpack.c.l.b16 %v1008
        %v1592 = vunpack.c.h.b16 %v1008
        %v1593 = vunpack.c.l.b16 %v1009
        %v1594 = vunpack.c.h.b16 %v1009
        %v1595 = vunpack.c.l.b16 %v1010
        %v1596 = vunpack.c.h.b16 %v1010
        %v1597 = vunpack.c.l.b16 %v1011
        %v1598 = vunpack.c.h.b16 %v1011
        %v1599 = vunpack.c.l.b16 %v1012
        %v1600 = vunpack.c.h.b16 %v1012
        %v1601 = vunpack.c.l.b16 %v1013
        %v1602 = vunpack.c.h.b16 %v1013
        %v1603 = vunpack.c.l.b16 %v1014
        %v1604 = vunpack.c.h.b16 %v1014
        %v1605 = vunpack.c.l.b16 %v1015
        %v1606 = vunpack.c.h.b16 %v1015
        %v1607 = vunpack.c.l.b16 %v1016
        %v1608 = vunpack.c.h.b16 %v1016
        %v1609 = vunpack.c.l.b16 %v1017
        %v1610 = vunpack.c.h.b16 %v1017
        %v1611 = vunpack.c.l.b16 %v1018
        %v1612 = vunpack.c.h.b16 %v1018
        %v1613 = vunpack.c.l.b16 %v1019
        %v1614 = vunpack.c.h.b16 %v1019
        %v1615 = vunpack.c.l.b16 %v1020
        %v1616 = vunpack.c.h.b16 %v1020
        %v1617 = vunpack.c.l.b16 %v1021
        %v1618 = vunpack.c.h.b16 %v1021
        %v1619 = vunpack.c.l.b16 %v1022
        %v1620 = vunpack.c.h.b16 %v1022
        %v1621 = vunpack.c.l.b16 %v1023
        %v1622 = vunpack.c.h.b16 %v1023
        %v1623 = vunpack.c.l.b16 %v1024
        %v1624 = vunpack.c.h.b16 %v1024
        %v1625 = vunpack.c.l.b16 %v1025
        %v1626 = vunpack.c.h.b16 %v1025
        %v1627 = vunpack.c.l.b16 %v1026
        %v1628 = vunpack.c.h.b16 %v1026
        %v1629 = vunpack.c.l.b16 %v1027
        %v1630 = vunpack.c.h.b16 %v1027
        %v1631 = vunpack.c.l.b16 %v1028
        %v1632 = vunpack.c.h.b16 %v1028
        %v1633 = vunpack.c.l.b16 %v1029
        %v1634 = vunpack.c.h.b16 %v1029
        %v1635 = vunpack.c.l.b16 %v1030
        %v1636 = vunpack.c.h.b16 %v1030
        %v1637 = vunpack.c.l.b16 %v1031
        %v1638 = vunpack.c.h.b16 %v1031
        %v1639 = vunpack.c.l.b16 %v1032
        %v1640 = vunpack.c.h.b16 %v1032
        %v1641 = vunpack.c.l.b16 %v1033
        %v1642 = vunpack.c.h.b16 %v1033
        %v1643 = vunpack.c.l.b16 %v1034
        %v1644 = vunpack.c.h.b16 %v1034
        %v1645 = vunpack.c.l.b16 %v1035
        %v1646 = vunpack.c.h.b16 %v1035
        %v1647 = vunpack.c.l.b16 %v1036
        %v1648 = vunpack.c.h.b16 %v1036
        %v1649 = vunpack.c.l.b16 %v1037
        %v1650 = vunpack.c.h.b16 %v1037
        %v1651 = vunpack.c.l.b16 %v1038
        %v1652 = vunpack.c.h.b16 %v1038
        %v1653 = vunpack.c.l.b16 %v1039
        %v1654 = vunpack.c.h.b16 %v1039
        %v1655 = vunpack.c.l.b16 %v1040
        %v1656 = vunpack.c.h.b16 %v1040
        %v1657 = vunpack.c.l.b16 %v1041
        %v1658 = vunpack.c.h.b16 %v1041
        %v1659 = vunpack.c.l.b16 %v1042
        %v1660 = vunpack.c.h.b16 %v1042
        %v1661 = vunpack.c.l.b16 %v1043
        %v1662 = vunpack.c.h.b16 %v1043
        %v1663 = vunpack.c.l.b16 %v1044
        %v1664 = vunpack.c.h.b16 %v1044
        %v1665 = vunpack.c.l.b16 %v1045
        %v1666 = vunpack.c.h.b16 %v1045
        %v1667 = vunpack.c.l.b16 %v1046
        %v1668 = vunpack.c.h.b16 %v1046
        %v1669 = vunpack.c.l.b16 %v1047
        %v1670 = vunpack.c.h.b16 %v1047
        %v1671 = vunpack.c.l.b16 %v1048
        %v1672 = vunpack.c.h.b16 %v1048
        %v1673 = vunpack.c.l.b16 %v1049
        %v1674 = vunpack.c.h.b16 %v1049
        %v1675 = vunpack.c.l.b16 %v1050
        %v1676 = vunpack.c.h.b16 %v1050
        %v1677 = vunpack.c.l.b16 %v1051
        %v1678 = vunpack.c.h.b16 %v1051
        %v1679 = vunpack.c.l.b16 %v1052
        %v1680 = vunpack.c.h.b16 %v1052
        %v1681 = vunpack.c.l.b16 %v1053
        %v1682 = vunpack.c.h.b16 %v1053
        %v1683 = vunpack.c.l.b16 %v1054
        %v1684 = vunpack.c.h.b16 %v1054
        %v1685 = vunpack.c.l.b16 %v1055
        %v1686 = vunpack.c.h.b16 %v1055
        %v1687 = vunpack.c.l.b16 %v1056
        %v1688 = vunpack.c.h.b16 %v1056
        %v1689 = vunpack.c.l.b16 %v1057
        %v1690 = vunpack.c.h.b16 %v1057
        %v1691 = vunpack.c.l.b16 %v1058
        %v1692 = vunpack.c.h.b16 %v1058
        %v1693 = vunpack.c.l.b16 %v1059
        %v1694 = vunpack.c.h.b16 %v1059
        %v1695 = vunpack.c.l.b16 %v1060
        %v1696 = vunpack.c.h.b16 %v1060
        %v1697 = vunpack.c.l.b16 %v1061
        %v1698 = vunpack.c.h.b16 %v1061
        %v1699 = vunpack.c.l.b16 %v1062
        %v1700 = vunpack.c.h.b16 %v1062
        %v1701 = vunpack.c.l.b16 %v1063
        %v1702 = vunpack.c.h.b16 %v1063
        %v1703 = vunpack.c.l.b16 %v1064
        %v1704 = vunpack.c.h.b16 %v1064
        %v1705 = vunpack.c.l.b16 %v1065
        %v1706 = vunpack.c.h.b16 %v1065
        %v1707 = vunpack.c.l.b16 %v1066
        %v1708 = vunpack.c.h.b16 %v1066
        %v1709 = vunpack.c.l.b16 %v1067
        %v1710 = vunpack.c.h.b16 %v1067
        %v1711 = vunpack.c.l.b16 %v1068
        %v1712 = vunpack.c.h.b16 %v1068
        %v1713 = vunpack.c.l.b16 %v1069
        %v1714 = vunpack.c.h.b16 %v1069
        %v1715 = vunpack.c.l.b16 %v1070
        %v1716 = vunpack.c.h.b16 %v1070
        %v1717 = vunpack.c.l.b16 %v1071
        %v1718 = vunpack.c.h.b16 %v1071
        %v1719 = vunpack.c.l.b16 %v1072
        %v1720 = vunpack.c.h.b16 %v1072
        %v1721 = vunpack.c.l.b16 %v1073
        %v1722 = vunpack.c.h.b16 %v1073
        %v1723 = vunpack.c.l.b16 %v1074
        %v1724 = vunpack.c.h.b16 %v1074
        %v1725 = vunpack.c.l.b16 %v1075
        %v1726 = vunpack.c.h.b16 %v1075
        %v1727 = vunpack.c.l.b16 %v1076
        %v1728 = vunpack.c.h.b16 %v1076
        %v1729 = vunpack.c.l.b16 %v1077
        %v1730 = vunpack.c.h.b16 %v1077
        %v1731 = vunpack.c.l.b16 %v1078
        %v1732 = vunpack.c.h.b16 %v1078
        %v1733 = vunpack.c.l.b16 %v1079
        %v1734 = vunpack.c.h.b16 %v1079
        %v1735 = vunpack.c.l.b16 %v1080
        %v1736 = vunpack.c.h.b16 %v1080
        %v1737 = vunpack.c.l.b16 %v1081
        %v1738 = vunpack.c.h.b16 %v1081
        %v1739 = vunpack.c.l.b16 %v1082
        %v1740 = vunpack.c.h.b16 %v1082
        %v1741 = vunpack.c.l.b16 %v1083
        %v1742 = vunpack.c.h.b16 %v1083
        %v1743 = vunpack.c.l.b16 %v1084
        %v1744 = vunpack.c.h.b16 %v1084
        %v1745 = vunpack.c.l.b16 %v1085
        %v1746 = vunpack.c.h.b16 %v1085
        %v1747 = vunpack.c.l.b16 %v1086
        %v1748 = vunpack.c.h.b16 %v1086
        %v1749 = vunpack.c.l.b16 %v1087
        %v1750 = vunpack.c.h.b16 %v1087
        %v1751 = vunpack.c.l.b16 %v1088
        %v1752 = vunpack.c.h.b16 %v1088
        %v1753 = vunpack.c.l.b16 %v1089
        %v1754 = vunpack.c.h.b16 %v1089
        %v1755 = vunpack.c.l.b16 %v1090
        %v1756 = vunpack.c.h.b16 %v1090
        %v1757 = vunpack.c.l.b16 %v1091
        %v1758 = vunpack.c.h.b16 %v1091
        %v1759 = vunpack.c.l.b16 %v1092
        %v1760 = vunpack.c.h.b16 %v1092
        %v1761 = vunpack.c.l.b16 %v1093
        %v1762 = vunpack.c.h.b16 %v1093
        %v1763 = vunpack.c.l.b16 %v1094
        %v1764 = vunpack.c.h.b16 %v1094
        %v1765 = vunpack.c.l.b16 %v1095
        %v1766 = vunpack.c.h.b16 %v1095
        %v1767 = vunpack.c.l.b16 %v1096
        %v1768 = vunpack.c.h.b16 %v1096
        %v1769 = vunpack.c.l.b16 %v1097
        %v1770 = vunpack.c.h.b16 %v1097
        %v1771 = vunpack.c.l.b16 %v1098
        %v1772 = vunpack.c.h.b16 %v1098
        %v1773 = vunpack.c.l.b16 %v1099
        %v1774 = vunpack.c.h.b16 %v1099
        %v1775 = vunpack.c.l.b16 %v1100
        %v1776 = vunpack.c.h.b16 %v1100
        %v1777 = vunpack.c.l.b16 %v1101
        %v1778 = vunpack.c.h.b16 %v1101
        %v1779 = vunpack.c.l.b16 %v1102
        %v1780 = vunpack.c.h.b16 %v1102
        %v1781 = vunpack.c.l.b16 %v1103
        %v1782 = vunpack.c.h.b16 %v1103
        %v1783 = vunpack.c.l.b16 %v1104
        %v1784 = vunpack.c.h.b16 %v1104
        %v1785 = vunpack.c.l.b16 %v1105
        %v1786 = vunpack.c.h.b16 %v1105
        %v1787 = vunpack.c.l.b16 %v1106
        %v1788 = vunpack.c.h.b16 %v1106
        %v1789 = vunpack.c.l.b16 %v1107
        %v1790 = vunpack.c.h.b16 %v1107
        %v1791 = vunpack.c.l.b16 %v1108
        %v1792 = vunpack.c.h.b16 %v1108
        %v1793 = vunpack.c.l.b16 %v1109
        %v1794 = vunpack.c.h.b16 %v1109
        %v1795 = vunpack.c.l.b16 %v1110
        %v1796 = vunpack.c.h.b16 %v1110
        %v1797 = vunpack.c.l.b16 %v1111
        %v1798 = vunpack.c.h.b16 %v1111
        %v1799 = vunpack.c.l.b16 %v1112
        %v1800 = vunpack.c.h.b16 %v1112
        %v1801 = vunpack.c.l.b16 %v1113
        %v1802 = vunpack.c.h.b16 %v1113
        %v1803 = vunpack.c.l.b16 %v1114
        %v1804 = vunpack.c.h.b16 %v1114
        %v1805 = vunpack.c.l.b16 %v1115
        %v1806 = vunpack.c.h.b16 %v1115
        %v1807 = vunpack.c.l.b16 %v1116
        %v1808 = vunpack.c.h.b16 %v1116
        %v1809 = vunpack.c.l.b16 %v1117
        %v1810 = vunpack.c.h.b16 %v1117
        %v1811 = vunpack.c.l.b16 %v1118
        %v1812 = vunpack.c.h.b16 %v1118
        %v1813 = vunpack.c.l.b16 %v1119
        %v1814 = vunpack.c.h.b16 %v1119
        %v1815 = vunpack.c.l.b16 %v1120
        %v1816 = vunpack.c.h.b16 %v1120
        %v1817 = vunpack.c.l.b16 %v1121
        %v1818 = vunpack.c.h.b16 %v1121
        %v1819 = vunpack.c.l.b16 %v1122
        %v1820 = vunpack.c.h.b16 %v1122
        %v1821 = vunpack.c.l.b16 %v1123
        %v1822 = vunpack.c.h.b16 %v1123
        %v1823 = vunpack.c.l.b16 %v1124
        %v1824 = vunpack.c.h.b16 %v1124
        %v1825 = vunpack.c.l.b16 %v1125
        %v1826 = vunpack.c.h.b16 %v1125
        %v1827 = vunpack.c.l.b16 %v1126
        %v1828 = vunpack.c.h.b16 %v1126
        %v1829 = vunpack.c.l.b16 %v1127
        %v1830 = vunpack.c.h.b16 %v1127
        %v1831 = vunpack.c.l.b16 %v1128
        %v1832 = vunpack.c.h.b16 %v1128
        %v1833 = vunpack.c.l.b16 %v1129
        %v1834 = vunpack.c.h.b16 %v1129
        %v1835 = vunpack.c.l.b16 %v1130
        %v1836 = vunpack.c.h.b16 %v1130
        %v1837 = vunpack.c.l.b16 %v1131
        %v1838 = vunpack.c.h.b16 %v1131
        %v1839 = vunpack.c.l.b16 %v1132
        %v1840 = vunpack.c.h.b16 %v1132
        %v1841 = vunpack.c.l.b16 %v1133
        %v1842 = vunpack.c.h.b16 %v1133
        %v1843 = vunpack.c.l.b16 %v1134
        %v1844 = vunpack.c.h.b16 %v1134
        %v1845 = vunpack.c.l.b16 %v1135
        %v1846 = vunpack.c.h.b16 %v1135
        %v1847 = vunpack.c.l.b16 %v1136
        %v1848 = vunpack.c.h.b16 %v1136
        %v1849 = vunpack.c.l.b16 %v1137
        %v1850 = vunpack.c.h.b16 %v1137
        %v1851 = vunpack.c.l.b16 %v1138
        %v1852 = vunpack.c.h.b16 %v1138
        %v1853 = vunpack.c.l.b16 %v1139
        %v1854 = vunpack.c.h.b16 %v1139
        %v1855 = vunpack.c.l.b16 %v1140
        %v1856 = vunpack.c.h.b16 %v1140
        %v1857 = vunpack.c.l.b16 %v1141
        %v1858 = vunpack.c.h.b16 %v1141
        %v1859 = vunpack.c.l.b16 %v1142
        %v1860 = vunpack.c.h.b16 %v1142
        %v1861 = vunpack.c.l.b16 %v1143
        %v1862 = vunpack.c.h.b16 %v1143
        %v1863 = vunpack.c.l.b16 %v1144
        %v1864 = vunpack.c.h.b16 %v1144
        %v1865 = vunpack.c.l.b16 %v1145
        %v1866 = vunpack.c.h.b16 %v1145
        %v1867 = vunpack.c.l.b16 %v1146
        %v1868 = vunpack.c.h.b16 %v1146
        %v1869 = vunpack.c.l.b16 %v1147
        %v1870 = vunpack.c.h.b16 %v1147
        %v1871 = vunpack.c.l.b16 %v1148
        %v1872 = vunpack.c.h.b16 %v1148
        %v1873 = vunpack.c.l.b16 %v1149
        %v1874 = vunpack.c.h.b16 %v1149
        %v1875 = vunpack.c.l.b16 %v1150
        %v1876 = vunpack.c.h.b16 %v1150
        %v1877 = vunpack.c.l.b16 %v1151
        %v1878 = vunpack.c.h.b16 %v1151
        %v1879 = vunpack.c.l.b16 %v1152
        %v1880 = vunpack.c.h.b16 %v1152
        %v1881 = vunpack.c.l.b16 %v1153
        %v1882 = vunpack.c.h.b16 %v1153
        %v1883 = vunpack.c.l.b16 %v1154
        %v1884 = vunpack.c.h.b16 %v1154
        %v1885 = vunpack.c.l.b16 %v1155
        %v1886 = vunpack.c.h.b16 %v1155
        %v1887 = vunpack.c.l.b16 %v1156
        %v1888 = vunpack.c.h.b16 %v1156
        %v1889 = vunpack.c.l.b16 %v1157
        %v1890 = vunpack.c.h.b16 %v1157
        %v1891 = vunpack.c.l.b16 %v1158
        %v1892 = vunpack.c.h.b16 %v1158
        %v1893 = vunpack.c.l.b16 %v1159
        %v1894 = vunpack.c.h.b16 %v1159
        %v1895 = vunpack.c.l.b16 %v1160
        %v1896 = vunpack.c.h.b16 %v1160
        %v1897 = vunpack.c.l.b16 %v1161
        %v1898 = vunpack.c.h.b16 %v1161
        %v1899 = vunpack.c.l.b16 %v1162
        %v1900 = vunpack.c.h.b16 %v1162
        %v1901 = vunpack.c.l.b16 %v1163
        %v1902 = vunpack.c.h.b16 %v1163
        %v1903 = vunpack.c.l.b16 %v1164
        %v1904 = vunpack.c.h.b16 %v1164
        %v1905 = vunpack.c.l.b16 %v1165
        %v1906 = vunpack.c.h.b16 %v1165
        %v1907 = vunpack.c.l.b16 %v1166
        %v1908 = vunpack.c.h.b16 %v1166
        %v1909 = vunpack.c.l.b16 %v1167
        %v1910 = vunpack.c.h.b16 %v1167
        %v1911 = vunpack.c.l.b16 %v1168
        %v1912 = vunpack.c.h.b16 %v1168
        %v1913 = vunpack.c.l.b16 %v1169
        %v1914 = vunpack.c.h.b16 %v1169
        %v1915 = vunpack.c.l.b16 %v1170
        %v1916 = vunpack.c.h.b16 %v1170
        %v1917 = vunpack.c.l.b16 %v1171
        %v1918 = vunpack.c.h.b16 %v1171
        %v1919 = vunpack.c.l.b16 %v1172
        %v1920 = vunpack.c.h.b16 %v1172
        %v1921 = vunpack.c.l.b16 %v1173
        %v1922 = vunpack.c.h.b16 %v1173
        %v1923 = vunpack.c.l.b16 %v1174
        %v1924 = vunpack.c.h.b16 %v1174
        %v1925 = vunpack.c.l.b16 %v1175
        %v1926 = vunpack.c.h.b16 %v1175
        %v1927 = vunpack.c.l.b16 %v1176
        %v1928 = vunpack.c.h.b16 %v1176
        %v1929 = vunpack.c.l.b16 %v1177
        %v1930 = vunpack.c.h.b16 %v1177
        %v1931 = vunpack.c.l.b16 %v1178
        %v1932 = vunpack.c.h.b16 %v1178
        %v1933 = vunpack.c.l.b16 %v1179
        %v1934 = vunpack.c.h.b16 %v1179
        %v1935 = vunpack.c.l.b16 %v1180
        %v1936 = vunpack.c.h.b16 %v1180
        %v1937 = vunpack.c.l.b16 %v1181
        %v1938 = vunpack.c.h.b16 %v1181
        %v1939 = vunpack.c.l.b16 %v1182
        %v1940 = vunpack.c.h.b16 %v1182
        %v1941 = vunpack.c.l.b16 %v1183
        %v1942 = vunpack.c.h.b16 %v1183
        %v1943 = vunpack.c.l.b16 %v1184
        %v1944 = vunpack.c.h.b16 %v1184
        %v1945 = vunpack.c.l.b16 %v1185
        %v1946 = vunpack.c.h.b16 %v1185
        %v1947 = vunpack.c.l.b16 %v1186
        %v1948 = vunpack.c.h.b16 %v1186
        %v1949 = vunpack.c.l.b16 %v1187
        %v1950 = vunpack.c.h.b16 %v1187
        %v1951 = vunpack.c.l.b16 %v1188
        %v1952 = vunpack.c.h.b16 %v1188
        %v1953 = vunpack.c.l.b16 %v1189
        %v1954 = vunpack.c.h.b16 %v1189
        %v1955 = vunpack.c.l.b16 %v1190
        %v1956 = vunpack.c.h.b16 %v1190
        %v1957 = vunpack.c.l.b16 %v1191
        %v1958 = vunpack.c.h.b16 %v1191
        %v1959 = vunpack.c.l.b16 %v1192
        %v1960 = vunpack.c.h.b16 %v1192
        %v1961 = vunpack.c.l.b16 %v1193
        %v1962 = vunpack.c.h.b16 %v1193
        %v1963 = vunpack.c.l.b16 %v1194
        %v1964 = vunpack.c.h.b16 %v1194
        %v1965 = vunpack.c.l.b16 %v1195
        %v1966 = vunpack.c.h.b16 %v1195
        %v1967 = vunpack.c.l.b16 %v1196
        %v1968 = vunpack.c.h.b16 %v1196
        %v1969 = vunpack.c.l.b16 %v1197
        %v1970 = vunpack.c.h.b16 %v1197
        %v1971 = vunpack.c.l.b16 %v1198
        %v1972 = vunpack.c.h.b16 %v1198
        %v1973 = vunpack.c.l.b16 %v1199
        %v1974 = vunpack.c.h.b16 %v1199
        %v1975 = vunpack.c.l.b16 %v1200
        %v1976 = vunpack.c.h.b16 %v1200
        %v1977 = vunpack.c.l.b16 %v1201
        %v1978 = vunpack.c.h.b16 %v1201
        %v1979 = vunpack.c.l.b16 %v1202
        %v1980 = vunpack.c.h.b16 %v1202
        %v1981 = vunpack.c.l.b16 %v1203
        %v1982 = vunpack.c.h.b16 %v1203
        %v1983 = vunpack.c.l.b16 %v1204
        %v1984 = vunpack.c.h.b16 %v1204
        %v1985 = vunpack.c.l.b16 %v1205
        %v1986 = vunpack.c.h.b16 %v1205
        %v1987 = vunpack.c.l.b16 %v1206
        %v1988 = vunpack.c.h.b16 %v1206
        %v1989 = vunpack.c.l.b16 %v1207
        %v1990 = vunpack.c.h.b16 %v1207
        %v1991 = vunpack.c.l.b16 %v1208
        %v1992 = vunpack.c.h.b16 %v1208
        %v1993 = vunpack.c.l.b16 %v1209
        %v1994 = vunpack.c.h.b16 %v1209
        %v1995 = vunpack.c.l.b16 %v1210
        %v1996 = vunpack.c.h.b16 %v1210
        %v1997 = vunpack.c.l.b16 %v1211
        %v1998 = vunpack.c.h.b16 %v1211
        %v1999 = vunpack.c.l.b16 %v1212
        %v2000 = vunpack.c.h.b16 %v1212
        %v2001 = vunpack.c.l.b16 %v1213
        %v2002 = vunpack.c.h.b16 %v1213
        %v2003 = vunpack.c.l.b16 %v1214
        %v2004 = vunpack.c.h.b16 %v1214
        %v2005 = vunpack.c.l.b16 %v1215
        %v2006 = vunpack.c.h.b16 %v1215
        %v2007 = vunpack.c.l.b16 %v1216
        %v2008 = vunpack.c.h.b16 %v1216
        %v2009 = vunpack.c.l.b16 %v1217
        %v2010 = vunpack.c.h.b16 %v1217
        %v2011 = vunpack.c.l.b16 %v1218
        %v2012 = vunpack.c.h.b16 %v1218
        %v2013 = vunpack.c.l.b16 %v1219
        %v2014 = vunpack.c.h.b16 %v1219
        %v2015 = vunpack.c.l.b16 %v1220
        %v2016 = vunpack.c.h.b16 %v1220
        %v2017 = vunpack.c.l.b16 %v1221
        %v2018 = vunpack.c.h.b16 %v1221
        %v2019 = vunpack.c.l.b16 %v1222
        %v2020 = vunpack.c.h.b16 %v1222
        %v2021 = vunpack.c.l.b16 %v1223
        %v2022 = vunpack.c.h.b16 %v1223
        %v2023 = vunpack.c.l.b16 %v1224
        %v2024 = vunpack.c.h.b16 %v1224
        %v2025 = vunpack.c.l.b16 %v1225
        %v2026 = vunpack.c.h.b16 %v1225
        %v2027 = vunpack.c.l.b16 %v1226
        %v2028 = vunpack.c.h.b16 %v1226
        %v2029 = vunpack.c.l.b16 %v1227
        %v2030 = vunpack.c.h.b16 %v1227
        %v2031 = vunpack.c.l.b16 %v1228
        %v2032 = vunpack.c.h.b16 %v1228
        %v2033 = vunpack.c.l.b16 %v1229
        %v2034 = vunpack.c.h.b16 %v1229
        %v2035 = vunpack.c.l.b16 %v1230
        %v2036 = vunpack.c.h.b16 %v1230
        %v2037 = vunpack.c.l.b16 %v1231
        %v2038 = vunpack.c.h.b16 %v1231
        %v2039 = vunpack.c.l.b16 %v1232
        %v2040 = vunpack.c.h.b16 %v1232
        %v2041 = vunpack.c.l.b16 %v1233
        %v2042 = vunpack.c.h.b16 %v1233
        %v2043 = vunpack.c.l.b16 %v1234
        %v2044 = vunpack.c.h.b16 %v1234
        %v2045 = vpack.c.b16 %v1541, %v1533
        %v2046 = vpack.c.b16 %v1542, %v1534
        %v2047 = vpack.c.b16 %v1543, %v1535
        %v2048 = vpack.c.b16 %v1544, %v1536
        %v2049 = vpack.c.b16 %v1545, %v1537
        %v2050 = vpack.c.b16 %v1546, %v1538
        %v2051 = vpack.c.b16 %v1547, %v1539
        %v2052 = vpack.c.b16 %v1548, %v1540
        %v2053 = vpack.c.b16 %v1557, %v1549
        %v2054 = vpack.c.b16 %v1558, %v1550
        %v2055 = vpack.c.b16 %v1559, %v1551
        %v2056 = vpack.c.b16 %v1560, %v1552
        %v2057 = vpack.c.b16 %v1561, %v1553
        %v2058 = vpack.c.b16 %v1562, %v1554
        %v2059 = vpack.c.b16 %v1563, %v1555
        %v2060 = vpack.c.b16 %v1564, %v1556
        %v2061 = vpack.c.b16 %v1573, %v1565
        %v2062 = vpack.c.b16 %v1574, %v1566
        %v2063 = vpack.c.b16 %v1575, %v1567
        %v2064 = vpack.c.b16 %v1576, %v1568
        %v2065 = vpack.c.b16 %v1577, %v1569
        %v2066 = vpack.c.b16 %v1578, %v1570
        %v2067 = vpack.c.b16 %v1579, %v1571
        %v2068 = vpack.c.b16 %v1580, %v1572
        %v2069 = vpack.c.b16 %v1589, %v1581
        %v2070 = vpack.c.b16 %v1590, %v1582
        %v2071 = vpack.c.b16 %v1591, %v1583
        %v2072 = vpack.c.b16 %v1592, %v1584
        %v2073 = vpack.c.b16 %v1593, %v1585
        %v2074 = vpack.c.b16 %v1594, %v1586
        %v2075 = vpack.c.b16 %v1595, %v1587
        %v2076 = vpack.c.b16 %v1596, %v1588
        %v2077 = vpack.c.b16 %v1605, %v1597
        %v2078 = vpack.c.b16 %v1606, %v1598
        %v2079 = vpack.c.b16 %v1607, %v1599
        %v2080 = vpack.c.b16 %v1608, %v1600
        %v2081 = vpack.c.b16 %v1609, %v1601
        %v2082 = vpack.c.b16 %v1610, %v1602
        %v2083 = vpack.c.b16 %v1611, %v1603
        %v2084 = vpack.c.b16 %v1612, %v1604
        %v2085 = vpack.c.b16 %v1621, %v1613
        %v2086 = vpack.c.b16 %v1622, %v1614
        %v2087 = vpack.c.b16 %v1623, %v1615
        %v2088 = vpack.c.b16 %v1624, %v1616
        %v2089 = vpack.c.b16 %v1625, %v1617
        %v2090 = vpack.c.b16 %v1626, %v1618
        %v2091 = vpack.c.b16 %v1627, %v1619
        %v2092 = vpack.c.b16 %v1628, %v1620
        %v2093 = vpack.c.b16 %v1637, %v1629
        %v2094 = vpack.c.b16 %v1638, %v1630
        %v2095 = vpack.c.b16 %v1639, %v1631
        %v2096 = vpack.c.b16 %v1640, %v1632
        %v2097 = vpack.c.b16 %v1641, %v1633
        %v2098 = vpack.c.b16 %v1642, %v1634
        %v2099 = vpack.c.b16 %v1643, %v1635
        %v2100 = vpack.c.b16 %v1644, %v1636
        %v2101 = vpack.c.b16 %v1653, %v1645
        %v2102 = vpack.c.b16 %v1654, %v1646
        %v2103 = vpack.c.b16 %v1655, %v1647
        %v2104 = vpack.c.b16 %v1656, %v1648
        %v2105 = vpack.c.b16 %v1657, %v1649
        %v2106 = vpack.c.b16 %v1658, %v1650
        %v2107 = vpack.c.b16 %v1659, %v1651
        %v2108 = vpack.c.b16 %v1660, %v1652
        %v2109 = vpack.c.b16 %v1669, %v1661
        %v2110 = vpack.c.b16 %v1670, %v1662
        %v2111 = vpack.c.b16 %v1671, %v1663
        %v2112 = vpack.c.b16 %v1672, %v1664
        %v2113 = vpack.c.b16 %v1673, %v1665
        %v2114 = vpack.c.b16 %v1674, %v1666
        %v2115 = vpack.c.b16 %v1675, %v1667
        %v2116 = vpack.c.b16 %v1676, %v1668
        %v2117 = vpack.c.b16 %v1685, %v1677
        %v2118 = vpack.c.b16 %v1686, %v1678
        %v2119 = vpack.c.b16 %v1687, %v1679
        %v2120 = vpack.c.b16 %v1688, %v1680
        %v2121 = vpack.c.b16 %v1689, %v1681
        %v2122 = vpack.c.b16 %v1690, %v1682
        %v2123 = vpack.c.b16 %v1691, %v1683
        %v2124 = vpack.c.b16 %v1692, %v1684
        %v2125 = vpack.c.b16 %v1701, %v1693
        %v2126 = vpack.c.b16 %v1702, %v1694
        %v2127 = vpack.c.b16 %v1703, %v1695
        %v2128 = vpack.c.b16 %v1704, %v1696
        %v2129 = vpack.c.b16 %v1705, %v1697
        %v2130 = vpack.c.b16 %v1706, %v1698
        %v2131 = vpack.c.b16 %v1707, %v1699
        %v2132 = vpack.c.b16 %v1708, %v1700
        %v2133 = vpack.c.b16 %v1717, %v1709
        %v2134 = vpack.c.b16 %v1718, %v1710
        %v2135 = vpack.c.b16 %v1719, %v1711
        %v2136 = vpack.c.b16 %v1720, %v1712
        %v2137 = vpack.c.b16 %v1721, %v1713
        %v2138 = vpack.c.b16 %v1722, %v1714
        %v2139 = vpack.c.b16 %v1723, %v1715
        %v2140 = vpack.c.b16 %v1724, %v1716
        %v2141 = vpack.c.b16 %v1733, %v1725
        %v2142 = vpack.c.b16 %v1734, %v1726
        %v2143 = vpack.c.b16 %v1735, %v1727
        %v2144 = vpack.c.b16 %v1736, %v1728
        %v2145 = vpack.c.b16 %v1737, %v1729
        %v2146 = vpack.c.b16 %v1738, %v1730
        %v2147 = vpack.c.b16 %v1739, %v1731
        %v2148 = vpack.c.b16 %v1740, %v1732
        %v2149 = vpack.c.b16 %v1749, %v1741
        %v2150 = vpack.c.b16 %v1750, %v1742
        %v2151 = vpack.c.b16 %v1751, %v1743
        %v2152 = vpack.c.b16 %v1752, %v1744
        %v2153 = vpack.c.b16 %v1753, %v1745
        %v2154 = vpack.c.b16 %v1754, %v1746
        %v2155 = vpack.c.b16 %v1755, %v1747
        %v2156 = vpack.c.b16 %v1756, %v1748
        %v2157 = vpack.c.b16 %v1765, %v1757
        %v2158 = vpack.c.b16 %v1766, %v1758
        %v2159 = vpack.c.b16 %v1767, %v1759
        %v2160 = vpack.c.b16 %v1768, %v1760
        %v2161 = vpack.c.b16 %v1769, %v1761
        %v2162 = vpack.c.b16 %v1770, %v1762
        %v2163 = vpack.c.b16 %v1771, %v1763
        %v2164 = vpack.c.b16 %v1772, %v1764
        %v2165 = vpack.c.b16 %v1781, %v1773
        %v2166 = vpack.c.b16 %v1782, %v1774
        %v2167 = vpack.c.b16 %v1783, %v1775
        %v2168 = vpack.c.b16 %v1784, %v1776
        %v2169 = vpack.c.b16 %v1785, %v1777
        %v2170 = vpack.c.b16 %v1786, %v1778
        %v2171 = vpack.c.b16 %v1787, %v1779
        %v2172 = vpack.c.b16 %v1788, %v1780
        %v2173 = vpack.c.b16 %v1797, %v1789
        %v2174 = vpack.c.b16 %v1798, %v1790
        %v2175 = vpack.c.b16 %v1799, %v1791
        %v2176 = vpack.c.b16 %v1800, %v1792
        %v2177 = vpack.c.b16 %v1801, %v1793
        %v2178 = vpack.c.b16 %v1802, %v1794
        %v2179 = vpack.c.b16 %v1803, %v1795
        %v2180 = vpack.c.b16 %v1804, %v1796
        %v2181 = vpack.c.b16 %v1813, %v1805
        %v2182 = vpack.c.b16 %v1814, %v1806
        %v2183 = vpack.c.b16 %v1815, %v1807
        %v2184 = vpack.c.b16 %v1816, %v1808
        %v2185 = vpack.c.b16 %v1817, %v1809
        %v2186 = vpack.c.b16 %v1818, %v1810
        %v2187 = vpack.c.b16 %v1819, %v1811
        %v2188 = vpack.c.b16 %v1820, %v1812
        %v2189 = vpack.c.b16 %v1829, %v1821
        %v2190 = vpack.c.b16 %v1830, %v1822
        %v2191 = vpack.c.b16 %v1831, %v1823
        %v2192 = vpack.c.b16 %v1832, %v1824
        %v2193 = vpack.c.b16 %v1833, %v1825
        %v2194 = vpack.c.b16 %v1834, %v1826
        %v2195 = vpack.c.b16 %v1835, %v1827
        %v2196 = vpack.c.b16 %v1836, %v1828
        %v2197 = vpack.c.b16 %v1845, %v1837
        %v2198 = vpack.c.b16 %v1846, %v1838
        %v2199 = vpack.c.b16 %v1847, %v1839
        %v2200 = vpack.c.b16 %v1848, %v1840
        %v2201 = vpack.c.b16 %v1849, %v1841
        %v2202 = vpack.c.b16 %v1850, %v1842
        %v2203 = vpack.c.b16 %v1851, %v1843
        %v2204 = vpack.c.b16 %v1852, %v1844
        %v2205 = vpack.c.b16 %v1861, %v1853
        %v2206 = vpack.c.b16 %v1862, %v1854
        %v2207 = vpack.c.b16 %v1863, %v1855
        %v2208 = vpack.c.b16 %v1864, %v1856
        %v2209 = vpack.c.b16 %v1865, %v1857
        %v2210 = vpack.c.b16 %v1866, %v1858
        %v2211 = vpack.c.b16 %v1867, %v1859
        %v2212 = vpack.c.b16 %v1868, %v1860
        %v2213 = vpack.c.b16 %v1877, %v1869
        %v2214 = vpack.c.b16 %v1878, %v1870
        %v2215 = vpack.c.b16 %v1879, %v1871
        %v2216 = vpack.c.b16 %v1880, %v1872
        %v2217 = vpack.c.b16 %v1881, %v1873
        %v2218 = vpack.c.b16 %v1882, %v1874
        %v2219 = vpack.c.b16 %v1883, %v1875
        %v2220 = vpack.c.b16 %v1884, %v1876
        %v2221 = vpack.c.b16 %v1893, %v1885
        %v2222 = vpack.c.b16 %v1894, %v1886
        %v2223 = vpack.c.b16 %v1895, %v1887
        %v2224 = vpack.c.b16 %v1896, %v1888
        %v2225 = vpack.c.b16 %v1897, %v1889
        %v2226 = vpack.c.b16 %v1898, %v1890
        %v2227 = vpack.c.b16 %v1899, %v1891
        %v2228 = vpack.c.b16 %v1900, %v1892
        %v2229 = vpack.c.b16 %v1909, %v1901
        %v2230 = vpack.c.b16 %v1910, %v1902
        %v2231 = vpack.c.b16 %v1911, %v1903
        %v2232 = vpack.c.b16 %v1912, %v1904
        %v2233 = vpack.c.b16 %v1913, %v1905
        %v2234 = vpack.c.b16 %v1914, %v1906
        %v2235 = vpack.c.b16 %v1915, %v1907
        %v2236 = vpack.c.b16 %v1916, %v1908
        %v2237 = vpack.c.b16 %v1925, %v1917
        %v2238 = vpack.c.b16 %v1926, %v1918
        %v2239 = vpack.c.b16 %v1927, %v1919
        %v2240 = vpack.c.b16 %v1928, %v1920
        %v2241 = vpack.c.b16 %v1929, %v1921
        %v2242 = vpack.c.b16 %v1930, %v1922
        %v2243 = vpack.c.b16 %v1931, %v1923
        %v2244 = vpack.c.b16 %v1932, %v1924
        %v2245 = vpack.c.b16 %v1941, %v1933
        %v2246 = vpack.c.b16 %v1942, %v1934
        %v2247 = vpack.c.b16 %v1943, %v1935
        %v2248 = vpack.c.b16 %v1944, %v1936
        %v2249 = vpack.c.b16 %v1945, %v1937
        %v2250 = vpack.c.b16 %v1946, %v1938
        %v2251 = vpack.c.b16 %v1947, %v1939
        %v2252 = vpack.c.b16 %v1948, %v1940
        %v2253 = vpack.c.b16 %v1957, %v1949
        %v2254 = vpack.c.b16 %v1958, %v1950
        %v2255 = vpack.c.b16 %v1959, %v1951
        %v2256 = vpack.c.b16 %v1960, %v1952
        %v2257 = vpack.c.b16 %v1961, %v1953
        %v2258 = vpack.c.b16 %v1962, %v1954
        %v2259 = vpack.c.b16 %v1963, %v1955
        %v2260 = vpack.c.b16 %v1964, %v1956
        %v2261 = vpack.c.b16 %v1973, %v1965
        %v2262 = vpack.c.b16 %v1974, %v1966
        %v2263 = vpack.c.b16 %v1975, %v1967
        %v2264 = vpack.c.b16 %v1976, %v1968
        %v2265 = vpack.c.b16 %v1977, %v1969
        %v2266 = vpack.c.b16 %v1978, %v1970
        %v2267 = vpack.c.b16 %v1979, %v1971
        %v2268 = vpack.c.b16 %v1980, %v1972
        %v2269 = vpack.c.b16 %v1989, %v1981
        %v2270 = vpack.c.b16 %v1990, %v1982
        %v2271 = vpack.c.b16 %v1991, %v1983
        %v2272 = vpack.c.b16 %v1992, %v1984
        %v2273 = vpack.c.b16 %v1993, %v1985
        %v2274 = vpack.c.b16 %v1994, %v1986
        %v2275 = vpack.c.b16 %v1995, %v1987
        %v2276 = vpack.c.b16 %v1996, %v1988
        %v2277 = vpack.c.b16 %v2005, %v1997
        %v2278 = vpack.c.b16 %v2006, %v1998
        %v2279 = vpack.c.b16 %v2007, %v1999
        %v2280 = vpack.c.b16 %v2008, %v2000
        %v2281 = vpack.c.b16 %v2009, %v2001
        %v2282 = vpack.c.b16 %v2010, %v2002
        %v2283 = vpack.c.b16 %v2011, %v2003
        %v2284 = vpack.c.b16 %v2012, %v2004
        %v2285 = vpack.c.b16 %v2021, %v2013
        %v2286 = vpack.c.b16 %v2022, %v2014
        %v2287 = vpack.c.b16 %v2023, %v2015
        %v2288 = vpack.c.b16 %v2024, %v2016
        %v2289 = vpack.c.b16 %v2025, %v2017
        %v2290 = vpack.c.b16 %v2026, %v2018
        %v2291 = vpack.c.b16 %v2027, %v2019
        %v2292 = vpack.c.b16 %v2028, %v2020
        %v2293 = vpack.c.b16 %v2037, %v2029
        %v2294 = vpack.c.b16 %v2038, %v2030
        %v2295 = vpack.c.b16 %v2039, %v2031
        %v2296 = vpack.c.b16 %v2040, %v2032
        %v2297 = vpack.c.b16 %v2041, %v2033
        %v2298 = vpack.c.b16 %v2042, %v2034
        %v2299 = vpack.c.b16 %v2043, %v2035
        %v2300 = vpack.c.b16 %v2044, %v2036
        %2557 = vmatprep.subr.bf16.mxu0 %v2046
        %2558 = vmatpush1.bf16.msra.mxu0 %v2045
        %2559 = vmatprep.subr.bf16.mxu0 %v2054
        %2560 = vmatpush1.bf16.msra.mxu0 %v2053
        %2561 = vmatprep.subr.bf16.mxu0 %v2062
        %2562 = vmatpush1.bf16.msra.mxu0 %v2061
        %2563 = vmatprep.subr.bf16.mxu0 %v2070
        %2564 = vmatpush1.bf16.msra.mxu0 %v2069
        %2565 = vmatprep.subr.bf16.mxu0 %v2078
        %2566 = vmatpush1.bf16.msra.mxu0 %v2077
        %2567 = vmatprep.subr.bf16.mxu0 %v2086
        %2568 = vmatpush1.bf16.msra.mxu0 %v2085
        %2569 = vmatprep.subr.bf16.mxu0 %v2094
        %2570 = vmatpush1.bf16.msra.mxu0 %v2093
        %2571 = vmatprep.subr.bf16.mxu0 %v2102
        %2572 = vmatpush1.bf16.msra.mxu0 %v2101
        %2573 = vmatprep.subr.bf16.mxu0 %v2110
        %2574 = vmatpush1.bf16.msra.mxu0 %v2109
        %2575 = vmatprep.subr.bf16.mxu0 %v2118
        %2576 = vmatpush1.bf16.msra.mxu0 %v2117
        %2577 = vmatprep.subr.bf16.mxu0 %v2126
        %2578 = vmatpush1.bf16.msra.mxu0 %v2125
        %2579 = vmatprep.subr.bf16.mxu0 %v2134
        %2580 = vmatpush1.bf16.msra.mxu0 %v2133
        %2581 = vmatprep.subr.bf16.mxu0 %v2142
        %2582 = vmatpush1.bf16.msra.mxu0 %v2141
        %2583 = vmatprep.subr.bf16.mxu0 %v2150
        %2584 = vmatpush1.bf16.msra.mxu0 %v2149
        %2585 = vmatprep.subr.bf16.mxu0 %v2158
        %2586 = vmatpush1.bf16.msra.mxu0 %v2157
        %2587 = vmatprep.subr.bf16.mxu0 %v2166
        %2588 = vmatpush1.bf16.msra.mxu0 %v2165
        %2589 = vmatprep.mubr.bf16.mxu0 %v976
        %2590 = vmatmul.mubr.bf16.gmra.mrb[0].mxu0 %v975
        %v2591 = vpop.f32.mrb[0].mxu0
        %v2592 = vadd.f32 %v1240, %v2591
        %v2593 = vpop.f32.mrb[0].mxu0
        %v2594 = vadd.f32 %v1244, %v2593
        %v2595 = vpop.f32.mrb[0].mxu0
        %v2596 = vpop.f32.mrb[0].mxu0
        %2597 = vdwg.mxu0
        %2598 = vmatprep.subr.bf16.mxu0 %v2174
        %2599 = vmatpush1.bf16.msra.mxu0 %v2173
        %2600 = vmatprep.subr.bf16.mxu0 %v2182
        %2601 = vmatpush1.bf16.msra.mxu0 %v2181
        %2602 = vmatprep.subr.bf16.mxu0 %v2190
        %2603 = vmatpush1.bf16.msra.mxu0 %v2189
        %2604 = vmatprep.subr.bf16.mxu0 %v2198
        %2605 = vmatpush1.bf16.msra.mxu0 %v2197
        %2606 = vmatprep.subr.bf16.mxu0 %v2206
        %2607 = vmatpush1.bf16.msra.mxu0 %v2205
        %2608 = vmatprep.subr.bf16.mxu0 %v2214
        %2609 = vmatpush1.bf16.msra.mxu0 %v2213
        %2610 = vmatprep.subr.bf16.mxu0 %v2222
        %2611 = vmatpush1.bf16.msra.mxu0 %v2221
        %2612 = vmatprep.subr.bf16.mxu0 %v2230
        %2613 = vmatpush1.bf16.msra.mxu0 %v2229
        %2614 = vmatprep.subr.bf16.mxu0 %v2238
        %2615 = vmatpush1.bf16.msra.mxu0 %v2237
        %2616 = vmatprep.subr.bf16.mxu0 %v2246
        %2617 = vmatpush1.bf16.msra.mxu0 %v2245
        %2618 = vmatprep.subr.bf16.mxu0 %v2254
        %2619 = vmatpush1.bf16.msra.mxu0 %v2253
        %2620 = vmatprep.subr.bf16.mxu0 %v2262
        %2621 = vmatpush1.bf16.msra.mxu0 %v2261
        %2622 = vmatprep.subr.bf16.mxu0 %v2270
        %2623 = vmatpush1.bf16.msra.mxu0 %v2269
        %2624 = vmatprep.subr.bf16.mxu0 %v2278
        %2625 = vmatpush1.bf16.msra.mxu0 %v2277
        %2626 = vmatprep.subr.bf16.mxu0 %v2286
        %2627 = vmatpush1.bf16.msra.mxu0 %v2285
        %2628 = vmatprep.subr.bf16.mxu0 %v2294
        %2629 = vmatpush1.bf16.msra.mxu0 %v2293
        %2630 = vmatprep.mubr.bf16.mxu0 %v978
        %2631 = vmatmul.mubr.bf16.gmra.mrb[0].mxu0 %v977
        %v2632 = vpop.f32.mrb[0].mxu0
        %v2633 = vadd.f32 %v2592, %v2632
        %v2634 = vpop.f32.mrb[0].mxu0
        %v2635 = vadd.f32 %v2594, %v2634
        %v2636 = vpop.f32.mrb[0].mxu0
        %v2637 = vpop.f32.mrb[0].mxu0
        %2638 = vdwg.mxu0
        %2639 = vmatprep.subr.bf16.mxu0 %v2048
        %2640 = vmatpush1.bf16.msra.mxu0 %v2047
        %2641 = vmatprep.subr.bf16.mxu0 %v2056
        %2642 = vmatpush1.bf16.msra.mxu0 %v2055
        %2643 = vmatprep.subr.bf16.mxu0 %v2064
        %2644 = vmatpush1.bf16.msra.mxu0 %v2063
        %2645 = vmatprep.subr.bf16.mxu0 %v2072
        %2646 = vmatpush1.bf16.msra.mxu0 %v2071
        %2647 = vmatprep.subr.bf16.mxu0 %v2080
        %2648 = vmatpush1.bf16.msra.mxu0 %v2079
        %2649 = vmatprep.subr.bf16.mxu0 %v2088
        %2650 = vmatpush1.bf16.msra.mxu0 %v2087
        %2651 = vmatprep.subr.bf16.mxu0 %v2096
        %2652 = vmatpush1.bf16.msra.mxu0 %v2095
        %2653 = vmatprep.subr.bf16.mxu0 %v2104
        %2654 = vmatpush1.bf16.msra.mxu0 %v2103
        %2655 = vmatprep.subr.bf16.mxu0 %v2112
        %2656 = vmatpush1.bf16.msra.mxu0 %v2111
        %2657 = vmatprep.subr.bf16.mxu0 %v2120
        %2658 = vmatpush1.bf16.msra.mxu0 %v2119
        %2659 = vmatprep.subr.bf16.mxu0 %v2128
        %2660 = vmatpush1.bf16.msra.mxu0 %v2127
        %2661 = vmatprep.subr.bf16.mxu0 %v2136
        %2662 = vmatpush1.bf16.msra.mxu0 %v2135
        %2663 = vmatprep.subr.bf16.mxu0 %v2144
        %2664 = vmatpush1.bf16.msra.mxu0 %v2143
        %2665 = vmatprep.subr.bf16.mxu0 %v2152
        %2666 = vmatpush1.bf16.msra.mxu0 %v2151
        %2667 = vmatprep.subr.bf16.mxu0 %v2160
        %2668 = vmatpush1.bf16.msra.mxu0 %v2159
        %2669 = vmatprep.subr.bf16.mxu0 %v2168
        %2670 = vmatpush1.bf16.msra.mxu0 %v2167
        %2671 = vmatprep.mubr.bf16.mxu0 %v976
        %2672 = vmatmul.mubr.bf16.gmra.mrb[0].mxu0 %v975
        %v2673 = vpop.f32.mrb[0].mxu0
        %v2674 = vadd.f32 %v1248, %v2673
        %v2675 = vpop.f32.mrb[0].mxu0
        %v2676 = vadd.f32 %v1252, %v2675
        %v2677 = vpop.f32.mrb[0].mxu0
        %v2678 = vpop.f32.mrb[0].mxu0
        %2679 = vdwg.mxu0
        %2680 = vmatprep.subr.bf16.mxu0 %v2176
        %2681 = vmatpush1.bf16.msra.mxu0 %v2175
        %2682 = vmatprep.subr.bf16.mxu0 %v2184
        %2683 = vmatpush1.bf16.msra.mxu0 %v2183
        %2684 = vmatprep.subr.bf16.mxu0 %v2192
        %2685 = vmatpush1.bf16.msra.mxu0 %v2191
        %2686 = vmatprep.subr.bf16.mxu0 %v2200
        %2687 = vmatpush1.bf16.msra.mxu0 %v2199
        %2688 = vmatprep.subr.bf16.mxu0 %v2208
        %2689 = vmatpush1.bf16.msra.mxu0 %v2207
        %2690 = vmatprep.subr.bf16.mxu0 %v2216
        %2691 = vmatpush1.bf16.msra.mxu0 %v2215
        %2692 = vmatprep.subr.bf16.mxu0 %v2224
        %2693 = vmatpush1.bf16.msra.mxu0 %v2223
        %2694 = vmatprep.subr.bf16.mxu0 %v2232
        %2695 = vmatpush1.bf16.msra.mxu0 %v2231
        %2696 = vmatprep.subr.bf16.mxu0 %v2240
        %2697 = vmatpush1.bf16.msra.mxu0 %v2239
        %2698 = vmatprep.subr.bf16.mxu0 %v2248
        %2699 = vmatpush1.bf16.msra.mxu0 %v2247
        %2700 = vmatprep.subr.bf16.mxu0 %v2256
        %2701 = vmatpush1.bf16.msra.mxu0 %v2255
        %2702 = vmatprep.subr.bf16.mxu0 %v2264
        %2703 = vmatpush1.bf16.msra.mxu0 %v2263
        %2704 = vmatprep.subr.bf16.mxu0 %v2272
        %2705 = vmatpush1.bf16.msra.mxu0 %v2271
        %2706 = vmatprep.subr.bf16.mxu0 %v2280
        %2707 = vmatpush1.bf16.msra.mxu0 %v2279
        %2708 = vmatprep.subr.bf16.mxu0 %v2288
        %2709 = vmatpush1.bf16.msra.mxu0 %v2287
        %2710 = vmatprep.subr.bf16.mxu0 %v2296
        %2711 = vmatpush1.bf16.msra.mxu0 %v2295
        %2712 = vmatprep.mubr.bf16.mxu0 %v978
        %2713 = vmatmul.mubr.bf16.gmra.mrb[0].mxu0 %v977
        %v2714 = vpop.f32.mrb[0].mxu0
        %v2715 = vadd.f32 %v2674, %v2714
        %v2716 = vpop.f32.mrb[0].mxu0
        %v2717 = vadd.f32 %v2676, %v2716
        %v2718 = vpop.f32.mrb[0].mxu0
        %v2719 = vpop.f32.mrb[0].mxu0
        %2720 = vdwg.mxu0
        %2721 = vmatprep.subr.bf16.mxu0 %v2050
        %2722 = vmatpush1.bf16.msra.mxu0 %v2049
        %2723 = vmatprep.subr.bf16.mxu0 %v2058
        %2724 = vmatpush1.bf16.msra.mxu0 %v2057
        %2725 = vmatprep.subr.bf16.mxu0 %v2066
        %2726 = vmatpush1.bf16.msra.mxu0 %v2065
        %2727 = vmatprep.subr.bf16.mxu0 %v2074
        %2728 = vmatpush1.bf16.msra.mxu0 %v2073
        %2729 = vmatprep.subr.bf16.mxu0 %v2082
        %2730 = vmatpush1.bf16.msra.mxu0 %v2081
        %2731 = vmatprep.subr.bf16.mxu0 %v2090
        %2732 = vmatpush1.bf16.msra.mxu0 %v2089
        %2733 = vmatprep.subr.bf16.mxu0 %v2098
        %2734 = vmatpush1.bf16.msra.mxu0 %v2097
        %2735 = vmatprep.subr.bf16.mxu0 %v2106
        %2736 = vmatpush1.bf16.msra.mxu0 %v2105
        %2737 = vmatprep.subr.bf16.mxu0 %v2114
        %2738 = vmatpush1.bf16.msra.mxu0 %v2113
        %2739 = vmatprep.subr.bf16.mxu0 %v2122
        %2740 = vmatpush1.bf16.msra.mxu0 %v2121
        %2741 = vmatprep.subr.bf16.mxu0 %v2130
        %2742 = vmatpush1.bf16.msra.mxu0 %v2129
        %2743 = vmatprep.subr.bf16.mxu0 %v2138
        %2744 = vmatpush1.bf16.msra.mxu0 %v2137
        %2745 = vmatprep.subr.bf16.mxu0 %v2146
        %2746 = vmatpush1.bf16.msra.mxu0 %v2145
        %2747 = vmatprep.subr.bf16.mxu0 %v2154
        %2748 = vmatpush1.bf16.msra.mxu0 %v2153
        %2749 = vmatprep.subr.bf16.mxu0 %v2162
        %2750 = vmatpush1.bf16.msra.mxu0 %v2161
        %2751 = vmatprep.subr.bf16.mxu0 %v2170
        %2752 = vmatpush1.bf16.msra.mxu0 %v2169
        %2753 = vmatprep.mubr.bf16.mxu0 %v976
        %2754 = vmatmul.mubr.bf16.gmra.mrb[0].mxu0 %v975
        %v2755 = vpop.f32.mrb[0].mxu0
        %v2756 = vadd.f32 %v1256, %v2755
        %v2757 = vpop.f32.mrb[0].mxu0
        %v2758 = vadd.f32 %v1260, %v2757
        %v2759 = vpop.f32.mrb[0].mxu0
        %v2760 = vpop.f32.mrb[0].mxu0
        %2761 = vdwg.mxu0
        %2762 = vmatprep.subr.bf16.mxu0 %v2178
        %2763 = vmatpush1.bf16.msra.mxu0 %v2177
        %2764 = vmatprep.subr.bf16.mxu0 %v2186
        %2765 = vmatpush1.bf16.msra.mxu0 %v2185
        %2766 = vmatprep.subr.bf16.mxu0 %v2194
        %2767 = vmatpush1.bf16.msra.mxu0 %v2193
        %2768 = vmatprep.subr.bf16.mxu0 %v2202
        %2769 = vmatpush1.bf16.msra.mxu0 %v2201
        %2770 = vmatprep.subr.bf16.mxu0 %v2210
        %2771 = vmatpush1.bf16.msra.mxu0 %v2209
        %2772 = vmatprep.subr.bf16.mxu0 %v2218
        %2773 = vmatpush1.bf16.msra.mxu0 %v2217
        %2774 = vmatprep.subr.bf16.mxu0 %v2226
        %2775 = vmatpush1.bf16.msra.mxu0 %v2225
        %2776 = vmatprep.subr.bf16.mxu0 %v2234
        %2777 = vmatpush1.bf16.msra.mxu0 %v2233
        %2778 = vmatprep.subr.bf16.mxu0 %v2242
        %2779 = vmatpush1.bf16.msra.mxu0 %v2241
        %2780 = vmatprep.subr.bf16.mxu0 %v2250
        %2781 = vmatpush1.bf16.msra.mxu0 %v2249
        %2782 = vmatprep.subr.bf16.mxu0 %v2258
        %2783 = vmatpush1.bf16.msra.mxu0 %v2257
        %2784 = vmatprep.subr.bf16.mxu0 %v2266
        %2785 = vmatpush1.bf16.msra.mxu0 %v2265
        %2786 = vmatprep.subr.bf16.mxu0 %v2274
        %2787 = vmatpush1.bf16.msra.mxu0 %v2273
        %2788 = vmatprep.subr.bf16.mxu0 %v2282
        %2789 = vmatpush1.bf16.msra.mxu0 %v2281
        %2790 = vmatprep.subr.bf16.mxu0 %v2290
        %2791 = vmatpush1.bf16.msra.mxu0 %v2289
        %2792 = vmatprep.subr.bf16.mxu0 %v2298
        %2793 = vmatpush1.bf16.msra.mxu0 %v2297
        %2794 = vmatprep.mubr.bf16.mxu0 %v978
        %2795 = vmatmul.mubr.bf16.gmra.mrb[0].mxu0 %v977
        %v2796 = vpop.f32.mrb[0].mxu0
        %v2797 = vadd.f32 %v2756, %v2796
        %v2798 = vpop.f32.mrb[0].mxu0
        %v2799 = vadd.f32 %v2758, %v2798
        %v2800 = vpop.f32.mrb[0].mxu0
        %v2801 = vpop.f32.mrb[0].mxu0
        %2802 = vdwg.mxu0
        %2803 = vmatprep.subr.bf16.mxu0 %v2052
        %2804 = vmatpush1.bf16.msra.mxu0 %v2051
        %2805 = vmatprep.subr.bf16.mxu0 %v2060
        %2806 = vmatpush1.bf16.msra.mxu0 %v2059
        %2807 = vmatprep.subr.bf16.mxu0 %v2068
        %2808 = vmatpush1.bf16.msra.mxu0 %v2067
        %2809 = vmatprep.subr.bf16.mxu0 %v2076
        %2810 = vmatpush1.bf16.msra.mxu0 %v2075
        %2811 = vmatprep.subr.bf16.mxu0 %v2084
        %2812 = vmatpush1.bf16.msra.mxu0 %v2083
        %2813 = vmatprep.subr.bf16.mxu0 %v2092
        %2814 = vmatpush1.bf16.msra.mxu0 %v2091
        %2815 = vmatprep.subr.bf16.mxu0 %v2100
        %2816 = vmatpush1.bf16.msra.mxu0 %v2099
        %2817 = vmatprep.subr.bf16.mxu0 %v2108
        %2818 = vmatpush1.bf16.msra.mxu0 %v2107
        %2819 = vmatprep.subr.bf16.mxu0 %v2116
        %2820 = vmatpush1.bf16.msra.mxu0 %v2115
        %2821 = vmatprep.subr.bf16.mxu0 %v2124
        %2822 = vmatpush1.bf16.msra.mxu0 %v2123
        %2823 = vmatprep.subr.bf16.mxu0 %v2132
        %2824 = vmatpush1.bf16.msra.mxu0 %v2131
        %2825 = vmatprep.subr.bf16.mxu0 %v2140
        %2826 = vmatpush1.bf16.msra.mxu0 %v2139
        %2827 = vmatprep.subr.bf16.mxu0 %v2148
        %2828 = vmatpush1.bf16.msra.mxu0 %v2147
        %2829 = vmatprep.subr.bf16.mxu0 %v2156
        %2830 = vmatpush1.bf16.msra.mxu0 %v2155
        %2831 = vmatprep.subr.bf16.mxu0 %v2164
        %2832 = vmatpush1.bf16.msra.mxu0 %v2163
        %2833 = vmatprep.subr.bf16.mxu0 %v2172
        %2834 = vmatpush1.bf16.msra.mxu0 %v2171
        %2835 = vmatprep.mubr.bf16.mxu0 %v976
        %2836 = vmatmul.mubr.bf16.gmra.mrb[0].mxu0 %v975
        %v2837 = vpop.f32.mrb[0].mxu0
        %v2838 = vadd.f32 %v1264, %v2837
        %v2839 = vpop.f32.mrb[0].mxu0
        %v2840 = vadd.f32 %v1268, %v2839
        %v2841 = vpop.f32.mrb[0].mxu0
        %v2842 = vpop.f32.mrb[0].mxu0
        %2843 = vdwg.mxu0
        %2844 = vmatprep.subr.bf16.mxu0 %v2180
        %2845 = vmatpush1.bf16.msra.mxu0 %v2179
        %2846 = vmatprep.subr.bf16.mxu0 %v2188
        %2847 = vmatpush1.bf16.msra.mxu0 %v2187
        %2848 = vmatprep.subr.bf16.mxu0 %v2196
        %2849 = vmatpush1.bf16.msra.mxu0 %v2195
        %2850 = vmatprep.subr.bf16.mxu0 %v2204
        %2851 = vmatpush1.bf16.msra.mxu0 %v2203
        %2852 = vmatprep.subr.bf16.mxu0 %v2212
        %2853 = vmatpush1.bf16.msra.mxu0 %v2211
        %2854 = vmatprep.subr.bf16.mxu0 %v2220
        %2855 = vmatpush1.bf16.msra.mxu0 %v2219
        %2856 = vmatprep.subr.bf16.mxu0 %v2228
        %2857 = vmatpush1.bf16.msra.mxu0 %v2227
        %2858 = vmatprep.subr.bf16.mxu0 %v2236
        %2859 = vmatpush1.bf16.msra.mxu0 %v2235
        %2860 = vmatprep.subr.bf16.mxu0 %v2244
        %2861 = vmatpush1.bf16.msra.mxu0 %v2243
        %2862 = vmatprep.subr.bf16.mxu0 %v2252
        %2863 = vmatpush1.bf16.msra.mxu0 %v2251
        %2864 = vmatprep.subr.bf16.mxu0 %v2260
        %2865 = vmatpush1.bf16.msra.mxu0 %v2259
        %2866 = vmatprep.subr.bf16.mxu0 %v2268
        %2867 = vmatpush1.bf16.msra.mxu0 %v2267
        %2868 = vmatprep.subr.bf16.mxu0 %v2276
        %2869 = vmatpush1.bf16.msra.mxu0 %v2275
        %2870 = vmatprep.subr.bf16.mxu0 %v2284
        %2871 = vmatpush1.bf16.msra.mxu0 %v2283
        %2872 = vmatprep.subr.bf16.mxu0 %v2292
        %2873 = vmatpush1.bf16.msra.mxu0 %v2291
        %2874 = vmatprep.subr.bf16.mxu0 %v2300
        %2875 = vmatpush1.bf16.msra.mxu0 %v2299
        %2876 = vmatprep.mubr.bf16.mxu0 %v978
        %2877 = vmatmul.mubr.bf16.gmra.mrb[0].mxu0 %v977
        %v2878 = vpop.f32.mrb[0].mxu0
        %v2879 = vadd.f32 %v2838, %v2878
        %v2880 = vpop.f32.mrb[0].mxu0
        %v2881 = vadd.f32 %v2840, %v2880
        %v2882 = vpop.f32.mrb[0].mxu0
        %v2883 = vpop.f32.mrb[0].mxu0
        %2884 = vdwg.mxu0
        %v2885 = vmax.f32 %v2633, 0.0
        %v2886 = vmax.f32 %v2635, 0.0
        %v2887 = vmax.f32 %v2715, 0.0
        %v2888 = vmax.f32 %v2717, 0.0
        %v2889 = vmax.f32 %v2797, 0.0
        %v2890 = vmax.f32 %v2799, 0.0
        %v2891 = vmax.f32 %v2879, 0.0
        %v2892 = vmax.f32 %v2881, 0.0
        %v2893 = vpack.c.bf16 %v2885, %v2885
        %v2894 = vpack.c.bf16 %v2886, %v2886
        %v2895 = vpack.c.bf16 %v2887, %v2887
        %v2896 = vpack.c.bf16 %v2888, %v2888
        %v2897 = vpack.c.bf16 %v2889, %v2889
        %v2898 = vpack.c.bf16 %v2890, %v2890
        %v2899 = vpack.c.bf16 %v2891, %v2891
        %v2900 = vpack.c.bf16 %v2892, %v2892
        %v2901 = vld [vmem:[%s7] sm:$0xff]
        %v2902 = vld [vmem:[%s7 + $0x8] sm:$0xff]
        %v2903 = vld [vmem:[%s7 + $0x10] sm:$0xff]
        %v2904 = vld [vmem:[%s7 + $0x18] sm:$0xf]
        %v2905 = vld [vmem:[%s7 + $0x1c] sm:$0xff]
        %v2906 = vld [vmem:[%s7 + $0x24] sm:$0xff]
        %v2907 = vld [vmem:[%s7 + $0x2c] sm:$0xff]
        %v2908 = vld [vmem:[%s7 + $0x34] sm:$0xf]
        %v2909 = vld [vmem:[%s7 + $0x38] sm:$0xff]
        %v2910 = vld [vmem:[%s7 + $0x40] sm:$0xff]
        %v2911 = vld [vmem:[%s7 + $0x48] sm:$0xff]
        %v2912 = vld [vmem:[%s7 + $0x50] sm:$0xf]
        %v2913 = vld [vmem:[%s7 + $0x54] sm:$0xff]
        %v2914 = vld [vmem:[%s7 + $0x5c] sm:$0xff]
        %v2915 = vld [vmem:[%s7 + $0x64] sm:$0xff]
        %v2916 = vld [vmem:[%s7 + $0x6c] sm:$0xf]
        %v2917 = vld [vmem:[%s7 + $0x70] sm:$0xff]
        %v2918 = vld [vmem:[%s7 + $0x78] sm:$0xff]
        %v2919 = vld [vmem:[%s7 + $0x80] sm:$0xff]
        %v2920 = vld [vmem:[%s7 + $0x88] sm:$0xf]
        %v2921 = vld [vmem:[%s7 + $0x8c] sm:$0xff]
        %v2922 = vld [vmem:[%s7 + $0x94] sm:$0xff]
        %v2923 = vld [vmem:[%s7 + $0x9c] sm:$0xff]
        %v2924 = vld [vmem:[%s7 + $0xa4] sm:$0xf]
        %v2925 = vld [vmem:[%s7 + $0xa8] sm:$0xff]
        %v2926 = vld [vmem:[%s7 + $0xb0] sm:$0xff]
        %v2927 = vld [vmem:[%s7 + $0xb8] sm:$0xff]
        %v2928 = vld [vmem:[%s7 + $0xc0] sm:$0xf]
        %v2929 = vld [vmem:[%s7 + $0xc4] sm:$0xff]
        %v2930 = vld [vmem:[%s7 + $0xcc] sm:$0xff]
        %v2931 = vld [vmem:[%s7 + $0xd4] sm:$0xff]
        %v2932 = vld [vmem:[%s7 + $0xdc] sm:$0xf]
        %v2933 = vld [vmem:[%s7 + $0xe0] sm:$0xff]
        %v2934 = vld [vmem:[%s7 + $0xe8] sm:$0xff]
        %v2935 = vld [vmem:[%s7 + $0xf0] sm:$0xff]
        %v2936 = vld [vmem:[%s7 + $0xf8] sm:$0xf]
        %v2937 = vld [vmem:[%s7 + $0xfc] sm:$0xff]
        %v2938 = vld [vmem:[%s7 + $0x104] sm:$0xff]
        %v2939 = vld [vmem:[%s7 + $0x10c] sm:$0xff]
        %v2940 = vld [vmem:[%s7 + $0x114] sm:$0xf]
        %v2941 = vld [vmem:[%s7 + $0x118] sm:$0xff]
        %v2942 = vld [vmem:[%s7 + $0x120] sm:$0xff]
        %v2943 = vld [vmem:[%s7 + $0x128] sm:$0xff]
        %v2944 = vld [vmem:[%s7 + $0x130] sm:$0xf]
        %v2945 = vld [vmem:[%s7 + $0x134] sm:$0xff]
        %v2946 = vld [vmem:[%s7 + $0x13c] sm:$0xff]
        %v2947 = vld [vmem:[%s7 + $0x144] sm:$0xff]
        %v2948 = vld [vmem:[%s7 + $0x14c] sm:$0xf]
        %v2949 = vld [vmem:[%s7 + $0x150] sm:$0xff]
        %v2950 = vld [vmem:[%s7 + $0x158] sm:$0xff]
        %v2951 = vld [vmem:[%s7 + $0x160] sm:$0xff]
        %v2952 = vld [vmem:[%s7 + $0x168] sm:$0xf]
        %v2953 = vld [vmem:[%s7 + $0x16c] sm:$0xff]
        %v2954 = vld [vmem:[%s7 + $0x174] sm:$0xff]
        %v2955 = vld [vmem:[%s7 + $0x17c] sm:$0xff]
        %v2956 = vld [vmem:[%s7 + $0x184] sm:$0xf]
        %v2957 = vld [vmem:[%s7 + $0x188] sm:$0xff]
        %v2958 = vld [vmem:[%s7 + $0x190] sm:$0xff]
        %v2959 = vld [vmem:[%s7 + $0x198] sm:$0xff]
        %v2960 = vld [vmem:[%s7 + $0x1a0] sm:$0xf]
        %v2961 = vld [vmem:[%s7 + $0x1a4] sm:$0xff]
        %v2962 = vld [vmem:[%s7 + $0x1ac] sm:$0xff]
        %v2963 = vld [vmem:[%s7 + $0x1b4] sm:$0xff]
        %v2964 = vld [vmem:[%s7 + $0x1bc] sm:$0xf]
        %v2965 = vld [vmem:[%s7 + $0x1c0] sm:$0xff]
        %v2966 = vld [vmem:[%s7 + $0x1c8] sm:$0xff]
        %v2967 = vld [vmem:[%s7 + $0x1d0] sm:$0xff]
        %v2968 = vld [vmem:[%s7 + $0x1d8] sm:$0xf]
        %v2969 = vld [vmem:[%s7 + $0x1dc] sm:$0xff]
        %v2970 = vld [vmem:[%s7 + $0x1e4] sm:$0xff]
        %v2971 = vld [vmem:[%s7 + $0x1ec] sm:$0xff]
        %v2972 = vld [vmem:[%s7 + $0x1f4] sm:$0xf]
        %v2973 = vld [vmem:[%s7 + $0x1f8] sm:$0xff]
        %v2974 = vld [vmem:[%s7 + $0x200] sm:$0xff]
        %v2975 = vld [vmem:[%s7 + $0x208] sm:$0xff]
        %v2976 = vld [vmem:[%s7 + $0x210] sm:$0xf]
        %v2977 = vld [vmem:[%s7 + $0x214] sm:$0xff]
        %v2978 = vld [vmem:[%s7 + $0x21c] sm:$0xff]
        %v2979 = vld [vmem:[%s7 + $0x224] sm:$0xff]
        %v2980 = vld [vmem:[%s7 + $0x22c] sm:$0xf]
        %v2981 = vld [vmem:[%s7 + $0x230] sm:$0xff]
        %v2982 = vld [vmem:[%s7 + $0x238] sm:$0xff]
        %v2983 = vld [vmem:[%s7 + $0x240] sm:$0xff]
        %v2984 = vld [vmem:[%s7 + $0x248] sm:$0xf]
        %v2985 = vld [vmem:[%s7 + $0x24c] sm:$0xff]
        %v2986 = vld [vmem:[%s7 + $0x254] sm:$0xff]
        %v2987 = vld [vmem:[%s7 + $0x25c] sm:$0xff]
        %v2988 = vld [vmem:[%s7 + $0x264] sm:$0xf]
        %v2989 = vld [vmem:[%s7 + $0x268] sm:$0xff]
        %v2990 = vld [vmem:[%s7 + $0x270] sm:$0xff]
        %v2991 = vld [vmem:[%s7 + $0x278] sm:$0xff]
        %v2992 = vld [vmem:[%s7 + $0x280] sm:$0xf]
        %v2993 = vld [vmem:[%s7 + $0x284] sm:$0xff]
        %v2994 = vld [vmem:[%s7 + $0x28c] sm:$0xff]
        %v2995 = vld [vmem:[%s7 + $0x294] sm:$0xff]
        %v2996 = vld [vmem:[%s7 + $0x29c] sm:$0xf]
        %v2997 = vld [vmem:[%s7 + $0x2a0] sm:$0xff]
        %v2998 = vld [vmem:[%s7 + $0x2a8] sm:$0xff]
        %v2999 = vld [vmem:[%s7 + $0x2b0] sm:$0xff]
        %v3000 = vld [vmem:[%s7 + $0x2b8] sm:$0xf]
        %v3001 = vld [vmem:[%s7 + $0x2bc] sm:$0xff]
        %v3002 = vld [vmem:[%s7 + $0x2c4] sm:$0xff]
        %v3003 = vld [vmem:[%s7 + $0x2cc] sm:$0xff]
        %v3004 = vld [vmem:[%s7 + $0x2d4] sm:$0xf]
        %v3005 = vld [vmem:[%s7 + $0x2d8] sm:$0xff]
        %v3006 = vld [vmem:[%s7 + $0x2e0] sm:$0xff]
        %v3007 = vld [vmem:[%s7 + $0x2e8] sm:$0xff]
        %v3008 = vld [vmem:[%s7 + $0x2f0] sm:$0xf]
        %v3009 = vld [vmem:[%s7 + $0x2f4] sm:$0xff]
        %v3010 = vld [vmem:[%s7 + $0x2fc] sm:$0xff]
        %v3011 = vld [vmem:[%s7 + $0x304] sm:$0xff]
        %v3012 = vld [vmem:[%s7 + $0x30c] sm:$0xf]
        %v3013 = vld [vmem:[%s7 + $0x310] sm:$0xff]
        %v3014 = vld [vmem:[%s7 + $0x318] sm:$0xff]
        %v3015 = vld [vmem:[%s7 + $0x320] sm:$0xff]
        %v3016 = vld [vmem:[%s7 + $0x328] sm:$0xf]
        %v3017 = vld [vmem:[%s7 + $0x32c] sm:$0xff]
        %v3018 = vld [vmem:[%s7 + $0x334] sm:$0xff]
        %v3019 = vld [vmem:[%s7 + $0x33c] sm:$0xff]
        %v3020 = vld [vmem:[%s7 + $0x344] sm:$0xf]
        %v3021 = vld [vmem:[%s7 + $0x348] sm:$0xff]
        %v3022 = vld [vmem:[%s7 + $0x350] sm:$0xff]
        %v3023 = vld [vmem:[%s7 + $0x358] sm:$0xff]
        %v3024 = vld [vmem:[%s7 + $0x360] sm:$0xf]
        %v3025 = vld [vmem:[%s7 + $0x364] sm:$0xff]
        %v3026 = vld [vmem:[%s7 + $0x36c] sm:$0xff]
        %v3027 = vld [vmem:[%s7 + $0x374] sm:$0xff]
        %v3028 = vld [vmem:[%s7 + $0x37c] sm:$0xf]
        %v3029 = vld [vmem:[%s7 + $0x380] sm:$0xff]
        %v3030 = vld [vmem:[%s7 + $0x388] sm:$0xff]
        %v3031 = vld [vmem:[%s7 + $0x390] sm:$0xff]
        %v3032 = vld [vmem:[%s7 + $0x398] sm:$0xf]
        %v3033 = vld [vmem:[%s7 + $0x39c] sm:$0xff]
        %v3034 = vld [vmem:[%s7 + $0x3a4] sm:$0xff]
        %v3035 = vld [vmem:[%s7 + $0x3ac] sm:$0xff]
        %v3036 = vld [vmem:[%s7 + $0x3b4] sm:$0xf]
        %v3037 = vld [vmem:[%s7 + $0x3b8] sm:$0xff]
        %v3038 = vld [vmem:[%s7 + $0x3c0] sm:$0xff]
        %v3039 = vld [vmem:[%s7 + $0x3c8] sm:$0xff]
        %v3040 = vld [vmem:[%s7 + $0x3d0] sm:$0xf]
        %v3041 = vld [vmem:[%s7 + $0x3d4] sm:$0xff]
        %v3042 = vld [vmem:[%s7 + $0x3dc] sm:$0xff]
        %v3043 = vld [vmem:[%s7 + $0x3e4] sm:$0xff]
        %v3044 = vld [vmem:[%s7 + $0x3ec] sm:$0xf]
        %v3045 = vld [vmem:[%s7 + $0x3f0] sm:$0xff]
        %v3046 = vld [vmem:[%s7 + $0x3f8] sm:$0xff]
        %v3047 = vld [vmem:[%s7 + $0x400] sm:$0xff]
        %v3048 = vld [vmem:[%s7 + $0x408] sm:$0xf]
        %v3049 = vld [vmem:[%s7 + $0x40c] sm:$0xff]
        %v3050 = vld [vmem:[%s7 + $0x414] sm:$0xff]
        %v3051 = vld [vmem:[%s7 + $0x41c] sm:$0xff]
        %v3052 = vld [vmem:[%s7 + $0x424] sm:$0xf]
        %v3053 = vld [vmem:[%s7 + $0x428] sm:$0xff]
        %v3054 = vld [vmem:[%s7 + $0x430] sm:$0xff]
        %v3055 = vld [vmem:[%s7 + $0x438] sm:$0xff]
        %v3056 = vld [vmem:[%s7 + $0x440] sm:$0xf]
        %v3057 = vld [vmem:[%s7 + $0x444] sm:$0xff]
        %v3058 = vld [vmem:[%s7 + $0x44c] sm:$0xff]
        %v3059 = vld [vmem:[%s7 + $0x454] sm:$0xff]
        %v3060 = vld [vmem:[%s7 + $0x45c] sm:$0xf]
        %v3061 = vld [vmem:[%s7 + $0x460] sm:$0xff]
        %v3062 = vld [vmem:[%s7 + $0x468] sm:$0xff]
        %v3063 = vld [vmem:[%s7 + $0x470] sm:$0xff]
        %v3064 = vld [vmem:[%s7 + $0x478] sm:$0xf]
        %v3065 = vld [vmem:[%s7 + $0x47c] sm:$0xff]
        %v3066 = vld [vmem:[%s7 + $0x484] sm:$0xff]
        %v3067 = vld [vmem:[%s7 + $0x48c] sm:$0xff]
        %v3068 = vld [vmem:[%s7 + $0x494] sm:$0xf]
        %v3069 = vld [vmem:[%s7 + $0x498] sm:$0xff]
        %v3070 = vld [vmem:[%s7 + $0x4a0] sm:$0xff]
        %v3071 = vld [vmem:[%s7 + $0x4a8] sm:$0xff]
        %v3072 = vld [vmem:[%s7 + $0x4b0] sm:$0xf]
        %v3073 = vld [vmem:[%s7 + $0x4b4] sm:$0xff]
        %v3074 = vld [vmem:[%s7 + $0x4bc] sm:$0xff]
        %v3075 = vld [vmem:[%s7 + $0x4c4] sm:$0xff]
        %v3076 = vld [vmem:[%s7 + $0x4cc] sm:$0xf]
        %v3077 = vld [vmem:[%s7 + $0x4d0] sm:$0xff]
        %v3078 = vld [vmem:[%s7 + $0x4d8] sm:$0xff]
        %v3079 = vld [vmem:[%s7 + $0x4e0] sm:$0xff]
        %v3080 = vld [vmem:[%s7 + $0x4e8] sm:$0xf]
        %v3081 = vld [vmem:[%s7 + $0x4ec] sm:$0xff]
        %v3082 = vld [vmem:[%s7 + $0x4f4] sm:$0xff]
        %v3083 = vld [vmem:[%s7 + $0x4fc] sm:$0xff]
        %v3084 = vld [vmem:[%s7 + $0x504] sm:$0xf]
        %v3085 = vld [vmem:[%s7 + $0x508] sm:$0xff]
        %v3086 = vld [vmem:[%s7 + $0x510] sm:$0xff]
        %v3087 = vld [vmem:[%s7 + $0x518] sm:$0xff]
        %v3088 = vld [vmem:[%s7 + $0x520] sm:$0xf]
        %v3089 = vld [vmem:[%s7 + $0x524] sm:$0xff]
        %v3090 = vld [vmem:[%s7 + $0x52c] sm:$0xff]
        %v3091 = vld [vmem:[%s7 + $0x534] sm:$0xff]
        %v3092 = vld [vmem:[%s7 + $0x53c] sm:$0xf]
        %v3093 = vld [vmem:[%s7 + $0x540] sm:$0xff]
        %v3094 = vld [vmem:[%s7 + $0x548] sm:$0xff]
        %v3095 = vld [vmem:[%s7 + $0x550] sm:$0xff]
        %v3096 = vld [vmem:[%s7 + $0x558] sm:$0xf]
        %v3097 = vld [vmem:[%s7 + $0x55c] sm:$0xff]
        %v3098 = vld [vmem:[%s7 + $0x564] sm:$0xff]
        %v3099 = vld [vmem:[%s7 + $0x56c] sm:$0xff]
        %v3100 = vld [vmem:[%s7 + $0x574] sm:$0xf]
        %v3101 = vld [vmem:[%s7 + $0x578] sm:$0xff]
        %v3102 = vld [vmem:[%s7 + $0x580] sm:$0xff]
        %v3103 = vld [vmem:[%s7 + $0x588] sm:$0xff]
        %v3104 = vld [vmem:[%s7 + $0x590] sm:$0xf]
        %v3105 = vld [vmem:[%s7 + $0x594] sm:$0xff]
        %v3106 = vld [vmem:[%s7 + $0x59c] sm:$0xff]
        %v3107 = vld [vmem:[%s7 + $0x5a4] sm:$0xff]
        %v3108 = vld [vmem:[%s7 + $0x5ac] sm:$0xf]
        %v3109 = vld [vmem:[%s7 + $0x5b0] sm:$0xff]
        %v3110 = vld [vmem:[%s7 + $0x5b8] sm:$0xff]
        %v3111 = vld [vmem:[%s7 + $0x5c0] sm:$0xff]
        %v3112 = vld [vmem:[%s7 + $0x5c8] sm:$0xf]
        %v3113 = vld [vmem:[%s7 + $0x5cc] sm:$0xff]
        %v3114 = vld [vmem:[%s7 + $0x5d4] sm:$0xff]
        %v3115 = vld [vmem:[%s7 + $0x5dc] sm:$0xff]
        %v3116 = vld [vmem:[%s7 + $0x5e4] sm:$0xf]
        %v3117 = vld [vmem:[%s7 + $0x5e8] sm:$0xff]
        %v3118 = vld [vmem:[%s7 + $0x5f0] sm:$0xff]
        %v3119 = vld [vmem:[%s7 + $0x5f8] sm:$0xff]
        %v3120 = vld [vmem:[%s7 + $0x600] sm:$0xf]
        %v3121 = vld [vmem:[%s7 + $0x604] sm:$0xff]
        %v3122 = vld [vmem:[%s7 + $0x60c] sm:$0xff]
        %v3123 = vld [vmem:[%s7 + $0x614] sm:$0xff]
        %v3124 = vld [vmem:[%s7 + $0x61c] sm:$0xf]
        %v3125 = vld [vmem:[%s7 + $0x620] sm:$0xff]
        %v3126 = vld [vmem:[%s7 + $0x628] sm:$0xff]
        %v3127 = vld [vmem:[%s7 + $0x630] sm:$0xff]
        %v3128 = vld [vmem:[%s7 + $0x638] sm:$0xf]
        %v3129 = vld [vmem:[%s7 + $0x63c] sm:$0xff]
        %v3130 = vld [vmem:[%s7 + $0x644] sm:$0xff]
        %v3131 = vld [vmem:[%s7 + $0x64c] sm:$0xff]
        %v3132 = vld [vmem:[%s7 + $0x654] sm:$0xf]
        %v3133 = vld [vmem:[%s7 + $0x658] sm:$0xff]
        %v3134 = vld [vmem:[%s7 + $0x660] sm:$0xff]
        %v3135 = vld [vmem:[%s7 + $0x668] sm:$0xff]
        %v3136 = vld [vmem:[%s7 + $0x670] sm:$0xf]
        %v3137 = vld [vmem:[%s7 + $0x674] sm:$0xff]
        %v3138 = vld [vmem:[%s7 + $0x67c] sm:$0xff]
        %v3139 = vld [vmem:[%s7 + $0x684] sm:$0xff]
        %v3140 = vld [vmem:[%s7 + $0x68c] sm:$0xf]
        %v3141 = vld [vmem:[%s7 + $0x690] sm:$0xff]
        %v3142 = vld [vmem:[%s7 + $0x698] sm:$0xff]
        %v3143 = vld [vmem:[%s7 + $0x6a0] sm:$0xff]
        %v3144 = vld [vmem:[%s7 + $0x6a8] sm:$0xf]
        %v3145 = vld [vmem:[%s7 + $0x6ac] sm:$0xff]
        %v3146 = vld [vmem:[%s7 + $0x6b4] sm:$0xff]
        %v3147 = vld [vmem:[%s7 + $0x6bc] sm:$0xff]
        %v3148 = vld [vmem:[%s7 + $0x6c4] sm:$0xf]
        %v3149 = vld [vmem:[%s7 + $0x6c8] sm:$0xff]
        %v3150 = vld [vmem:[%s7 + $0x6d0] sm:$0xff]
        %v3151 = vld [vmem:[%s7 + $0x6d8] sm:$0xff]
        %v3152 = vld [vmem:[%s7 + $0x6e0] sm:$0xf]
        %v3153 = vld [vmem:[%s7 + $0x6e4] sm:$0xff]
        %v3154 = vld [vmem:[%s7 + $0x6ec] sm:$0xff]
        %v3155 = vld [vmem:[%s7 + $0x6f4] sm:$0xff]
        %v3156 = vld [vmem:[%s7 + $0x6fc] sm:$0xf]
        %v3157 = vld [vmem:[%s7 + $0x700] sm:$0xff]
        %v3158 = vld [vmem:[%s7 + $0x708] sm:$0xff]
        %v3159 = vld [vmem:[%s7 + $0x710] sm:$0xff]
        %v3160 = vld [vmem:[%s7 + $0x718] sm:$0xf]
        %v3161 = vld [vmem:[%s7 + $0x71c] sm:$0xff]
        %v3162 = vld [vmem:[%s7 + $0x724] sm:$0xff]
        %v3163 = vld [vmem:[%s7 + $0x72c] sm:$0xff]
        %v3164 = vld [vmem:[%s7 + $0x734] sm:$0xf]
        %v3165 = vld [vmem:[%s7 + $0x738] sm:$0xff]
        %v3166 = vld [vmem:[%s7 + $0x740] sm:$0xff]
        %v3167 = vld [vmem:[%s7 + $0x748] sm:$0xff]
        %v3168 = vld [vmem:[%s7 + $0x750] sm:$0xf]
        %v3169 = vld [vmem:[%s7 + $0x754] sm:$0xff]
        %v3170 = vld [vmem:[%s7 + $0x75c] sm:$0xff]
        %v3171 = vld [vmem:[%s7 + $0x764] sm:$0xff]
        %v3172 = vld [vmem:[%s7 + $0x76c] sm:$0xf]
        %v3173 = vld [vmem:[%s7 + $0x770] sm:$0xff]
        %v3174 = vld [vmem:[%s7 + $0x778] sm:$0xff]
        %v3175 = vld [vmem:[%s7 + $0x780] sm:$0xff]
        %v3176 = vld [vmem:[%s7 + $0x788] sm:$0xf]
        %v3177 = vld [vmem:[%s7 + $0x78c] sm:$0xff]
        %v3178 = vld [vmem:[%s7 + $0x794] sm:$0xff]
        %v3179 = vld [vmem:[%s7 + $0x79c] sm:$0xff]
        %v3180 = vld [vmem:[%s7 + $0x7a4] sm:$0xf]
        %v3181 = vld [vmem:[%s7 + $0x7a8] sm:$0xff]
        %v3182 = vld [vmem:[%s7 + $0x7b0] sm:$0xff]
        %v3183 = vld [vmem:[%s7 + $0x7b8] sm:$0xff]
        %v3184 = vld [vmem:[%s7 + $0x7c0] sm:$0xf]
        %v3185 = vld [vmem:[%s7 + $0x7c4] sm:$0xff]
        %v3186 = vld [vmem:[%s7 + $0x7cc] sm:$0xff]
        %v3187 = vld [vmem:[%s7 + $0x7d4] sm:$0xff]
        %v3188 = vld [vmem:[%s7 + $0x7dc] sm:$0xf]
        %v3189 = vld [vmem:[%s7 + $0x7e0] sm:$0xff]
        %v3190 = vld [vmem:[%s7 + $0x7e8] sm:$0xff]
        %v3191 = vld [vmem:[%s7 + $0x7f0] sm:$0xff]
        %v3192 = vld [vmem:[%s7 + $0x7f8] sm:$0xf]
        %v3193 = vld [vmem:[%s7 + $0x7fc] sm:$0xff]
        %v3194 = vld [vmem:[%s7 + $0x804] sm:$0xff]
        %v3195 = vld [vmem:[%s7 + $0x80c] sm:$0xff]
        %v3196 = vld [vmem:[%s7 + $0x814] sm:$0xf]
        %v3197 = vld [vmem:[%s7 + $0x818] sm:$0xff]
        %v3198 = vld [vmem:[%s7 + $0x820] sm:$0xff]
        %v3199 = vld [vmem:[%s7 + $0x828] sm:$0xff]
        %v3200 = vld [vmem:[%s7 + $0x830] sm:$0xf]
        %v3201 = vld [vmem:[%s7 + $0x834] sm:$0xff]
        %v3202 = vld [vmem:[%s7 + $0x83c] sm:$0xff]
        %v3203 = vld [vmem:[%s7 + $0x844] sm:$0xff]
        %v3204 = vld [vmem:[%s7 + $0x84c] sm:$0xf]
        %v3205 = vld [vmem:[%s7 + $0x850] sm:$0xff]
        %v3206 = vld [vmem:[%s7 + $0x858] sm:$0xff]
        %v3207 = vld [vmem:[%s7 + $0x860] sm:$0xff]
        %v3208 = vld [vmem:[%s7 + $0x868] sm:$0xf]
        %v3209 = vld [vmem:[%s7 + $0x86c] sm:$0xff]
        %v3210 = vld [vmem:[%s7 + $0x874] sm:$0xff]
        %v3211 = vld [vmem:[%s7 + $0x87c] sm:$0xff]
        %v3212 = vld [vmem:[%s7 + $0x884] sm:$0xf]
        %v3213 = vld [vmem:[%s7 + $0x888] sm:$0xff]
        %v3214 = vld [vmem:[%s7 + $0x890] sm:$0xff]
        %v3215 = vld [vmem:[%s7 + $0x898] sm:$0xff]
        %v3216 = vld [vmem:[%s7 + $0x8a0] sm:$0xf]
        %v3217 = vld [vmem:[%s7 + $0x8a4] sm:$0xff]
        %v3218 = vld [vmem:[%s7 + $0x8ac] sm:$0xff]
        %v3219 = vld [vmem:[%s7 + $0x8b4] sm:$0xff]
        %v3220 = vld [vmem:[%s7 + $0x8bc] sm:$0xf]
        %v3221 = vld [vmem:[%s7 + $0x8c0] sm:$0xff]
        %v3222 = vld [vmem:[%s7 + $0x8c8] sm:$0xff]
        %v3223 = vld [vmem:[%s7 + $0x8d0] sm:$0xff]
        %v3224 = vld [vmem:[%s7 + $0x8d8] sm:$0xf]
        %v3225 = vld [vmem:[%s7 + $0x8dc] sm:$0xff]
        %v3226 = vld [vmem:[%s7 + $0x8e4] sm:$0xff]
        %v3227 = vld [vmem:[%s7 + $0x8ec] sm:$0xff]
        %v3228 = vld [vmem:[%s7 + $0x8f4] sm:$0xf]
        %v3229 = vld [vmem:[%s7 + $0x8f8] sm:$0xff]
        %v3230 = vld [vmem:[%s7 + $0x900] sm:$0xff]
        %v3231 = vld [vmem:[%s7 + $0x908] sm:$0xff]
        %v3232 = vld [vmem:[%s7 + $0x910] sm:$0xf]
        %v3233 = vld [vmem:[%s7 + $0x914] sm:$0xff]
        %v3234 = vld [vmem:[%s7 + $0x91c] sm:$0xff]
        %v3235 = vld [vmem:[%s7 + $0x924] sm:$0xff]
        %v3236 = vld [vmem:[%s7 + $0x92c] sm:$0xf]
        %v3237 = vld [vmem:[%s7 + $0x930] sm:$0xff]
        %v3238 = vld [vmem:[%s7 + $0x938] sm:$0xff]
        %v3239 = vld [vmem:[%s7 + $0x940] sm:$0xff]
        %v3240 = vld [vmem:[%s7 + $0x948] sm:$0xf]
        %v3241 = vld [vmem:[%s7 + $0x94c] sm:$0xff]
        %v3242 = vld [vmem:[%s7 + $0x954] sm:$0xff]
        %v3243 = vld [vmem:[%s7 + $0x95c] sm:$0xff]
        %v3244 = vld [vmem:[%s7 + $0x964] sm:$0xf]
        %v3245 = vld [vmem:[%s7 + $0x968] sm:$0xff]
        %v3246 = vld [vmem:[%s7 + $0x970] sm:$0xff]
        %v3247 = vld [vmem:[%s7 + $0x978] sm:$0xff]
        %v3248 = vld [vmem:[%s7 + $0x980] sm:$0xf]
        %v3249 = vld [vmem:[%s7 + $0x984] sm:$0xff]
        %v3250 = vld [vmem:[%s7 + $0x98c] sm:$0xff]
        %v3251 = vld [vmem:[%s7 + $0x994] sm:$0xff]
        %v3252 = vld [vmem:[%s7 + $0x99c] sm:$0xf]
        %v3253 = vld [vmem:[%s7 + $0x9a0] sm:$0xff]
        %v3254 = vld [vmem:[%s7 + $0x9a8] sm:$0xff]
        %v3255 = vld [vmem:[%s7 + $0x9b0] sm:$0xff]
        %v3256 = vld [vmem:[%s7 + $0x9b8] sm:$0xf]
        %v3257 = vld [vmem:[%s7 + $0x9bc] sm:$0xff]
        %v3258 = vld [vmem:[%s7 + $0x9c4] sm:$0xff]
        %v3259 = vld [vmem:[%s7 + $0x9cc] sm:$0xff]
        %v3260 = vld [vmem:[%s7 + $0x9d4] sm:$0xf]
        %v3261 = vld [vmem:[%s7 + $0x9d8] sm:$0xff]
        %v3262 = vld [vmem:[%s7 + $0x9e0] sm:$0xff]
        %v3263 = vld [vmem:[%s7 + $0x9e8] sm:$0xff]
        %v3264 = vld [vmem:[%s7 + $0x9f0] sm:$0xf]
        %v3265 = vld [vmem:[%s7 + $0x9f4] sm:$0xff]
        %v3266 = vld [vmem:[%s7 + $0x9fc] sm:$0xff]
        %v3267 = vld [vmem:[%s7 + $0xa04] sm:$0xff]
        %v3268 = vld [vmem:[%s7 + $0xa0c] sm:$0xf]
        %v3269 = vld [vmem:[%s7 + $0xa10] sm:$0xff]
        %v3270 = vld [vmem:[%s7 + $0xa18] sm:$0xff]
        %v3271 = vld [vmem:[%s7 + $0xa20] sm:$0xff]
        %v3272 = vld [vmem:[%s7 + $0xa28] sm:$0xf]
        %v3273 = vld [vmem:[%s7 + $0xa2c] sm:$0xff]
        %v3274 = vld [vmem:[%s7 + $0xa34] sm:$0xff]
        %v3275 = vld [vmem:[%s7 + $0xa3c] sm:$0xff]
        %v3276 = vld [vmem:[%s7 + $0xa44] sm:$0xf]
        %v3277 = vld [vmem:[%s7 + $0xa48] sm:$0xff]
        %v3278 = vld [vmem:[%s7 + $0xa50] sm:$0xff]
        %v3279 = vld [vmem:[%s7 + $0xa58] sm:$0xff]
        %v3280 = vld [vmem:[%s7 + $0xa60] sm:$0xf]
        %v3281 = vld [vmem:[%s7 + $0xa64] sm:$0xff]
        %v3282 = vld [vmem:[%s7 + $0xa6c] sm:$0xff]
        %v3283 = vld [vmem:[%s7 + $0xa74] sm:$0xff]
        %v3284 = vld [vmem:[%s7 + $0xa7c] sm:$0xf]
        %v3285 = vld [vmem:[%s7 + $0xa80] sm:$0xff]
        %v3286 = vld [vmem:[%s7 + $0xa88] sm:$0xff]
        %v3287 = vld [vmem:[%s7 + $0xa90] sm:$0xff]
        %v3288 = vld [vmem:[%s7 + $0xa98] sm:$0xf]
        %v3289 = vld [vmem:[%s7 + $0xa9c] sm:$0xff]
        %v3290 = vld [vmem:[%s7 + $0xaa4] sm:$0xff]
        %v3291 = vld [vmem:[%s7 + $0xaac] sm:$0xff]
        %v3292 = vld [vmem:[%s7 + $0xab4] sm:$0xf]
        %v3293 = vld [vmem:[%s7 + $0xab8] sm:$0xff]
        %v3294 = vld [vmem:[%s7 + $0xac0] sm:$0xff]
        %v3295 = vld [vmem:[%s7 + $0xac8] sm:$0xff]
        %v3296 = vld [vmem:[%s7 + $0xad0] sm:$0xf]
        %v3297 = vld [vmem:[%s7 + $0xad4] sm:$0xff]
        %v3298 = vld [vmem:[%s7 + $0xadc] sm:$0xff]
        %v3299 = vld [vmem:[%s7 + $0xae4] sm:$0xff]
        %v3300 = vld [vmem:[%s7 + $0xaec] sm:$0xf]
        %v3301 = vld [vmem:[%s7 + $0xaf0] sm:$0xff]
        %v3302 = vld [vmem:[%s7 + $0xaf8] sm:$0xff]
        %v3303 = vld [vmem:[%s7 + $0xb00] sm:$0xff]
        %v3304 = vld [vmem:[%s7 + $0xb08] sm:$0xf]
        %v3305 = vld [vmem:[%s7 + $0xb0c] sm:$0xff]
        %v3306 = vld [vmem:[%s7 + $0xb14] sm:$0xff]
        %v3307 = vld [vmem:[%s7 + $0xb1c] sm:$0xff]
        %v3308 = vld [vmem:[%s7 + $0xb24] sm:$0xf]
        %v3309 = vld [vmem:[%s7 + $0xb28] sm:$0xff]
        %v3310 = vld [vmem:[%s7 + $0xb30] sm:$0xff]
        %v3311 = vld [vmem:[%s7 + $0xb38] sm:$0xff]
        %v3312 = vld [vmem:[%s7 + $0xb40] sm:$0xf]
        %v3313 = vld [vmem:[%s7 + $0xb44] sm:$0xff]
        %v3314 = vld [vmem:[%s7 + $0xb4c] sm:$0xff]
        %v3315 = vld [vmem:[%s7 + $0xb54] sm:$0xff]
        %v3316 = vld [vmem:[%s7 + $0xb5c] sm:$0xf]
        %v3317 = vld [vmem:[%s7 + $0xb60] sm:$0xff]
        %v3318 = vld [vmem:[%s7 + $0xb68] sm:$0xff]
        %v3319 = vld [vmem:[%s7 + $0xb70] sm:$0xff]
        %v3320 = vld [vmem:[%s7 + $0xb78] sm:$0xf]
        %v3321 = vld [vmem:[%s7 + $0xb7c] sm:$0xff]
        %v3322 = vld [vmem:[%s7 + $0xb84] sm:$0xff]
        %v3323 = vld [vmem:[%s7 + $0xb8c] sm:$0xff]
        %v3324 = vld [vmem:[%s7 + $0xb94] sm:$0xf]
        %v3325 = vld [vmem:[%s7 + $0xb98] sm:$0xff]
        %v3326 = vld [vmem:[%s7 + $0xba0] sm:$0xff]
        %v3327 = vld [vmem:[%s7 + $0xba8] sm:$0xff]
        %v3328 = vld [vmem:[%s7 + $0xbb0] sm:$0xf]
        %v3329 = vld [vmem:[%s7 + $0xbb4] sm:$0xff]
        %v3330 = vld [vmem:[%s7 + $0xbbc] sm:$0xff]
        %v3331 = vld [vmem:[%s7 + $0xbc4] sm:$0xff]
        %v3332 = vld [vmem:[%s7 + $0xbcc] sm:$0xf]
        %v3333 = vld [vmem:[%s7 + $0xbd0] sm:$0xff]
        %v3334 = vld [vmem:[%s7 + $0xbd8] sm:$0xff]
        %v3335 = vld [vmem:[%s7 + $0xbe0] sm:$0xff]
        %v3336 = vld [vmem:[%s7 + $0xbe8] sm:$0xf]
        %v3337 = vld [vmem:[%s7 + $0xbec] sm:$0xff]
        %v3338 = vld [vmem:[%s7 + $0xbf4] sm:$0xff]
        %v3339 = vld [vmem:[%s7 + $0xbfc] sm:$0xff]
        %v3340 = vld [vmem:[%s7 + $0xc04] sm:$0xf]
        %v3341 = vld [vmem:[%s7 + $0xc08] sm:$0xff]
        %v3342 = vld [vmem:[%s7 + $0xc10] sm:$0xff]
        %v3343 = vld [vmem:[%s7 + $0xc18] sm:$0xff]
        %v3344 = vld [vmem:[%s7 + $0xc20] sm:$0xf]
        %v3345 = vld [vmem:[%s7 + $0xc24] sm:$0xff]
        %v3346 = vld [vmem:[%s7 + $0xc2c] sm:$0xff]
        %v3347 = vld [vmem:[%s7 + $0xc34] sm:$0xff]
        %v3348 = vld [vmem:[%s7 + $0xc3c] sm:$0xf]
        %v3349 = vld [vmem:[%s7 + $0xc40] sm:$0xff]
        %v3350 = vld [vmem:[%s7 + $0xc48] sm:$0xff]
        %v3351 = vld [vmem:[%s7 + $0xc50] sm:$0xff]
        %v3352 = vld [vmem:[%s7 + $0xc58] sm:$0xf]
        %v3353 = vld [vmem:[%s7 + $0xc5c] sm:$0xff]
        %v3354 = vld [vmem:[%s7 + $0xc64] sm:$0xff]
        %v3355 = vld [vmem:[%s7 + $0xc6c] sm:$0xff]
        %v3356 = vld [vmem:[%s7 + $0xc74] sm:$0xf]
        %v3357 = vld [vmem:[%s7 + $0xc78] sm:$0xff]
        %v3358 = vld [vmem:[%s7 + $0xc80] sm:$0xff]
        %v3359 = vld [vmem:[%s7 + $0xc88] sm:$0xff]
        %v3360 = vld [vmem:[%s7 + $0xc90] sm:$0xf]
        %v3361 = vld [vmem:[%s7 + $0xc94] sm:$0xff]
        %v3362 = vld [vmem:[%s7 + $0xc9c] sm:$0xff]
        %v3363 = vld [vmem:[%s7 + $0xca4] sm:$0xff]
        %v3364 = vld [vmem:[%s7 + $0xcac] sm:$0xf]
        %v3365 = vld [vmem:[%s7 + $0xcb0] sm:$0xff]
        %v3366 = vld [vmem:[%s7 + $0xcb8] sm:$0xff]
        %v3367 = vld [vmem:[%s7 + $0xcc0] sm:$0xff]
        %v3368 = vld [vmem:[%s7 + $0xcc8] sm:$0xf]
        %v3369 = vld [vmem:[%s7 + $0xccc] sm:$0xff]
        %v3370 = vld [vmem:[%s7 + $0xcd4] sm:$0xff]
        %v3371 = vld [vmem:[%s7 + $0xcdc] sm:$0xff]
        %v3372 = vld [vmem:[%s7 + $0xce4] sm:$0xf]
        %v3373 = vld [vmem:[%s7 + $0xce8] sm:$0xff]
        %v3374 = vld [vmem:[%s7 + $0xcf0] sm:$0xff]
        %v3375 = vld [vmem:[%s7 + $0xcf8] sm:$0xff]
        %v3376 = vld [vmem:[%s7 + $0xd00] sm:$0xf]
        %v3377 = vld [vmem:[%s7 + $0xd04] sm:$0xff]
        %v3378 = vld [vmem:[%s7 + $0xd0c] sm:$0xff]
        %v3379 = vld [vmem:[%s7 + $0xd14] sm:$0xff]
        %v3380 = vld [vmem:[%s7 + $0xd1c] sm:$0xf]
        %v3381 = vld [vmem:[%s7 + $0xd20] sm:$0xff]
        %v3382 = vld [vmem:[%s7 + $0xd28] sm:$0xff]
        %v3383 = vld [vmem:[%s7 + $0xd30] sm:$0xff]
        %v3384 = vld [vmem:[%s7 + $0xd38] sm:$0xf]
        %v3385 = vld [vmem:[%s7 + $0xd3c] sm:$0xff]
        %v3386 = vld [vmem:[%s7 + $0xd44] sm:$0xff]
        %v3387 = vld [vmem:[%s7 + $0xd4c] sm:$0xff]
        %v3388 = vld [vmem:[%s7 + $0xd54] sm:$0xf]
        %v3389 = vld [vmem:[%s7 + $0xd58] sm:$0xff]
        %v3390 = vld [vmem:[%s7 + $0xd60] sm:$0xff]
        %v3391 = vld [vmem:[%s7 + $0xd68] sm:$0xff]
        %v3392 = vld [vmem:[%s7 + $0xd70] sm:$0xf]
        %v3393 = vld [vmem:[%s7 + $0xd74] sm:$0xff]
        %v3394 = vld [vmem:[%s7 + $0xd7c] sm:$0xff]
        %v3395 = vld [vmem:[%s7 + $0xd84] sm:$0xff]
        %v3396 = vld [vmem:[%s7 + $0xd8c] sm:$0xf]
        %v3397 = vld [vmem:[%s7 + $0xd90] sm:$0xff]
        %v3398 = vld [vmem:[%s7 + $0xd98] sm:$0xff]
        %v3399 = vld [vmem:[%s7 + $0xda0] sm:$0xff]
        %v3400 = vld [vmem:[%s7 + $0xda8] sm:$0xf]
        %v3401 = vld [vmem:[%s7 + $0xdac] sm:$0xff]
        %v3402 = vld [vmem:[%s7 + $0xdb4] sm:$0xff]
        %v3403 = vld [vmem:[%s7 + $0xdbc] sm:$0xff]
        %v3404 = vld [vmem:[%s7 + $0xdc4] sm:$0xf]
        %v3405 = vld [vmem:[%s7 + $0xdc8] sm:$0xff]
        %v3406 = vld [vmem:[%s7 + $0xdd0] sm:$0xff]
        %v3407 = vld [vmem:[%s7 + $0xdd8] sm:$0xff]
        %v3408 = vld [vmem:[%s7 + $0xde0] sm:$0xf]
        %v3409 = vld [vmem:[%s7 + $0xde4] sm:$0xff]
        %v3410 = vld [vmem:[%s7 + $0xdec] sm:$0xff]
        %v3411 = vld [vmem:[%s7 + $0xdf4] sm:$0xff]
        %v3412 = vld [vmem:[%s7 + $0xdfc] sm:$0xf]
        %v3413 = vld [vmem:[%s8] sm:$0x7f]
        %v3415 = vlaneseq
        %v3416 = vshrl.u32 %v3415, 7
        %v3417 = vsub.s32 0, %v3416
        %v3418 = vrot.slane %v3413, %v3417
        %v3419 = vlaneseq
        %v3420 = vshrl.u32 %v3419, 7
        %v3421 = vsub.s32 1, %v3420
        %v3422 = vrot.slane %v3413, %v3421
        %v3423 = vlaneseq
        %v3424 = vshrl.u32 %v3423, 7
        %v3425 = vsub.s32 2, %v3424
        %v3426 = vrot.slane %v3413, %v3425
        %v3427 = vlaneseq
        %v3428 = vshrl.u32 %v3427, 7
        %v3429 = vsub.s32 3, %v3428
        %v3430 = vrot.slane %v3413, %v3429
        %v3431 = vlaneseq
        %v3432 = vshrl.u32 %v3431, 7
        %v3433 = vsub.s32 4, %v3432
        %v3434 = vrot.slane %v3413, %v3433
        %v3435 = vlaneseq
        %v3436 = vshrl.u32 %v3435, 7
        %v3437 = vsub.s32 5, %v3436
        %v3438 = vrot.slane %v3413, %v3437
        %v3439 = vlaneseq
        %v3440 = vshrl.u32 %v3439, 7
        %v3441 = vsub.s32 6, %v3440
        %v3442 = vrot.slane %v3413, %v3441
        %v3962 = vunpack.c.l.b16 %v2901
        %v3963 = vunpack.c.h.b16 %v2901
        %v3964 = vunpack.c.l.b16 %v2902
        %v3965 = vunpack.c.h.b16 %v2902
        %v3966 = vunpack.c.l.b16 %v2903
        %v3967 = vunpack.c.h.b16 %v2903
        %v3968 = vunpack.c.l.b16 %v2904
        %v3969 = vunpack.c.l.b16 %v2905
        %v3970 = vunpack.c.h.b16 %v2905
        %v3971 = vunpack.c.l.b16 %v2906
        %v3972 = vunpack.c.h.b16 %v2906
        %v3973 = vunpack.c.l.b16 %v2907
        %v3974 = vunpack.c.h.b16 %v2907
        %v3975 = vunpack.c.l.b16 %v2908
        %v3976 = vunpack.c.l.b16 %v2909
        %v3977 = vunpack.c.h.b16 %v2909
        %v3978 = vunpack.c.l.b16 %v2910
        %v3979 = vunpack.c.h.b16 %v2910
        %v3980 = vunpack.c.l.b16 %v2911
        %v3981 = vunpack.c.h.b16 %v2911
        %v3982 = vunpack.c.l.b16 %v2912
        %v3983 = vunpack.c.l.b16 %v2913
        %v3984 = vunpack.c.h.b16 %v2913
        %v3985 = vunpack.c.l.b16 %v2914
        %v3986 = vunpack.c.h.b16 %v2914
        %v3987 = vunpack.c.l.b16 %v2915
        %v3988 = vunpack.c.h.b16 %v2915
        %v3989 = vunpack.c.l.b16 %v2916
        %v3990 = vunpack.c.l.b16 %v2917
        %v3991 = vunpack.c.h.b16 %v2917
        %v3992 = vunpack.c.l.b16 %v2918
        %v3993 = vunpack.c.h.b16 %v2918
        %v3994 = vunpack.c.l.b16 %v2919
        %v3995 = vunpack.c.h.b16 %v2919
        %v3996 = vunpack.c.l.b16 %v2920
        %v3997 = vunpack.c.l.b16 %v2921
        %v3998 = vunpack.c.h.b16 %v2921
        %v3999 = vunpack.c.l.b16 %v2922
        %v4000 = vunpack.c.h.b16 %v2922
        %v4001 = vunpack.c.l.b16 %v2923
        %v4002 = vunpack.c.h.b16 %v2923
        %v4003 = vunpack.c.l.b16 %v2924
        %v4004 = vunpack.c.l.b16 %v2925
        %v4005 = vunpack.c.h.b16 %v2925
        %v4006 = vunpack.c.l.b16 %v2926
        %v4007 = vunpack.c.h.b16 %v2926
        %v4008 = vunpack.c.l.b16 %v2927
        %v4009 = vunpack.c.h.b16 %v2927
        %v4010 = vunpack.c.l.b16 %v2928
        %v4011 = vunpack.c.l.b16 %v2929
        %v4012 = vunpack.c.h.b16 %v2929
        %v4013 = vunpack.c.l.b16 %v2930
        %v4014 = vunpack.c.h.b16 %v2930
        %v4015 = vunpack.c.l.b16 %v2931
        %v4016 = vunpack.c.h.b16 %v2931
        %v4017 = vunpack.c.l.b16 %v2932
        %v4018 = vunpack.c.l.b16 %v2933
        %v4019 = vunpack.c.h.b16 %v2933
        %v4020 = vunpack.c.l.b16 %v2934
        %v4021 = vunpack.c.h.b16 %v2934
        %v4022 = vunpack.c.l.b16 %v2935
        %v4023 = vunpack.c.h.b16 %v2935
        %v4024 = vunpack.c.l.b16 %v2936
        %v4025 = vunpack.c.l.b16 %v2937
        %v4026 = vunpack.c.h.b16 %v2937
        %v4027 = vunpack.c.l.b16 %v2938
        %v4028 = vunpack.c.h.b16 %v2938
        %v4029 = vunpack.c.l.b16 %v2939
        %v4030 = vunpack.c.h.b16 %v2939
        %v4031 = vunpack.c.l.b16 %v2940
        %v4032 = vunpack.c.l.b16 %v2941
        %v4033 = vunpack.c.h.b16 %v2941
        %v4034 = vunpack.c.l.b16 %v2942
        %v4035 = vunpack.c.h.b16 %v2942
        %v4036 = vunpack.c.l.b16 %v2943
        %v4037 = vunpack.c.h.b16 %v2943
        %v4038 = vunpack.c.l.b16 %v2944
        %v4039 = vunpack.c.l.b16 %v2945
        %v4040 = vunpack.c.h.b16 %v2945
        %v4041 = vunpack.c.l.b16 %v2946
        %v4042 = vunpack.c.h.b16 %v2946
        %v4043 = vunpack.c.l.b16 %v2947
        %v4044 = vunpack.c.h.b16 %v2947
        %v4045 = vunpack.c.l.b16 %v2948
        %v4046 = vunpack.c.l.b16 %v2949
        %v4047 = vunpack.c.h.b16 %v2949
        %v4048 = vunpack.c.l.b16 %v2950
        %v4049 = vunpack.c.h.b16 %v2950
        %v4050 = vunpack.c.l.b16 %v2951
        %v4051 = vunpack.c.h.b16 %v2951
        %v4052 = vunpack.c.l.b16 %v2952
        %v4053 = vunpack.c.l.b16 %v2953
        %v4054 = vunpack.c.h.b16 %v2953
        %v4055 = vunpack.c.l.b16 %v2954
        %v4056 = vunpack.c.h.b16 %v2954
        %v4057 = vunpack.c.l.b16 %v2955
        %v4058 = vunpack.c.h.b16 %v2955
        %v4059 = vunpack.c.l.b16 %v2956
        %v4060 = vunpack.c.l.b16 %v2957
        %v4061 = vunpack.c.h.b16 %v2957
        %v4062 = vunpack.c.l.b16 %v2958
        %v4063 = vunpack.c.h.b16 %v2958
        %v4064 = vunpack.c.l.b16 %v2959
        %v4065 = vunpack.c.h.b16 %v2959
        %v4066 = vunpack.c.l.b16 %v2960
        %v4067 = vunpack.c.l.b16 %v2961
        %v4068 = vunpack.c.h.b16 %v2961
        %v4069 = vunpack.c.l.b16 %v2962
        %v4070 = vunpack.c.h.b16 %v2962
        %v4071 = vunpack.c.l.b16 %v2963
        %v4072 = vunpack.c.h.b16 %v2963
        %v4073 = vunpack.c.l.b16 %v2964
        %v4074 = vunpack.c.l.b16 %v2965
        %v4075 = vunpack.c.h.b16 %v2965
        %v4076 = vunpack.c.l.b16 %v2966
        %v4077 = vunpack.c.h.b16 %v2966
        %v4078 = vunpack.c.l.b16 %v2967
        %v4079 = vunpack.c.h.b16 %v2967
        %v4080 = vunpack.c.l.b16 %v2968
        %v4081 = vunpack.c.l.b16 %v2969
        %v4082 = vunpack.c.h.b16 %v2969
        %v4083 = vunpack.c.l.b16 %v2970
        %v4084 = vunpack.c.h.b16 %v2970
        %v4085 = vunpack.c.l.b16 %v2971
        %v4086 = vunpack.c.h.b16 %v2971
        %v4087 = vunpack.c.l.b16 %v2972
        %v4088 = vunpack.c.l.b16 %v2973
        %v4089 = vunpack.c.h.b16 %v2973
        %v4090 = vunpack.c.l.b16 %v2974
        %v4091 = vunpack.c.h.b16 %v2974
        %v4092 = vunpack.c.l.b16 %v2975
        %v4093 = vunpack.c.h.b16 %v2975
        %v4094 = vunpack.c.l.b16 %v2976
        %v4095 = vunpack.c.l.b16 %v2977
        %v4096 = vunpack.c.h.b16 %v2977
        %v4097 = vunpack.c.l.b16 %v2978
        %v4098 = vunpack.c.h.b16 %v2978
        %v4099 = vunpack.c.l.b16 %v2979
        %v4100 = vunpack.c.h.b16 %v2979
        %v4101 = vunpack.c.l.b16 %v2980
        %v4102 = vunpack.c.l.b16 %v2981
        %v4103 = vunpack.c.h.b16 %v2981
        %v4104 = vunpack.c.l.b16 %v2982
        %v4105 = vunpack.c.h.b16 %v2982
        %v4106 = vunpack.c.l.b16 %v2983
        %v4107 = vunpack.c.h.b16 %v2983
        %v4108 = vunpack.c.l.b16 %v2984
        %v4109 = vunpack.c.l.b16 %v2985
        %v4110 = vunpack.c.h.b16 %v2985
        %v4111 = vunpack.c.l.b16 %v2986
        %v4112 = vunpack.c.h.b16 %v2986
        %v4113 = vunpack.c.l.b16 %v2987
        %v4114 = vunpack.c.h.b16 %v2987
        %v4115 = vunpack.c.l.b16 %v2988
        %v4116 = vunpack.c.l.b16 %v2989
        %v4117 = vunpack.c.h.b16 %v2989
        %v4118 = vunpack.c.l.b16 %v2990
        %v4119 = vunpack.c.h.b16 %v2990
        %v4120 = vunpack.c.l.b16 %v2991
        %v4121 = vunpack.c.h.b16 %v2991
        %v4122 = vunpack.c.l.b16 %v2992
        %v4123 = vunpack.c.l.b16 %v2993
        %v4124 = vunpack.c.h.b16 %v2993
        %v4125 = vunpack.c.l.b16 %v2994
        %v4126 = vunpack.c.h.b16 %v2994
        %v4127 = vunpack.c.l.b16 %v2995
        %v4128 = vunpack.c.h.b16 %v2995
        %v4129 = vunpack.c.l.b16 %v2996
        %v4130 = vunpack.c.l.b16 %v2997
        %v4131 = vunpack.c.h.b16 %v2997
        %v4132 = vunpack.c.l.b16 %v2998
        %v4133 = vunpack.c.h.b16 %v2998
        %v4134 = vunpack.c.l.b16 %v2999
        %v4135 = vunpack.c.h.b16 %v2999
        %v4136 = vunpack.c.l.b16 %v3000
        %v4137 = vunpack.c.l.b16 %v3001
        %v4138 = vunpack.c.h.b16 %v3001
        %v4139 = vunpack.c.l.b16 %v3002
        %v4140 = vunpack.c.h.b16 %v3002
        %v4141 = vunpack.c.l.b16 %v3003
        %v4142 = vunpack.c.h.b16 %v3003
        %v4143 = vunpack.c.l.b16 %v3004
        %v4144 = vunpack.c.l.b16 %v3005
        %v4145 = vunpack.c.h.b16 %v3005
        %v4146 = vunpack.c.l.b16 %v3006
        %v4147 = vunpack.c.h.b16 %v3006
        %v4148 = vunpack.c.l.b16 %v3007
        %v4149 = vunpack.c.h.b16 %v3007
        %v4150 = vunpack.c.l.b16 %v3008
        %v4151 = vunpack.c.l.b16 %v3009
        %v4152 = vunpack.c.h.b16 %v3009
        %v4153 = vunpack.c.l.b16 %v3010
        %v4154 = vunpack.c.h.b16 %v3010
        %v4155 = vunpack.c.l.b16 %v3011
        %v4156 = vunpack.c.h.b16 %v3011
        %v4157 = vunpack.c.l.b16 %v3012
        %v4158 = vunpack.c.l.b16 %v3013
        %v4159 = vunpack.c.h.b16 %v3013
        %v4160 = vunpack.c.l.b16 %v3014
        %v4161 = vunpack.c.h.b16 %v3014
        %v4162 = vunpack.c.l.b16 %v3015
        %v4163 = vunpack.c.h.b16 %v3015
        %v4164 = vunpack.c.l.b16 %v3016
        %v4165 = vunpack.c.l.b16 %v3017
        %v4166 = vunpack.c.h.b16 %v3017
        %v4167 = vunpack.c.l.b16 %v3018
        %v4168 = vunpack.c.h.b16 %v3018
        %v4169 = vunpack.c.l.b16 %v3019
        %v4170 = vunpack.c.h.b16 %v3019
        %v4171 = vunpack.c.l.b16 %v3020
        %v4172 = vunpack.c.l.b16 %v3021
        %v4173 = vunpack.c.h.b16 %v3021
        %v4174 = vunpack.c.l.b16 %v3022
        %v4175 = vunpack.c.h.b16 %v3022
        %v4176 = vunpack.c.l.b16 %v3023
        %v4177 = vunpack.c.h.b16 %v3023
        %v4178 = vunpack.c.l.b16 %v3024
        %v4179 = vunpack.c.l.b16 %v3025
        %v4180 = vunpack.c.h.b16 %v3025
        %v4181 = vunpack.c.l.b16 %v3026
        %v4182 = vunpack.c.h.b16 %v3026
        %v4183 = vunpack.c.l.b16 %v3027
        %v4184 = vunpack.c.h.b16 %v3027
        %v4185 = vunpack.c.l.b16 %v3028
        %v4186 = vunpack.c.l.b16 %v3029
        %v4187 = vunpack.c.h.b16 %v3029
        %v4188 = vunpack.c.l.b16 %v3030
        %v4189 = vunpack.c.h.b16 %v3030
        %v4190 = vunpack.c.l.b16 %v3031
        %v4191 = vunpack.c.h.b16 %v3031
        %v4192 = vunpack.c.l.b16 %v3032
        %v4193 = vunpack.c.l.b16 %v3033
        %v4194 = vunpack.c.h.b16 %v3033
        %v4195 = vunpack.c.l.b16 %v3034
        %v4196 = vunpack.c.h.b16 %v3034
        %v4197 = vunpack.c.l.b16 %v3035
        %v4198 = vunpack.c.h.b16 %v3035
        %v4199 = vunpack.c.l.b16 %v3036
        %v4200 = vunpack.c.l.b16 %v3037
        %v4201 = vunpack.c.h.b16 %v3037
        %v4202 = vunpack.c.l.b16 %v3038
        %v4203 = vunpack.c.h.b16 %v3038
        %v4204 = vunpack.c.l.b16 %v3039
        %v4205 = vunpack.c.h.b16 %v3039
        %v4206 = vunpack.c.l.b16 %v3040
        %v4207 = vunpack.c.l.b16 %v3041
        %v4208 = vunpack.c.h.b16 %v3041
        %v4209 = vunpack.c.l.b16 %v3042
        %v4210 = vunpack.c.h.b16 %v3042
        %v4211 = vunpack.c.l.b16 %v3043
        %v4212 = vunpack.c.h.b16 %v3043
        %v4213 = vunpack.c.l.b16 %v3044
        %v4214 = vunpack.c.l.b16 %v3045
        %v4215 = vunpack.c.h.b16 %v3045
        %v4216 = vunpack.c.l.b16 %v3046
        %v4217 = vunpack.c.h.b16 %v3046
        %v4218 = vunpack.c.l.b16 %v3047
        %v4219 = vunpack.c.h.b16 %v3047
        %v4220 = vunpack.c.l.b16 %v3048
        %v4221 = vunpack.c.l.b16 %v3049
        %v4222 = vunpack.c.h.b16 %v3049
        %v4223 = vunpack.c.l.b16 %v3050
        %v4224 = vunpack.c.h.b16 %v3050
        %v4225 = vunpack.c.l.b16 %v3051
        %v4226 = vunpack.c.h.b16 %v3051
        %v4227 = vunpack.c.l.b16 %v3052
        %v4228 = vunpack.c.l.b16 %v3053
        %v4229 = vunpack.c.h.b16 %v3053
        %v4230 = vunpack.c.l.b16 %v3054
        %v4231 = vunpack.c.h.b16 %v3054
        %v4232 = vunpack.c.l.b16 %v3055
        %v4233 = vunpack.c.h.b16 %v3055
        %v4234 = vunpack.c.l.b16 %v3056
        %v4235 = vunpack.c.l.b16 %v3057
        %v4236 = vunpack.c.h.b16 %v3057
        %v4237 = vunpack.c.l.b16 %v3058
        %v4238 = vunpack.c.h.b16 %v3058
        %v4239 = vunpack.c.l.b16 %v3059
        %v4240 = vunpack.c.h.b16 %v3059
        %v4241 = vunpack.c.l.b16 %v3060
        %v4242 = vunpack.c.l.b16 %v3061
        %v4243 = vunpack.c.h.b16 %v3061
        %v4244 = vunpack.c.l.b16 %v3062
        %v4245 = vunpack.c.h.b16 %v3062
        %v4246 = vunpack.c.l.b16 %v3063
        %v4247 = vunpack.c.h.b16 %v3063
        %v4248 = vunpack.c.l.b16 %v3064
        %v4249 = vunpack.c.l.b16 %v3065
        %v4250 = vunpack.c.h.b16 %v3065
        %v4251 = vunpack.c.l.b16 %v3066
        %v4252 = vunpack.c.h.b16 %v3066
        %v4253 = vunpack.c.l.b16 %v3067
        %v4254 = vunpack.c.h.b16 %v3067
        %v4255 = vunpack.c.l.b16 %v3068
        %v4256 = vunpack.c.l.b16 %v3069
        %v4257 = vunpack.c.h.b16 %v3069
        %v4258 = vunpack.c.l.b16 %v3070
        %v4259 = vunpack.c.h.b16 %v3070
        %v4260 = vunpack.c.l.b16 %v3071
        %v4261 = vunpack.c.h.b16 %v3071
        %v4262 = vunpack.c.l.b16 %v3072
        %v4263 = vunpack.c.l.b16 %v3073
        %v4264 = vunpack.c.h.b16 %v3073
        %v4265 = vunpack.c.l.b16 %v3074
        %v4266 = vunpack.c.h.b16 %v3074
        %v4267 = vunpack.c.l.b16 %v3075
        %v4268 = vunpack.c.h.b16 %v3075
        %v4269 = vunpack.c.l.b16 %v3076
        %v4270 = vunpack.c.l.b16 %v3077
        %v4271 = vunpack.c.h.b16 %v3077
        %v4272 = vunpack.c.l.b16 %v3078
        %v4273 = vunpack.c.h.b16 %v3078
        %v4274 = vunpack.c.l.b16 %v3079
        %v4275 = vunpack.c.h.b16 %v3079
        %v4276 = vunpack.c.l.b16 %v3080
        %v4277 = vunpack.c.l.b16 %v3081
        %v4278 = vunpack.c.h.b16 %v3081
        %v4279 = vunpack.c.l.b16 %v3082
        %v4280 = vunpack.c.h.b16 %v3082
        %v4281 = vunpack.c.l.b16 %v3083
        %v4282 = vunpack.c.h.b16 %v3083
        %v4283 = vunpack.c.l.b16 %v3084
        %v4284 = vunpack.c.l.b16 %v3085
        %v4285 = vunpack.c.h.b16 %v3085
        %v4286 = vunpack.c.l.b16 %v3086
        %v4287 = vunpack.c.h.b16 %v3086
        %v4288 = vunpack.c.l.b16 %v3087
        %v4289 = vunpack.c.h.b16 %v3087
        %v4290 = vunpack.c.l.b16 %v3088
        %v4291 = vunpack.c.l.b16 %v3089
        %v4292 = vunpack.c.h.b16 %v3089
        %v4293 = vunpack.c.l.b16 %v3090
        %v4294 = vunpack.c.h.b16 %v3090
        %v4295 = vunpack.c.l.b16 %v3091
        %v4296 = vunpack.c.h.b16 %v3091
        %v4297 = vunpack.c.l.b16 %v3092
        %v4298 = vunpack.c.l.b16 %v3093
        %v4299 = vunpack.c.h.b16 %v3093
        %v4300 = vunpack.c.l.b16 %v3094
        %v4301 = vunpack.c.h.b16 %v3094
        %v4302 = vunpack.c.l.b16 %v3095
        %v4303 = vunpack.c.h.b16 %v3095
        %v4304 = vunpack.c.l.b16 %v3096
        %v4305 = vunpack.c.l.b16 %v3097
        %v4306 = vunpack.c.h.b16 %v3097
        %v4307 = vunpack.c.l.b16 %v3098
        %v4308 = vunpack.c.h.b16 %v3098
        %v4309 = vunpack.c.l.b16 %v3099
        %v4310 = vunpack.c.h.b16 %v3099
        %v4311 = vunpack.c.l.b16 %v3100
        %v4312 = vunpack.c.l.b16 %v3101
        %v4313 = vunpack.c.h.b16 %v3101
        %v4314 = vunpack.c.l.b16 %v3102
        %v4315 = vunpack.c.h.b16 %v3102
        %v4316 = vunpack.c.l.b16 %v3103
        %v4317 = vunpack.c.h.b16 %v3103
        %v4318 = vunpack.c.l.b16 %v3104
        %v4319 = vunpack.c.l.b16 %v3105
        %v4320 = vunpack.c.h.b16 %v3105
        %v4321 = vunpack.c.l.b16 %v3106
        %v4322 = vunpack.c.h.b16 %v3106
        %v4323 = vunpack.c.l.b16 %v3107
        %v4324 = vunpack.c.h.b16 %v3107
        %v4325 = vunpack.c.l.b16 %v3108
        %v4326 = vunpack.c.l.b16 %v3109
        %v4327 = vunpack.c.h.b16 %v3109
        %v4328 = vunpack.c.l.b16 %v3110
        %v4329 = vunpack.c.h.b16 %v3110
        %v4330 = vunpack.c.l.b16 %v3111
        %v4331 = vunpack.c.h.b16 %v3111
        %v4332 = vunpack.c.l.b16 %v3112
        %v4333 = vunpack.c.l.b16 %v3113
        %v4334 = vunpack.c.h.b16 %v3113
        %v4335 = vunpack.c.l.b16 %v3114
        %v4336 = vunpack.c.h.b16 %v3114
        %v4337 = vunpack.c.l.b16 %v3115
        %v4338 = vunpack.c.h.b16 %v3115
        %v4339 = vunpack.c.l.b16 %v3116
        %v4340 = vunpack.c.l.b16 %v3117
        %v4341 = vunpack.c.h.b16 %v3117
        %v4342 = vunpack.c.l.b16 %v3118
        %v4343 = vunpack.c.h.b16 %v3118
        %v4344 = vunpack.c.l.b16 %v3119
        %v4345 = vunpack.c.h.b16 %v3119
        %v4346 = vunpack.c.l.b16 %v3120
        %v4347 = vunpack.c.l.b16 %v3121
        %v4348 = vunpack.c.h.b16 %v3121
        %v4349 = vunpack.c.l.b16 %v3122
        %v4350 = vunpack.c.h.b16 %v3122
        %v4351 = vunpack.c.l.b16 %v3123
        %v4352 = vunpack.c.h.b16 %v3123
        %v4353 = vunpack.c.l.b16 %v3124
        %v4354 = vunpack.c.l.b16 %v3125
        %v4355 = vunpack.c.h.b16 %v3125
        %v4356 = vunpack.c.l.b16 %v3126
        %v4357 = vunpack.c.h.b16 %v3126
        %v4358 = vunpack.c.l.b16 %v3127
        %v4359 = vunpack.c.h.b16 %v3127
        %v4360 = vunpack.c.l.b16 %v3128
        %v4361 = vunpack.c.l.b16 %v3129
        %v4362 = vunpack.c.h.b16 %v3129
        %v4363 = vunpack.c.l.b16 %v3130
        %v4364 = vunpack.c.h.b16 %v3130
        %v4365 = vunpack.c.l.b16 %v3131
        %v4366 = vunpack.c.h.b16 %v3131
        %v4367 = vunpack.c.l.b16 %v3132
        %v4368 = vunpack.c.l.b16 %v3133
        %v4369 = vunpack.c.h.b16 %v3133
        %v4370 = vunpack.c.l.b16 %v3134
        %v4371 = vunpack.c.h.b16 %v3134
        %v4372 = vunpack.c.l.b16 %v3135
        %v4373 = vunpack.c.h.b16 %v3135
        %v4374 = vunpack.c.l.b16 %v3136
        %v4375 = vunpack.c.l.b16 %v3137
        %v4376 = vunpack.c.h.b16 %v3137
        %v4377 = vunpack.c.l.b16 %v3138
        %v4378 = vunpack.c.h.b16 %v3138
        %v4379 = vunpack.c.l.b16 %v3139
        %v4380 = vunpack.c.h.b16 %v3139
        %v4381 = vunpack.c.l.b16 %v3140
        %v4382 = vunpack.c.l.b16 %v3141
        %v4383 = vunpack.c.h.b16 %v3141
        %v4384 = vunpack.c.l.b16 %v3142
        %v4385 = vunpack.c.h.b16 %v3142
        %v4386 = vunpack.c.l.b16 %v3143
        %v4387 = vunpack.c.h.b16 %v3143
        %v4388 = vunpack.c.l.b16 %v3144
        %v4389 = vunpack.c.l.b16 %v3145
        %v4390 = vunpack.c.h.b16 %v3145
        %v4391 = vunpack.c.l.b16 %v3146
        %v4392 = vunpack.c.h.b16 %v3146
        %v4393 = vunpack.c.l.b16 %v3147
        %v4394 = vunpack.c.h.b16 %v3147
        %v4395 = vunpack.c.l.b16 %v3148
        %v4396 = vunpack.c.l.b16 %v3149
        %v4397 = vunpack.c.h.b16 %v3149
        %v4398 = vunpack.c.l.b16 %v3150
        %v4399 = vunpack.c.h.b16 %v3150
        %v4400 = vunpack.c.l.b16 %v3151
        %v4401 = vunpack.c.h.b16 %v3151
        %v4402 = vunpack.c.l.b16 %v3152
        %v4403 = vunpack.c.l.b16 %v3153
        %v4404 = vunpack.c.h.b16 %v3153
        %v4405 = vunpack.c.l.b16 %v3154
        %v4406 = vunpack.c.h.b16 %v3154
        %v4407 = vunpack.c.l.b16 %v3155
        %v4408 = vunpack.c.h.b16 %v3155
        %v4409 = vunpack.c.l.b16 %v3156
        %v4410 = vunpack.c.l.b16 %v3157
        %v4411 = vunpack.c.h.b16 %v3157
        %v4412 = vunpack.c.l.b16 %v3158
        %v4413 = vunpack.c.h.b16 %v3158
        %v4414 = vunpack.c.l.b16 %v3159
        %v4415 = vunpack.c.h.b16 %v3159
        %v4416 = vunpack.c.l.b16 %v3160
        %v4417 = vunpack.c.l.b16 %v3161
        %v4418 = vunpack.c.h.b16 %v3161
        %v4419 = vunpack.c.l.b16 %v3162
        %v4420 = vunpack.c.h.b16 %v3162
        %v4421 = vunpack.c.l.b16 %v3163
        %v4422 = vunpack.c.h.b16 %v3163
        %v4423 = vunpack.c.l.b16 %v3164
        %v4424 = vunpack.c.l.b16 %v3165
        %v4425 = vunpack.c.h.b16 %v3165
        %v4426 = vunpack.c.l.b16 %v3166
        %v4427 = vunpack.c.h.b16 %v3166
        %v4428 = vunpack.c.l.b16 %v3167
        %v4429 = vunpack.c.h.b16 %v3167
        %v4430 = vunpack.c.l.b16 %v3168
        %v4431 = vunpack.c.l.b16 %v3169
        %v4432 = vunpack.c.h.b16 %v3169
        %v4433 = vunpack.c.l.b16 %v3170
        %v4434 = vunpack.c.h.b16 %v3170
        %v4435 = vunpack.c.l.b16 %v3171
        %v4436 = vunpack.c.h.b16 %v3171
        %v4437 = vunpack.c.l.b16 %v3172
        %v4438 = vunpack.c.l.b16 %v3173
        %v4439 = vunpack.c.h.b16 %v3173
        %v4440 = vunpack.c.l.b16 %v3174
        %v4441 = vunpack.c.h.b16 %v3174
        %v4442 = vunpack.c.l.b16 %v3175
        %v4443 = vunpack.c.h.b16 %v3175
        %v4444 = vunpack.c.l.b16 %v3176
        %v4445 = vunpack.c.l.b16 %v3177
        %v4446 = vunpack.c.h.b16 %v3177
        %v4447 = vunpack.c.l.b16 %v3178
        %v4448 = vunpack.c.h.b16 %v3178
        %v4449 = vunpack.c.l.b16 %v3179
        %v4450 = vunpack.c.h.b16 %v3179
        %v4451 = vunpack.c.l.b16 %v3180
        %v4452 = vunpack.c.l.b16 %v3181
        %v4453 = vunpack.c.h.b16 %v3181
        %v4454 = vunpack.c.l.b16 %v3182
        %v4455 = vunpack.c.h.b16 %v3182
        %v4456 = vunpack.c.l.b16 %v3183
        %v4457 = vunpack.c.h.b16 %v3183
        %v4458 = vunpack.c.l.b16 %v3184
        %v4459 = vunpack.c.l.b16 %v3185
        %v4460 = vunpack.c.h.b16 %v3185
        %v4461 = vunpack.c.l.b16 %v3186
        %v4462 = vunpack.c.h.b16 %v3186
        %v4463 = vunpack.c.l.b16 %v3187
        %v4464 = vunpack.c.h.b16 %v3187
        %v4465 = vunpack.c.l.b16 %v3188
        %v4466 = vunpack.c.l.b16 %v3189
        %v4467 = vunpack.c.h.b16 %v3189
        %v4468 = vunpack.c.l.b16 %v3190
        %v4469 = vunpack.c.h.b16 %v3190
        %v4470 = vunpack.c.l.b16 %v3191
        %v4471 = vunpack.c.h.b16 %v3191
        %v4472 = vunpack.c.l.b16 %v3192
        %v4473 = vunpack.c.l.b16 %v3193
        %v4474 = vunpack.c.h.b16 %v3193
        %v4475 = vunpack.c.l.b16 %v3194
        %v4476 = vunpack.c.h.b16 %v3194
        %v4477 = vunpack.c.l.b16 %v3195
        %v4478 = vunpack.c.h.b16 %v3195
        %v4479 = vunpack.c.l.b16 %v3196
        %v4480 = vunpack.c.l.b16 %v3197
        %v4481 = vunpack.c.h.b16 %v3197
        %v4482 = vunpack.c.l.b16 %v3198
        %v4483 = vunpack.c.h.b16 %v3198
        %v4484 = vunpack.c.l.b16 %v3199
        %v4485 = vunpack.c.h.b16 %v3199
        %v4486 = vunpack.c.l.b16 %v3200
        %v4487 = vunpack.c.l.b16 %v3201
        %v4488 = vunpack.c.h.b16 %v3201
        %v4489 = vunpack.c.l.b16 %v3202
        %v4490 = vunpack.c.h.b16 %v3202
        %v4491 = vunpack.c.l.b16 %v3203
        %v4492 = vunpack.c.h.b16 %v3203
        %v4493 = vunpack.c.l.b16 %v3204
        %v4494 = vunpack.c.l.b16 %v3205
        %v4495 = vunpack.c.h.b16 %v3205
        %v4496 = vunpack.c.l.b16 %v3206
        %v4497 = vunpack.c.h.b16 %v3206
        %v4498 = vunpack.c.l.b16 %v3207
        %v4499 = vunpack.c.h.b16 %v3207
        %v4500 = vunpack.c.l.b16 %v3208
        %v4501 = vunpack.c.l.b16 %v3209
        %v4502 = vunpack.c.h.b16 %v3209
        %v4503 = vunpack.c.l.b16 %v3210
        %v4504 = vunpack.c.h.b16 %v3210
        %v4505 = vunpack.c.l.b16 %v3211
        %v4506 = vunpack.c.h.b16 %v3211
        %v4507 = vunpack.c.l.b16 %v3212
        %v4508 = vunpack.c.l.b16 %v3213
        %v4509 = vunpack.c.h.b16 %v3213
        %v4510 = vunpack.c.l.b16 %v3214
        %v4511 = vunpack.c.h.b16 %v3214
        %v4512 = vunpack.c.l.b16 %v3215
        %v4513 = vunpack.c.h.b16 %v3215
        %v4514 = vunpack.c.l.b16 %v3216
        %v4515 = vunpack.c.l.b16 %v3217
        %v4516 = vunpack.c.h.b16 %v3217
        %v4517 = vunpack.c.l.b16 %v3218
        %v4518 = vunpack.c.h.b16 %v3218
        %v4519 = vunpack.c.l.b16 %v3219
        %v4520 = vunpack.c.h.b16 %v3219
        %v4521 = vunpack.c.l.b16 %v3220
        %v4522 = vunpack.c.l.b16 %v3221
        %v4523 = vunpack.c.h.b16 %v3221
        %v4524 = vunpack.c.l.b16 %v3222
        %v4525 = vunpack.c.h.b16 %v3222
        %v4526 = vunpack.c.l.b16 %v3223
        %v4527 = vunpack.c.h.b16 %v3223
        %v4528 = vunpack.c.l.b16 %v3224
        %v4529 = vunpack.c.l.b16 %v3225
        %v4530 = vunpack.c.h.b16 %v3225
        %v4531 = vunpack.c.l.b16 %v3226
        %v4532 = vunpack.c.h.b16 %v3226
        %v4533 = vunpack.c.l.b16 %v3227
        %v4534 = vunpack.c.h.b16 %v3227
        %v4535 = vunpack.c.l.b16 %v3228
        %v4536 = vunpack.c.l.b16 %v3229
        %v4537 = vunpack.c.h.b16 %v3229
        %v4538 = vunpack.c.l.b16 %v3230
        %v4539 = vunpack.c.h.b16 %v3230
        %v4540 = vunpack.c.l.b16 %v3231
        %v4541 = vunpack.c.h.b16 %v3231
        %v4542 = vunpack.c.l.b16 %v3232
        %v4543 = vunpack.c.l.b16 %v3233
        %v4544 = vunpack.c.h.b16 %v3233
        %v4545 = vunpack.c.l.b16 %v3234
        %v4546 = vunpack.c.h.b16 %v3234
        %v4547 = vunpack.c.l.b16 %v3235
        %v4548 = vunpack.c.h.b16 %v3235
        %v4549 = vunpack.c.l.b16 %v3236
        %v4550 = vunpack.c.l.b16 %v3237
        %v4551 = vunpack.c.h.b16 %v3237
        %v4552 = vunpack.c.l.b16 %v3238
        %v4553 = vunpack.c.h.b16 %v3238
        %v4554 = vunpack.c.l.b16 %v3239
        %v4555 = vunpack.c.h.b16 %v3239
        %v4556 = vunpack.c.l.b16 %v3240
        %v4557 = vunpack.c.l.b16 %v3241
        %v4558 = vunpack.c.h.b16 %v3241
        %v4559 = vunpack.c.l.b16 %v3242
        %v4560 = vunpack.c.h.b16 %v3242
        %v4561 = vunpack.c.l.b16 %v3243
        %v4562 = vunpack.c.h.b16 %v3243
        %v4563 = vunpack.c.l.b16 %v3244
        %v4564 = vunpack.c.l.b16 %v3245
        %v4565 = vunpack.c.h.b16 %v3245
        %v4566 = vunpack.c.l.b16 %v3246
        %v4567 = vunpack.c.h.b16 %v3246
        %v4568 = vunpack.c.l.b16 %v3247
        %v4569 = vunpack.c.h.b16 %v3247
        %v4570 = vunpack.c.l.b16 %v3248
        %v4571 = vunpack.c.l.b16 %v3249
        %v4572 = vunpack.c.h.b16 %v3249
        %v4573 = vunpack.c.l.b16 %v3250
        %v4574 = vunpack.c.h.b16 %v3250
        %v4575 = vunpack.c.l.b16 %v3251
        %v4576 = vunpack.c.h.b16 %v3251
        %v4577 = vunpack.c.l.b16 %v3252
        %v4578 = vunpack.c.l.b16 %v3253
        %v4579 = vunpack.c.h.b16 %v3253
        %v4580 = vunpack.c.l.b16 %v3254
        %v4581 = vunpack.c.h.b16 %v3254
        %v4582 = vunpack.c.l.b16 %v3255
        %v4583 = vunpack.c.h.b16 %v3255
        %v4584 = vunpack.c.l.b16 %v3256
        %v4585 = vunpack.c.l.b16 %v3257
        %v4586 = vunpack.c.h.b16 %v3257
        %v4587 = vunpack.c.l.b16 %v3258
        %v4588 = vunpack.c.h.b16 %v3258
        %v4589 = vunpack.c.l.b16 %v3259
        %v4590 = vunpack.c.h.b16 %v3259
        %v4591 = vunpack.c.l.b16 %v3260
        %v4592 = vunpack.c.l.b16 %v3261
        %v4593 = vunpack.c.h.b16 %v3261
        %v4594 = vunpack.c.l.b16 %v3262
        %v4595 = vunpack.c.h.b16 %v3262
        %v4596 = vunpack.c.l.b16 %v3263
        %v4597 = vunpack.c.h.b16 %v3263
        %v4598 = vunpack.c.l.b16 %v3264
        %v4599 = vunpack.c.l.b16 %v3265
        %v4600 = vunpack.c.h.b16 %v3265
        %v4601 = vunpack.c.l.b16 %v3266
        %v4602 = vunpack.c.h.b16 %v3266
        %v4603 = vunpack.c.l.b16 %v3267
        %v4604 = vunpack.c.h.b16 %v3267
        %v4605 = vunpack.c.l.b16 %v3268
        %v4606 = vunpack.c.l.b16 %v3269
        %v4607 = vunpack.c.h.b16 %v3269
        %v4608 = vunpack.c.l.b16 %v3270
        %v4609 = vunpack.c.h.b16 %v3270
        %v4610 = vunpack.c.l.b16 %v3271
        %v4611 = vunpack.c.h.b16 %v3271
        %v4612 = vunpack.c.l.b16 %v3272
        %v4613 = vunpack.c.l.b16 %v3273
        %v4614 = vunpack.c.h.b16 %v3273
        %v4615 = vunpack.c.l.b16 %v3274
        %v4616 = vunpack.c.h.b16 %v3274
        %v4617 = vunpack.c.l.b16 %v3275
        %v4618 = vunpack.c.h.b16 %v3275
        %v4619 = vunpack.c.l.b16 %v3276
        %v4620 = vunpack.c.l.b16 %v3277
        %v4621 = vunpack.c.h.b16 %v3277
        %v4622 = vunpack.c.l.b16 %v3278
        %v4623 = vunpack.c.h.b16 %v3278
        %v4624 = vunpack.c.l.b16 %v3279
        %v4625 = vunpack.c.h.b16 %v3279
        %v4626 = vunpack.c.l.b16 %v3280
        %v4627 = vunpack.c.l.b16 %v3281
        %v4628 = vunpack.c.h.b16 %v3281
        %v4629 = vunpack.c.l.b16 %v3282
        %v4630 = vunpack.c.h.b16 %v3282
        %v4631 = vunpack.c.l.b16 %v3283
        %v4632 = vunpack.c.h.b16 %v3283
        %v4633 = vunpack.c.l.b16 %v3284
        %v4634 = vunpack.c.l.b16 %v3285
        %v4635 = vunpack.c.h.b16 %v3285
        %v4636 = vunpack.c.l.b16 %v3286
        %v4637 = vunpack.c.h.b16 %v3286
        %v4638 = vunpack.c.l.b16 %v3287
        %v4639 = vunpack.c.h.b16 %v3287
        %v4640 = vunpack.c.l.b16 %v3288
        %v4641 = vunpack.c.l.b16 %v3289
        %v4642 = vunpack.c.h.b16 %v3289
        %v4643 = vunpack.c.l.b16 %v3290
        %v4644 = vunpack.c.h.b16 %v3290
        %v4645 = vunpack.c.l.b16 %v3291
        %v4646 = vunpack.c.h.b16 %v3291
        %v4647 = vunpack.c.l.b16 %v3292
        %v4648 = vunpack.c.l.b16 %v3293
        %v4649 = vunpack.c.h.b16 %v3293
        %v4650 = vunpack.c.l.b16 %v3294
        %v4651 = vunpack.c.h.b16 %v3294
        %v4652 = vunpack.c.l.b16 %v3295
        %v4653 = vunpack.c.h.b16 %v3295
        %v4654 = vunpack.c.l.b16 %v3296
        %v4655 = vunpack.c.l.b16 %v3297
        %v4656 = vunpack.c.h.b16 %v3297
        %v4657 = vunpack.c.l.b16 %v3298
        %v4658 = vunpack.c.h.b16 %v3298
        %v4659 = vunpack.c.l.b16 %v3299
        %v4660 = vunpack.c.h.b16 %v3299
        %v4661 = vunpack.c.l.b16 %v3300
        %v4662 = vunpack.c.l.b16 %v3301
        %v4663 = vunpack.c.h.b16 %v3301
        %v4664 = vunpack.c.l.b16 %v3302
        %v4665 = vunpack.c.h.b16 %v3302
        %v4666 = vunpack.c.l.b16 %v3303
        %v4667 = vunpack.c.h.b16 %v3303
        %v4668 = vunpack.c.l.b16 %v3304
        %v4669 = vunpack.c.l.b16 %v3305
        %v4670 = vunpack.c.h.b16 %v3305
        %v4671 = vunpack.c.l.b16 %v3306
        %v4672 = vunpack.c.h.b16 %v3306
        %v4673 = vunpack.c.l.b16 %v3307
        %v4674 = vunpack.c.h.b16 %v3307
        %v4675 = vunpack.c.l.b16 %v3308
        %v4676 = vunpack.c.l.b16 %v3309
        %v4677 = vunpack.c.h.b16 %v3309
        %v4678 = vunpack.c.l.b16 %v3310
        %v4679 = vunpack.c.h.b16 %v3310
        %v4680 = vunpack.c.l.b16 %v3311
        %v4681 = vunpack.c.h.b16 %v3311
        %v4682 = vunpack.c.l.b16 %v3312
        %v4683 = vunpack.c.l.b16 %v3313
        %v4684 = vunpack.c.h.b16 %v3313
        %v4685 = vunpack.c.l.b16 %v3314
        %v4686 = vunpack.c.h.b16 %v3314
        %v4687 = vunpack.c.l.b16 %v3315
        %v4688 = vunpack.c.h.b16 %v3315
        %v4689 = vunpack.c.l.b16 %v3316
        %v4690 = vunpack.c.l.b16 %v3317
        %v4691 = vunpack.c.h.b16 %v3317
        %v4692 = vunpack.c.l.b16 %v3318
        %v4693 = vunpack.c.h.b16 %v3318
        %v4694 = vunpack.c.l.b16 %v3319
        %v4695 = vunpack.c.h.b16 %v3319
        %v4696 = vunpack.c.l.b16 %v3320
        %v4697 = vunpack.c.l.b16 %v3321
        %v4698 = vunpack.c.h.b16 %v3321
        %v4699 = vunpack.c.l.b16 %v3322
        %v4700 = vunpack.c.h.b16 %v3322
        %v4701 = vunpack.c.l.b16 %v3323
        %v4702 = vunpack.c.h.b16 %v3323
        %v4703 = vunpack.c.l.b16 %v3324
        %v4704 = vunpack.c.l.b16 %v3325
        %v4705 = vunpack.c.h.b16 %v3325
        %v4706 = vunpack.c.l.b16 %v3326
        %v4707 = vunpack.c.h.b16 %v3326
        %v4708 = vunpack.c.l.b16 %v3327
        %v4709 = vunpack.c.h.b16 %v3327
        %v4710 = vunpack.c.l.b16 %v3328
        %v4711 = vunpack.c.l.b16 %v3329
        %v4712 = vunpack.c.h.b16 %v3329
        %v4713 = vunpack.c.l.b16 %v3330
        %v4714 = vunpack.c.h.b16 %v3330
        %v4715 = vunpack.c.l.b16 %v3331
        %v4716 = vunpack.c.h.b16 %v3331
        %v4717 = vunpack.c.l.b16 %v3332
        %v4718 = vunpack.c.l.b16 %v3333
        %v4719 = vunpack.c.h.b16 %v3333
        %v4720 = vunpack.c.l.b16 %v3334
        %v4721 = vunpack.c.h.b16 %v3334
        %v4722 = vunpack.c.l.b16 %v3335
        %v4723 = vunpack.c.h.b16 %v3335
        %v4724 = vunpack.c.l.b16 %v3336
        %v4725 = vunpack.c.l.b16 %v3337
        %v4726 = vunpack.c.h.b16 %v3337
        %v4727 = vunpack.c.l.b16 %v3338
        %v4728 = vunpack.c.h.b16 %v3338
        %v4729 = vunpack.c.l.b16 %v3339
        %v4730 = vunpack.c.h.b16 %v3339
        %v4731 = vunpack.c.l.b16 %v3340
        %v4732 = vunpack.c.l.b16 %v3341
        %v4733 = vunpack.c.h.b16 %v3341
        %v4734 = vunpack.c.l.b16 %v3342
        %v4735 = vunpack.c.h.b16 %v3342
        %v4736 = vunpack.c.l.b16 %v3343
        %v4737 = vunpack.c.h.b16 %v3343
        %v4738 = vunpack.c.l.b16 %v3344
        %v4739 = vunpack.c.l.b16 %v3345
        %v4740 = vunpack.c.h.b16 %v3345
        %v4741 = vunpack.c.l.b16 %v3346
        %v4742 = vunpack.c.h.b16 %v3346
        %v4743 = vunpack.c.l.b16 %v3347
        %v4744 = vunpack.c.h.b16 %v3347
        %v4745 = vunpack.c.l.b16 %v3348
        %v4746 = vunpack.c.l.b16 %v3349
        %v4747 = vunpack.c.h.b16 %v3349
        %v4748 = vunpack.c.l.b16 %v3350
        %v4749 = vunpack.c.h.b16 %v3350
        %v4750 = vunpack.c.l.b16 %v3351
        %v4751 = vunpack.c.h.b16 %v3351
        %v4752 = vunpack.c.l.b16 %v3352
        %v4753 = vunpack.c.l.b16 %v3353
        %v4754 = vunpack.c.h.b16 %v3353
        %v4755 = vunpack.c.l.b16 %v3354
        %v4756 = vunpack.c.h.b16 %v3354
        %v4757 = vunpack.c.l.b16 %v3355
        %v4758 = vunpack.c.h.b16 %v3355
        %v4759 = vunpack.c.l.b16 %v3356
        %v4760 = vunpack.c.l.b16 %v3357
        %v4761 = vunpack.c.h.b16 %v3357
        %v4762 = vunpack.c.l.b16 %v3358
        %v4763 = vunpack.c.h.b16 %v3358
        %v4764 = vunpack.c.l.b16 %v3359
        %v4765 = vunpack.c.h.b16 %v3359
        %v4766 = vunpack.c.l.b16 %v3360
        %v4767 = vunpack.c.l.b16 %v3361
        %v4768 = vunpack.c.h.b16 %v3361
        %v4769 = vunpack.c.l.b16 %v3362
        %v4770 = vunpack.c.h.b16 %v3362
        %v4771 = vunpack.c.l.b16 %v3363
        %v4772 = vunpack.c.h.b16 %v3363
        %v4773 = vunpack.c.l.b16 %v3364
        %v4774 = vunpack.c.l.b16 %v3365
        %v4775 = vunpack.c.h.b16 %v3365
        %v4776 = vunpack.c.l.b16 %v3366
        %v4777 = vunpack.c.h.b16 %v3366
        %v4778 = vunpack.c.l.b16 %v3367
        %v4779 = vunpack.c.h.b16 %v3367
        %v4780 = vunpack.c.l.b16 %v3368
        %v4781 = vunpack.c.l.b16 %v3369
        %v4782 = vunpack.c.h.b16 %v3369
        %v4783 = vunpack.c.l.b16 %v3370
        %v4784 = vunpack.c.h.b16 %v3370
        %v4785 = vunpack.c.l.b16 %v3371
        %v4786 = vunpack.c.h.b16 %v3371
        %v4787 = vunpack.c.l.b16 %v3372
        %v4788 = vunpack.c.l.b16 %v3373
        %v4789 = vunpack.c.h.b16 %v3373
        %v4790 = vunpack.c.l.b16 %v3374
        %v4791 = vunpack.c.h.b16 %v3374
        %v4792 = vunpack.c.l.b16 %v3375
        %v4793 = vunpack.c.h.b16 %v3375
        %v4794 = vunpack.c.l.b16 %v3376
        %v4795 = vunpack.c.l.b16 %v3377
        %v4796 = vunpack.c.h.b16 %v3377
        %v4797 = vunpack.c.l.b16 %v3378
        %v4798 = vunpack.c.h.b16 %v3378
        %v4799 = vunpack.c.l.b16 %v3379
        %v4800 = vunpack.c.h.b16 %v3379
        %v4801 = vunpack.c.l.b16 %v3380
        %v4802 = vunpack.c.l.b16 %v3381
        %v4803 = vunpack.c.h.b16 %v3381
        %v4804 = vunpack.c.l.b16 %v3382
        %v4805 = vunpack.c.h.b16 %v3382
        %v4806 = vunpack.c.l.b16 %v3383
        %v4807 = vunpack.c.h.b16 %v3383
        %v4808 = vunpack.c.l.b16 %v3384
        %v4809 = vunpack.c.l.b16 %v3385
        %v4810 = vunpack.c.h.b16 %v3385
        %v4811 = vunpack.c.l.b16 %v3386
        %v4812 = vunpack.c.h.b16 %v3386
        %v4813 = vunpack.c.l.b16 %v3387
        %v4814 = vunpack.c.h.b16 %v3387
        %v4815 = vunpack.c.l.b16 %v3388
        %v4816 = vunpack.c.l.b16 %v3389
        %v4817 = vunpack.c.h.b16 %v3389
        %v4818 = vunpack.c.l.b16 %v3390
        %v4819 = vunpack.c.h.b16 %v3390
        %v4820 = vunpack.c.l.b16 %v3391
        %v4821 = vunpack.c.h.b16 %v3391
        %v4822 = vunpack.c.l.b16 %v3392
        %v4823 = vunpack.c.l.b16 %v3393
        %v4824 = vunpack.c.h.b16 %v3393
        %v4825 = vunpack.c.l.b16 %v3394
        %v4826 = vunpack.c.h.b16 %v3394
        %v4827 = vunpack.c.l.b16 %v3395
        %v4828 = vunpack.c.h.b16 %v3395
        %v4829 = vunpack.c.l.b16 %v3396
        %v4830 = vunpack.c.l.b16 %v3397
        %v4831 = vunpack.c.h.b16 %v3397
        %v4832 = vunpack.c.l.b16 %v3398
        %v4833 = vunpack.c.h.b16 %v3398
        %v4834 = vunpack.c.l.b16 %v3399
        %v4835 = vunpack.c.h.b16 %v3399
        %v4836 = vunpack.c.l.b16 %v3400
        %v4837 = vunpack.c.l.b16 %v3401
        %v4838 = vunpack.c.h.b16 %v3401
        %v4839 = vunpack.c.l.b16 %v3402
        %v4840 = vunpack.c.h.b16 %v3402
        %v4841 = vunpack.c.l.b16 %v3403
        %v4842 = vunpack.c.h.b16 %v3403
        %v4843 = vunpack.c.l.b16 %v3404
        %v4844 = vunpack.c.l.b16 %v3405
        %v4845 = vunpack.c.h.b16 %v3405
        %v4846 = vunpack.c.l.b16 %v3406
        %v4847 = vunpack.c.h.b16 %v3406
        %v4848 = vunpack.c.l.b16 %v3407
        %v4849 = vunpack.c.h.b16 %v3407
        %v4850 = vunpack.c.l.b16 %v3408
        %v4851 = vunpack.c.l.b16 %v3409
        %v4852 = vunpack.c.h.b16 %v3409
        %v4853 = vunpack.c.l.b16 %v3410
        %v4854 = vunpack.c.h.b16 %v3410
        %v4855 = vunpack.c.l.b16 %v3411
        %v4856 = vunpack.c.h.b16 %v3411
        %v4857 = vunpack.c.l.b16 %v3412
        %v4858 = vpack.c.b16 %v3969, %v3962
        %v4859 = vpack.c.b16 %v3970, %v3963
        %v4860 = vpack.c.b16 %v3971, %v3964
        %v4861 = vpack.c.b16 %v3972, %v3965
        %v4862 = vpack.c.b16 %v3973, %v3966
        %v4863 = vpack.c.b16 %v3974, %v3967
        %v4864 = vpack.c.b16 %v3975, %v3968
        %v4865 = vpack.c.b16 %v3983, %v3976
        %v4866 = vpack.c.b16 %v3984, %v3977
        %v4867 = vpack.c.b16 %v3985, %v3978
        %v4868 = vpack.c.b16 %v3986, %v3979
        %v4869 = vpack.c.b16 %v3987, %v3980
        %v4870 = vpack.c.b16 %v3988, %v3981
        %v4871 = vpack.c.b16 %v3989, %v3982
        %v4872 = vpack.c.b16 %v3997, %v3990
        %v4873 = vpack.c.b16 %v3998, %v3991
        %v4874 = vpack.c.b16 %v3999, %v3992
        %v4875 = vpack.c.b16 %v4000, %v3993
        %v4876 = vpack.c.b16 %v4001, %v3994
        %v4877 = vpack.c.b16 %v4002, %v3995
        %v4878 = vpack.c.b16 %v4003, %v3996
        %v4879 = vpack.c.b16 %v4011, %v4004
        %v4880 = vpack.c.b16 %v4012, %v4005
        %v4881 = vpack.c.b16 %v4013, %v4006
        %v4882 = vpack.c.b16 %v4014, %v4007
        %v4883 = vpack.c.b16 %v4015, %v4008
        %v4884 = vpack.c.b16 %v4016, %v4009
        %v4885 = vpack.c.b16 %v4017, %v4010
        %v4886 = vpack.c.b16 %v4025, %v4018
        %v4887 = vpack.c.b16 %v4026, %v4019
        %v4888 = vpack.c.b16 %v4027, %v4020
        %v4889 = vpack.c.b16 %v4028, %v4021
        %v4890 = vpack.c.b16 %v4029, %v4022
        %v4891 = vpack.c.b16 %v4030, %v4023
        %v4892 = vpack.c.b16 %v4031, %v4024
        %v4893 = vpack.c.b16 %v4039, %v4032
        %v4894 = vpack.c.b16 %v4040, %v4033
        %v4895 = vpack.c.b16 %v4041, %v4034
        %v4896 = vpack.c.b16 %v4042, %v4035
        %v4897 = vpack.c.b16 %v4043, %v4036
        %v4898 = vpack.c.b16 %v4044, %v4037
        %v4899 = vpack.c.b16 %v4045, %v4038
        %v4900 = vpack.c.b16 %v4053, %v4046
        %v4901 = vpack.c.b16 %v4054, %v4047
        %v4902 = vpack.c.b16 %v4055, %v4048
        %v4903 = vpack.c.b16 %v4056, %v4049
        %v4904 = vpack.c.b16 %v4057, %v4050
        %v4905 = vpack.c.b16 %v4058, %v4051
        %v4906 = vpack.c.b16 %v4059, %v4052
        %v4907 = vpack.c.b16 %v4067, %v4060
        %v4908 = vpack.c.b16 %v4068, %v4061
        %v4909 = vpack.c.b16 %v4069, %v4062
        %v4910 = vpack.c.b16 %v4070, %v4063
        %v4911 = vpack.c.b16 %v4071, %v4064
        %v4912 = vpack.c.b16 %v4072, %v4065
        %v4913 = vpack.c.b16 %v4073, %v4066
        %v4914 = vpack.c.b16 %v4081, %v4074
        %v4915 = vpack.c.b16 %v4082, %v4075
        %v4916 = vpack.c.b16 %v4083, %v4076
        %v4917 = vpack.c.b16 %v4084, %v4077
        %v4918 = vpack.c.b16 %v4085, %v4078
        %v4919 = vpack.c.b16 %v4086, %v4079
        %v4920 = vpack.c.b16 %v4087, %v4080
        %v4921 = vpack.c.b16 %v4095, %v4088
        %v4922 = vpack.c.b16 %v4096, %v4089
        %v4923 = vpack.c.b16 %v4097, %v4090
        %v4924 = vpack.c.b16 %v4098, %v4091
        %v4925 = vpack.c.b16 %v4099, %v4092
        %v4926 = vpack.c.b16 %v4100, %v4093
        %v4927 = vpack.c.b16 %v4101, %v4094
        %v4928 = vpack.c.b16 %v4109, %v4102
        %v4929 = vpack.c.b16 %v4110, %v4103
        %v4930 = vpack.c.b16 %v4111, %v4104
        %v4931 = vpack.c.b16 %v4112, %v4105
        %v4932 = vpack.c.b16 %v4113, %v4106
        %v4933 = vpack.c.b16 %v4114, %v4107
        %v4934 = vpack.c.b16 %v4115, %v4108
        %v4935 = vpack.c.b16 %v4123, %v4116
        %v4936 = vpack.c.b16 %v4124, %v4117
        %v4937 = vpack.c.b16 %v4125, %v4118
        %v4938 = vpack.c.b16 %v4126, %v4119
        %v4939 = vpack.c.b16 %v4127, %v4120
        %v4940 = vpack.c.b16 %v4128, %v4121
        %v4941 = vpack.c.b16 %v4129, %v4122
        %v4942 = vpack.c.b16 %v4137, %v4130
        %v4943 = vpack.c.b16 %v4138, %v4131
        %v4944 = vpack.c.b16 %v4139, %v4132
        %v4945 = vpack.c.b16 %v4140, %v4133
        %v4946 = vpack.c.b16 %v4141, %v4134
        %v4947 = vpack.c.b16 %v4142, %v4135
        %v4948 = vpack.c.b16 %v4143, %v4136
        %v4949 = vpack.c.b16 %v4151, %v4144
        %v4950 = vpack.c.b16 %v4152, %v4145
        %v4951 = vpack.c.b16 %v4153, %v4146
        %v4952 = vpack.c.b16 %v4154, %v4147
        %v4953 = vpack.c.b16 %v4155, %v4148
        %v4954 = vpack.c.b16 %v4156, %v4149
        %v4955 = vpack.c.b16 %v4157, %v4150
        %v4956 = vpack.c.b16 %v4165, %v4158
        %v4957 = vpack.c.b16 %v4166, %v4159
        %v4958 = vpack.c.b16 %v4167, %v4160
        %v4959 = vpack.c.b16 %v4168, %v4161
        %v4960 = vpack.c.b16 %v4169, %v4162
        %v4961 = vpack.c.b16 %v4170, %v4163
        %v4962 = vpack.c.b16 %v4171, %v4164
        %v4963 = vpack.c.b16 %v4179, %v4172
        %v4964 = vpack.c.b16 %v4180, %v4173
        %v4965 = vpack.c.b16 %v4181, %v4174
        %v4966 = vpack.c.b16 %v4182, %v4175
        %v4967 = vpack.c.b16 %v4183, %v4176
        %v4968 = vpack.c.b16 %v4184, %v4177
        %v4969 = vpack.c.b16 %v4185, %v4178
        %v4970 = vpack.c.b16 %v4193, %v4186
        %v4971 = vpack.c.b16 %v4194, %v4187
        %v4972 = vpack.c.b16 %v4195, %v4188
        %v4973 = vpack.c.b16 %v4196, %v4189
        %v4974 = vpack.c.b16 %v4197, %v4190
        %v4975 = vpack.c.b16 %v4198, %v4191
        %v4976 = vpack.c.b16 %v4199, %v4192
        %v4977 = vpack.c.b16 %v4207, %v4200
        %v4978 = vpack.c.b16 %v4208, %v4201
        %v4979 = vpack.c.b16 %v4209, %v4202
        %v4980 = vpack.c.b16 %v4210, %v4203
        %v4981 = vpack.c.b16 %v4211, %v4204
        %v4982 = vpack.c.b16 %v4212, %v4205
        %v4983 = vpack.c.b16 %v4213, %v4206
        %v4984 = vpack.c.b16 %v4221, %v4214
        %v4985 = vpack.c.b16 %v4222, %v4215
        %v4986 = vpack.c.b16 %v4223, %v4216
        %v4987 = vpack.c.b16 %v4224, %v4217
        %v4988 = vpack.c.b16 %v4225, %v4218
        %v4989 = vpack.c.b16 %v4226, %v4219
        %v4990 = vpack.c.b16 %v4227, %v4220
        %v4991 = vpack.c.b16 %v4235, %v4228
        %v4992 = vpack.c.b16 %v4236, %v4229
        %v4993 = vpack.c.b16 %v4237, %v4230
        %v4994 = vpack.c.b16 %v4238, %v4231
        %v4995 = vpack.c.b16 %v4239, %v4232
        %v4996 = vpack.c.b16 %v4240, %v4233
        %v4997 = vpack.c.b16 %v4241, %v4234
        %v4998 = vpack.c.b16 %v4249, %v4242
        %v4999 = vpack.c.b16 %v4250, %v4243
        %v5000 = vpack.c.b16 %v4251, %v4244
        %v5001 = vpack.c.b16 %v4252, %v4245
        %v5002 = vpack.c.b16 %v4253, %v4246
        %v5003 = vpack.c.b16 %v4254, %v4247
        %v5004 = vpack.c.b16 %v4255, %v4248
        %v5005 = vpack.c.b16 %v4263, %v4256
        %v5006 = vpack.c.b16 %v4264, %v4257
        %v5007 = vpack.c.b16 %v4265, %v4258
        %v5008 = vpack.c.b16 %v4266, %v4259
        %v5009 = vpack.c.b16 %v4267, %v4260
        %v5010 = vpack.c.b16 %v4268, %v4261
        %v5011 = vpack.c.b16 %v4269, %v4262
        %v5012 = vpack.c.b16 %v4277, %v4270
        %v5013 = vpack.c.b16 %v4278, %v4271
        %v5014 = vpack.c.b16 %v4279, %v4272
        %v5015 = vpack.c.b16 %v4280, %v4273
        %v5016 = vpack.c.b16 %v4281, %v4274
        %v5017 = vpack.c.b16 %v4282, %v4275
        %v5018 = vpack.c.b16 %v4283, %v4276
        %v5019 = vpack.c.b16 %v4291, %v4284
        %v5020 = vpack.c.b16 %v4292, %v4285
        %v5021 = vpack.c.b16 %v4293, %v4286
        %v5022 = vpack.c.b16 %v4294, %v4287
        %v5023 = vpack.c.b16 %v4295, %v4288
        %v5024 = vpack.c.b16 %v4296, %v4289
        %v5025 = vpack.c.b16 %v4297, %v4290
        %v5026 = vpack.c.b16 %v4305, %v4298
        %v5027 = vpack.c.b16 %v4306, %v4299
        %v5028 = vpack.c.b16 %v4307, %v4300
        %v5029 = vpack.c.b16 %v4308, %v4301
        %v5030 = vpack.c.b16 %v4309, %v4302
        %v5031 = vpack.c.b16 %v4310, %v4303
        %v5032 = vpack.c.b16 %v4311, %v4304
        %v5033 = vpack.c.b16 %v4319, %v4312
        %v5034 = vpack.c.b16 %v4320, %v4313
        %v5035 = vpack.c.b16 %v4321, %v4314
        %v5036 = vpack.c.b16 %v4322, %v4315
        %v5037 = vpack.c.b16 %v4323, %v4316
        %v5038 = vpack.c.b16 %v4324, %v4317
        %v5039 = vpack.c.b16 %v4325, %v4318
        %v5040 = vpack.c.b16 %v4333, %v4326
        %v5041 = vpack.c.b16 %v4334, %v4327
        %v5042 = vpack.c.b16 %v4335, %v4328
        %v5043 = vpack.c.b16 %v4336, %v4329
        %v5044 = vpack.c.b16 %v4337, %v4330
        %v5045 = vpack.c.b16 %v4338, %v4331
        %v5046 = vpack.c.b16 %v4339, %v4332
        %v5047 = vpack.c.b16 %v4347, %v4340
        %v5048 = vpack.c.b16 %v4348, %v4341
        %v5049 = vpack.c.b16 %v4349, %v4342
        %v5050 = vpack.c.b16 %v4350, %v4343
        %v5051 = vpack.c.b16 %v4351, %v4344
        %v5052 = vpack.c.b16 %v4352, %v4345
        %v5053 = vpack.c.b16 %v4353, %v4346
        %v5054 = vpack.c.b16 %v4361, %v4354
        %v5055 = vpack.c.b16 %v4362, %v4355
        %v5056 = vpack.c.b16 %v4363, %v4356
        %v5057 = vpack.c.b16 %v4364, %v4357
        %v5058 = vpack.c.b16 %v4365, %v4358
        %v5059 = vpack.c.b16 %v4366, %v4359
        %v5060 = vpack.c.b16 %v4367, %v4360
        %v5061 = vpack.c.b16 %v4375, %v4368
        %v5062 = vpack.c.b16 %v4376, %v4369
        %v5063 = vpack.c.b16 %v4377, %v4370
        %v5064 = vpack.c.b16 %v4378, %v4371
        %v5065 = vpack.c.b16 %v4379, %v4372
        %v5066 = vpack.c.b16 %v4380, %v4373
        %v5067 = vpack.c.b16 %v4381, %v4374
        %v5068 = vpack.c.b16 %v4389, %v4382
        %v5069 = vpack.c.b16 %v4390, %v4383
        %v5070 = vpack.c.b16 %v4391, %v4384
        %v5071 = vpack.c.b16 %v4392, %v4385
        %v5072 = vpack.c.b16 %v4393, %v4386
        %v5073 = vpack.c.b16 %v4394, %v4387
        %v5074 = vpack.c.b16 %v4395, %v4388
        %v5075 = vpack.c.b16 %v4403, %v4396
        %v5076 = vpack.c.b16 %v4404, %v4397
        %v5077 = vpack.c.b16 %v4405, %v4398
        %v5078 = vpack.c.b16 %v4406, %v4399
        %v5079 = vpack.c.b16 %v4407, %v4400
        %v5080 = vpack.c.b16 %v4408, %v4401
        %v5081 = vpack.c.b16 %v4409, %v4402
        %v5082 = vpack.c.b16 %v4417, %v4410
        %v5083 = vpack.c.b16 %v4418, %v4411
        %v5084 = vpack.c.b16 %v4419, %v4412
        %v5085 = vpack.c.b16 %v4420, %v4413
        %v5086 = vpack.c.b16 %v4421, %v4414
        %v5087 = vpack.c.b16 %v4422, %v4415
        %v5088 = vpack.c.b16 %v4423, %v4416
        %v5089 = vpack.c.b16 %v4431, %v4424
        %v5090 = vpack.c.b16 %v4432, %v4425
        %v5091 = vpack.c.b16 %v4433, %v4426
        %v5092 = vpack.c.b16 %v4434, %v4427
        %v5093 = vpack.c.b16 %v4435, %v4428
        %v5094 = vpack.c.b16 %v4436, %v4429
        %v5095 = vpack.c.b16 %v4437, %v4430
        %v5096 = vpack.c.b16 %v4445, %v4438
        %v5097 = vpack.c.b16 %v4446, %v4439
        %v5098 = vpack.c.b16 %v4447, %v4440
        %v5099 = vpack.c.b16 %v4448, %v4441
        %v5100 = vpack.c.b16 %v4449, %v4442
        %v5101 = vpack.c.b16 %v4450, %v4443
        %v5102 = vpack.c.b16 %v4451, %v4444
        %v5103 = vpack.c.b16 %v4459, %v4452
        %v5104 = vpack.c.b16 %v4460, %v4453
        %v5105 = vpack.c.b16 %v4461, %v4454
        %v5106 = vpack.c.b16 %v4462, %v4455
        %v5107 = vpack.c.b16 %v4463, %v4456
        %v5108 = vpack.c.b16 %v4464, %v4457
        %v5109 = vpack.c.b16 %v4465, %v4458
        %v5110 = vpack.c.b16 %v4473, %v4466
        %v5111 = vpack.c.b16 %v4474, %v4467
        %v5112 = vpack.c.b16 %v4475, %v4468
        %v5113 = vpack.c.b16 %v4476, %v4469
        %v5114 = vpack.c.b16 %v4477, %v4470
        %v5115 = vpack.c.b16 %v4478, %v4471
        %v5116 = vpack.c.b16 %v4479, %v4472
        %v5117 = vpack.c.b16 %v4487, %v4480
        %v5118 = vpack.c.b16 %v4488, %v4481
        %v5119 = vpack.c.b16 %v4489, %v4482
        %v5120 = vpack.c.b16 %v4490, %v4483
        %v5121 = vpack.c.b16 %v4491, %v4484
        %v5122 = vpack.c.b16 %v4492, %v4485
        %v5123 = vpack.c.b16 %v4493, %v4486
        %v5124 = vpack.c.b16 %v4501, %v4494
        %v5125 = vpack.c.b16 %v4502, %v4495
        %v5126 = vpack.c.b16 %v4503, %v4496
        %v5127 = vpack.c.b16 %v4504, %v4497
        %v5128 = vpack.c.b16 %v4505, %v4498
        %v5129 = vpack.c.b16 %v4506, %v4499
        %v5130 = vpack.c.b16 %v4507, %v4500
        %v5131 = vpack.c.b16 %v4515, %v4508
        %v5132 = vpack.c.b16 %v4516, %v4509
        %v5133 = vpack.c.b16 %v4517, %v4510
        %v5134 = vpack.c.b16 %v4518, %v4511
        %v5135 = vpack.c.b16 %v4519, %v4512
        %v5136 = vpack.c.b16 %v4520, %v4513
        %v5137 = vpack.c.b16 %v4521, %v4514
        %v5138 = vpack.c.b16 %v4529, %v4522
        %v5139 = vpack.c.b16 %v4530, %v4523
        %v5140 = vpack.c.b16 %v4531, %v4524
        %v5141 = vpack.c.b16 %v4532, %v4525
        %v5142 = vpack.c.b16 %v4533, %v4526
        %v5143 = vpack.c.b16 %v4534, %v4527
        %v5144 = vpack.c.b16 %v4535, %v4528
        %v5145 = vpack.c.b16 %v4543, %v4536
        %v5146 = vpack.c.b16 %v4544, %v4537
        %v5147 = vpack.c.b16 %v4545, %v4538
        %v5148 = vpack.c.b16 %v4546, %v4539
        %v5149 = vpack.c.b16 %v4547, %v4540
        %v5150 = vpack.c.b16 %v4548, %v4541
        %v5151 = vpack.c.b16 %v4549, %v4542
        %v5152 = vpack.c.b16 %v4557, %v4550
        %v5153 = vpack.c.b16 %v4558, %v4551
        %v5154 = vpack.c.b16 %v4559, %v4552
        %v5155 = vpack.c.b16 %v4560, %v4553
        %v5156 = vpack.c.b16 %v4561, %v4554
        %v5157 = vpack.c.b16 %v4562, %v4555
        %v5158 = vpack.c.b16 %v4563, %v4556
        %v5159 = vpack.c.b16 %v4571, %v4564
        %v5160 = vpack.c.b16 %v4572, %v4565
        %v5161 = vpack.c.b16 %v4573, %v4566
        %v5162 = vpack.c.b16 %v4574, %v4567
        %v5163 = vpack.c.b16 %v4575, %v4568
        %v5164 = vpack.c.b16 %v4576, %v4569
        %v5165 = vpack.c.b16 %v4577, %v4570
        %v5166 = vpack.c.b16 %v4585, %v4578
        %v5167 = vpack.c.b16 %v4586, %v4579
        %v5168 = vpack.c.b16 %v4587, %v4580
        %v5169 = vpack.c.b16 %v4588, %v4581
        %v5170 = vpack.c.b16 %v4589, %v4582
        %v5171 = vpack.c.b16 %v4590, %v4583
        %v5172 = vpack.c.b16 %v4591, %v4584
        %v5173 = vpack.c.b16 %v4599, %v4592
        %v5174 = vpack.c.b16 %v4600, %v4593
        %v5175 = vpack.c.b16 %v4601, %v4594
        %v5176 = vpack.c.b16 %v4602, %v4595
        %v5177 = vpack.c.b16 %v4603, %v4596
        %v5178 = vpack.c.b16 %v4604, %v4597
        %v5179 = vpack.c.b16 %v4605, %v4598
        %v5180 = vpack.c.b16 %v4613, %v4606
        %v5181 = vpack.c.b16 %v4614, %v4607
        %v5182 = vpack.c.b16 %v4615, %v4608
        %v5183 = vpack.c.b16 %v4616, %v4609
        %v5184 = vpack.c.b16 %v4617, %v4610
        %v5185 = vpack.c.b16 %v4618, %v4611
        %v5186 = vpack.c.b16 %v4619, %v4612
        %v5187 = vpack.c.b16 %v4627, %v4620
        %v5188 = vpack.c.b16 %v4628, %v4621
        %v5189 = vpack.c.b16 %v4629, %v4622
        %v5190 = vpack.c.b16 %v4630, %v4623
        %v5191 = vpack.c.b16 %v4631, %v4624
        %v5192 = vpack.c.b16 %v4632, %v4625
        %v5193 = vpack.c.b16 %v4633, %v4626
        %v5194 = vpack.c.b16 %v4641, %v4634
        %v5195 = vpack.c.b16 %v4642, %v4635
        %v5196 = vpack.c.b16 %v4643, %v4636
        %v5197 = vpack.c.b16 %v4644, %v4637
        %v5198 = vpack.c.b16 %v4645, %v4638
        %v5199 = vpack.c.b16 %v4646, %v4639
        %v5200 = vpack.c.b16 %v4647, %v4640
        %v5201 = vpack.c.b16 %v4655, %v4648
        %v5202 = vpack.c.b16 %v4656, %v4649
        %v5203 = vpack.c.b16 %v4657, %v4650
        %v5204 = vpack.c.b16 %v4658, %v4651
        %v5205 = vpack.c.b16 %v4659, %v4652
        %v5206 = vpack.c.b16 %v4660, %v4653
        %v5207 = vpack.c.b16 %v4661, %v4654
        %v5208 = vpack.c.b16 %v4669, %v4662
        %v5209 = vpack.c.b16 %v4670, %v4663
        %v5210 = vpack.c.b16 %v4671, %v4664
        %v5211 = vpack.c.b16 %v4672, %v4665
        %v5212 = vpack.c.b16 %v4673, %v4666
        %v5213 = vpack.c.b16 %v4674, %v4667
        %v5214 = vpack.c.b16 %v4675, %v4668
        %v5215 = vpack.c.b16 %v4683, %v4676
        %v5216 = vpack.c.b16 %v4684, %v4677
        %v5217 = vpack.c.b16 %v4685, %v4678
        %v5218 = vpack.c.b16 %v4686, %v4679
        %v5219 = vpack.c.b16 %v4687, %v4680
        %v5220 = vpack.c.b16 %v4688, %v4681
        %v5221 = vpack.c.b16 %v4689, %v4682
        %v5222 = vpack.c.b16 %v4697, %v4690
        %v5223 = vpack.c.b16 %v4698, %v4691
        %v5224 = vpack.c.b16 %v4699, %v4692
        %v5225 = vpack.c.b16 %v4700, %v4693
        %v5226 = vpack.c.b16 %v4701, %v4694
        %v5227 = vpack.c.b16 %v4702, %v4695
        %v5228 = vpack.c.b16 %v4703, %v4696
        %v5229 = vpack.c.b16 %v4711, %v4704
        %v5230 = vpack.c.b16 %v4712, %v4705
        %v5231 = vpack.c.b16 %v4713, %v4706
        %v5232 = vpack.c.b16 %v4714, %v4707
        %v5233 = vpack.c.b16 %v4715, %v4708
        %v5234 = vpack.c.b16 %v4716, %v4709
        %v5235 = vpack.c.b16 %v4717, %v4710
        %v5236 = vpack.c.b16 %v4725, %v4718
        %v5237 = vpack.c.b16 %v4726, %v4719
        %v5238 = vpack.c.b16 %v4727, %v4720
        %v5239 = vpack.c.b16 %v4728, %v4721
        %v5240 = vpack.c.b16 %v4729, %v4722
        %v5241 = vpack.c.b16 %v4730, %v4723
        %v5242 = vpack.c.b16 %v4731, %v4724
        %v5243 = vpack.c.b16 %v4739, %v4732
        %v5244 = vpack.c.b16 %v4740, %v4733
        %v5245 = vpack.c.b16 %v4741, %v4734
        %v5246 = vpack.c.b16 %v4742, %v4735
        %v5247 = vpack.c.b16 %v4743, %v4736
        %v5248 = vpack.c.b16 %v4744, %v4737
        %v5249 = vpack.c.b16 %v4745, %v4738
        %v5250 = vpack.c.b16 %v4753, %v4746
        %v5251 = vpack.c.b16 %v4754, %v4747
        %v5252 = vpack.c.b16 %v4755, %v4748
        %v5253 = vpack.c.b16 %v4756, %v4749
        %v5254 = vpack.c.b16 %v4757, %v4750
        %v5255 = vpack.c.b16 %v4758, %v4751
        %v5256 = vpack.c.b16 %v4759, %v4752
        %v5257 = vpack.c.b16 %v4767, %v4760
        %v5258 = vpack.c.b16 %v4768, %v4761
        %v5259 = vpack.c.b16 %v4769, %v4762
        %v5260 = vpack.c.b16 %v4770, %v4763
        %v5261 = vpack.c.b16 %v4771, %v4764
        %v5262 = vpack.c.b16 %v4772, %v4765
        %v5263 = vpack.c.b16 %v4773, %v4766
        %v5264 = vpack.c.b16 %v4781, %v4774
        %v5265 = vpack.c.b16 %v4782, %v4775
        %v5266 = vpack.c.b16 %v4783, %v4776
        %v5267 = vpack.c.b16 %v4784, %v4777
        %v5268 = vpack.c.b16 %v4785, %v4778
        %v5269 = vpack.c.b16 %v4786, %v4779
        %v5270 = vpack.c.b16 %v4787, %v4780
        %v5271 = vpack.c.b16 %v4795, %v4788
        %v5272 = vpack.c.b16 %v4796, %v4789
        %v5273 = vpack.c.b16 %v4797, %v4790
        %v5274 = vpack.c.b16 %v4798, %v4791
        %v5275 = vpack.c.b16 %v4799, %v4792
        %v5276 = vpack.c.b16 %v4800, %v4793
        %v5277 = vpack.c.b16 %v4801, %v4794
        %v5278 = vpack.c.b16 %v4809, %v4802
        %v5279 = vpack.c.b16 %v4810, %v4803
        %v5280 = vpack.c.b16 %v4811, %v4804
        %v5281 = vpack.c.b16 %v4812, %v4805
        %v5282 = vpack.c.b16 %v4813, %v4806
        %v5283 = vpack.c.b16 %v4814, %v4807
        %v5284 = vpack.c.b16 %v4815, %v4808
        %v5285 = vpack.c.b16 %v4823, %v4816
        %v5286 = vpack.c.b16 %v4824, %v4817
        %v5287 = vpack.c.b16 %v4825, %v4818
        %v5288 = vpack.c.b16 %v4826, %v4819
        %v5289 = vpack.c.b16 %v4827, %v4820
        %v5290 = vpack.c.b16 %v4828, %v4821
        %v5291 = vpack.c.b16 %v4829, %v4822
        %v5292 = vpack.c.b16 %v4837, %v4830
        %v5293 = vpack.c.b16 %v4838, %v4831
        %v5294 = vpack.c.b16 %v4839, %v4832
        %v5295 = vpack.c.b16 %v4840, %v4833
        %v5296 = vpack.c.b16 %v4841, %v4834
        %v5297 = vpack.c.b16 %v4842, %v4835
        %v5298 = vpack.c.b16 %v4843, %v4836
        %v5299 = vpack.c.b16 %v4851, %v4844
        %v5300 = vpack.c.b16 %v4852, %v4845
        %v5301 = vpack.c.b16 %v4853, %v4846
        %v5302 = vpack.c.b16 %v4854, %v4847
        %v5303 = vpack.c.b16 %v4855, %v4848
        %v5304 = vpack.c.b16 %v4856, %v4849
        %v5305 = vpack.c.b16 %v4857, %v4850
        %5754 = vmatprep.subr.bf16.mxu0 %v4859
        %5755 = vmatpush1.bf16.msra.mxu0 %v4858
        %5756 = vmatprep.subr.bf16.mxu0 %v4866
        %5757 = vmatpush1.bf16.msra.mxu0 %v4865
        %5758 = vmatprep.subr.bf16.mxu0 %v4873
        %5759 = vmatpush1.bf16.msra.mxu0 %v4872
        %5760 = vmatprep.subr.bf16.mxu0 %v4880
        %5761 = vmatpush1.bf16.msra.mxu0 %v4879
        %5762 = vmatprep.subr.bf16.mxu0 %v4887
        %5763 = vmatpush1.bf16.msra.mxu0 %v4886
        %5764 = vmatprep.subr.bf16.mxu0 %v4894
        %5765 = vmatpush1.bf16.msra.mxu0 %v4893
        %5766 = vmatprep.subr.bf16.mxu0 %v4901
        %5767 = vmatpush1.bf16.msra.mxu0 %v4900
        %5768 = vmatprep.subr.bf16.mxu0 %v4908
        %5769 = vmatpush1.bf16.msra.mxu0 %v4907
        %5770 = vmatprep.subr.bf16.mxu0 %v4915
        %5771 = vmatpush1.bf16.msra.mxu0 %v4914
        %5772 = vmatprep.subr.bf16.mxu0 %v4922
        %5773 = vmatpush1.bf16.msra.mxu0 %v4921
        %5774 = vmatprep.subr.bf16.mxu0 %v4929
        %5775 = vmatpush1.bf16.msra.mxu0 %v4928
        %5776 = vmatprep.subr.bf16.mxu0 %v4936
        %5777 = vmatpush1.bf16.msra.mxu0 %v4935
        %5778 = vmatprep.subr.bf16.mxu0 %v4943
        %5779 = vmatpush1.bf16.msra.mxu0 %v4942
        %5780 = vmatprep.subr.bf16.mxu0 %v4950
        %5781 = vmatpush1.bf16.msra.mxu0 %v4949
        %5782 = vmatprep.subr.bf16.mxu0 %v4957
        %5783 = vmatpush1.bf16.msra.mxu0 %v4956
        %5784 = vmatprep.subr.bf16.mxu0 %v4964
        %5785 = vmatpush1.bf16.msra.mxu0 %v4963
        %5786 = vmatprep.mubr.bf16.mxu0 %v2894
        %5787 = vmatmul.mubr.bf16.gmra.mrb[0].mxu0 %v2893
        %v5788 = vpop.f32.mrb[0].mxu0
        %v5789 = vadd.f32 %v3418, %v5788
        %v5790 = vpop.f32.mrb[0].mxu0
        %v5791 = vadd.f32 %v3422, %v5790
        %v5792 = vpop.f32.mrb[0].mxu0
        %v5793 = vpop.f32.mrb[0].mxu0
        %5794 = vdwg.mxu0
        %5795 = vmatprep.subr.bf16.mxu0 %v4971
        %5796 = vmatpush1.bf16.msra.mxu0 %v4970
        %5797 = vmatprep.subr.bf16.mxu0 %v4978
        %5798 = vmatpush1.bf16.msra.mxu0 %v4977
        %5799 = vmatprep.subr.bf16.mxu0 %v4985
        %5800 = vmatpush1.bf16.msra.mxu0 %v4984
        %5801 = vmatprep.subr.bf16.mxu0 %v4992
        %5802 = vmatpush1.bf16.msra.mxu0 %v4991
        %5803 = vmatprep.subr.bf16.mxu0 %v4999
        %5804 = vmatpush1.bf16.msra.mxu0 %v4998
        %5805 = vmatprep.subr.bf16.mxu0 %v5006
        %5806 = vmatpush1.bf16.msra.mxu0 %v5005
        %5807 = vmatprep.subr.bf16.mxu0 %v5013
        %5808 = vmatpush1.bf16.msra.mxu0 %v5012
        %5809 = vmatprep.subr.bf16.mxu0 %v5020
        %5810 = vmatpush1.bf16.msra.mxu0 %v5019
        %5811 = vmatprep.subr.bf16.mxu0 %v5027
        %5812 = vmatpush1.bf16.msra.mxu0 %v5026
        %5813 = vmatprep.subr.bf16.mxu0 %v5034
        %5814 = vmatpush1.bf16.msra.mxu0 %v5033
        %5815 = vmatprep.subr.bf16.mxu0 %v5041
        %5816 = vmatpush1.bf16.msra.mxu0 %v5040
        %5817 = vmatprep.subr.bf16.mxu0 %v5048
        %5818 = vmatpush1.bf16.msra.mxu0 %v5047
        %5819 = vmatprep.subr.bf16.mxu0 %v5055
        %5820 = vmatpush1.bf16.msra.mxu0 %v5054
        %5821 = vmatprep.subr.bf16.mxu0 %v5062
        %5822 = vmatpush1.bf16.msra.mxu0 %v5061
        %5823 = vmatprep.subr.bf16.mxu0 %v5069
        %5824 = vmatpush1.bf16.msra.mxu0 %v5068
        %5825 = vmatprep.subr.bf16.mxu0 %v5076
        %5826 = vmatpush1.bf16.msra.mxu0 %v5075
        %5827 = vmatprep.mubr.bf16.mxu0 %v2896
        %5828 = vmatmul.mubr.bf16.gmra.mrb[0].mxu0 %v2895
        %v5829 = vpop.f32.mrb[0].mxu0
        %v5830 = vadd.f32 %v5789, %v5829
        %v5831 = vpop.f32.mrb[0].mxu0
        %v5832 = vadd.f32 %v5791, %v5831
        %v5833 = vpop.f32.mrb[0].mxu0
        %v5834 = vpop.f32.mrb[0].mxu0
        %5835 = vdwg.mxu0
        %5836 = vmatprep.subr.bf16.mxu0 %v5083
        %5837 = vmatpush1.bf16.msra.mxu0 %v5082
        %5838 = vmatprep.subr.bf16.mxu0 %v5090
        %5839 = vmatpush1.bf16.msra.mxu0 %v5089
        %5840 = vmatprep.subr.bf16.mxu0 %v5097
        %5841 = vmatpush1.bf16.msra.mxu0 %v5096
        %5842 = vmatprep.subr.bf16.mxu0 %v5104
        %5843 = vmatpush1.bf16.msra.mxu0 %v5103
        %5844 = vmatprep.subr.bf16.mxu0 %v5111
        %5845 = vmatpush1.bf16.msra.mxu0 %v5110
        %5846 = vmatprep.subr.bf16.mxu0 %v5118
        %5847 = vmatpush1.bf16.msra.mxu0 %v5117
        %5848 = vmatprep.subr.bf16.mxu0 %v5125
        %5849 = vmatpush1.bf16.msra.mxu0 %v5124
        %5850 = vmatprep.subr.bf16.mxu0 %v5132
        %5851 = vmatpush1.bf16.msra.mxu0 %v5131
        %5852 = vmatprep.subr.bf16.mxu0 %v5139
        %5853 = vmatpush1.bf16.msra.mxu0 %v5138
        %5854 = vmatprep.subr.bf16.mxu0 %v5146
        %5855 = vmatpush1.bf16.msra.mxu0 %v5145
        %5856 = vmatprep.subr.bf16.mxu0 %v5153
        %5857 = vmatpush1.bf16.msra.mxu0 %v5152
        %5858 = vmatprep.subr.bf16.mxu0 %v5160
        %5859 = vmatpush1.bf16.msra.mxu0 %v5159
        %5860 = vmatprep.subr.bf16.mxu0 %v5167
        %5861 = vmatpush1.bf16.msra.mxu0 %v5166
        %5862 = vmatprep.subr.bf16.mxu0 %v5174
        %5863 = vmatpush1.bf16.msra.mxu0 %v5173
        %5864 = vmatprep.subr.bf16.mxu0 %v5181
        %5865 = vmatpush1.bf16.msra.mxu0 %v5180
        %5866 = vmatprep.subr.bf16.mxu0 %v5188
        %5867 = vmatpush1.bf16.msra.mxu0 %v5187
        %5868 = vmatprep.mubr.bf16.mxu0 %v2898
        %5869 = vmatmul.mubr.bf16.gmra.mrb[0].mxu0 %v2897
        %v5870 = vpop.f32.mrb[0].mxu0
        %v5871 = vadd.f32 %v5830, %v5870
        %v5872 = vpop.f32.mrb[0].mxu0
        %v5873 = vadd.f32 %v5832, %v5872
        %v5874 = vpop.f32.mrb[0].mxu0
        %v5875 = vpop.f32.mrb[0].mxu0
        %5876 = vdwg.mxu0
        %5877 = vmatprep.subr.bf16.mxu0 %v5195
        %5878 = vmatpush1.bf16.msra.mxu0 %v5194
        %5879 = vmatprep.subr.bf16.mxu0 %v5202
        %5880 = vmatpush1.bf16.msra.mxu0 %v5201
        %5881 = vmatprep.subr.bf16.mxu0 %v5209
        %5882 = vmatpush1.bf16.msra.mxu0 %v5208
        %5883 = vmatprep.subr.bf16.mxu0 %v5216
        %5884 = vmatpush1.bf16.msra.mxu0 %v5215
        %5885 = vmatprep.subr.bf16.mxu0 %v5223
        %5886 = vmatpush1.bf16.msra.mxu0 %v5222
        %5887 = vmatprep.subr.bf16.mxu0 %v5230
        %5888 = vmatpush1.bf16.msra.mxu0 %v5229
        %5889 = vmatprep.subr.bf16.mxu0 %v5237
        %5890 = vmatpush1.bf16.msra.mxu0 %v5236
        %5891 = vmatprep.subr.bf16.mxu0 %v5244
        %5892 = vmatpush1.bf16.msra.mxu0 %v5243
        %5893 = vmatprep.subr.bf16.mxu0 %v5251
        %5894 = vmatpush1.bf16.msra.mxu0 %v5250
        %5895 = vmatprep.subr.bf16.mxu0 %v5258
        %5896 = vmatpush1.bf16.msra.mxu0 %v5257
        %5897 = vmatprep.subr.bf16.mxu0 %v5265
        %5898 = vmatpush1.bf16.msra.mxu0 %v5264
        %5899 = vmatprep.subr.bf16.mxu0 %v5272
        %5900 = vmatpush1.bf16.msra.mxu0 %v5271
        %5901 = vmatprep.subr.bf16.mxu0 %v5279
        %5902 = vmatpush1.bf16.msra.mxu0 %v5278
        %5903 = vmatprep.subr.bf16.mxu0 %v5286
        %5904 = vmatpush1.bf16.msra.mxu0 %v5285
        %5905 = vmatprep.subr.bf16.mxu0 %v5293
        %5906 = vmatpush1.bf16.msra.mxu0 %v5292
        %5907 = vmatprep.subr.bf16.mxu0 %v5300
        %5908 = vmatpush1.bf16.msra.mxu0 %v5299
        %5909 = vmatprep.mubr.bf16.mxu0 %v2900
        %5910 = vmatmul.mubr.bf16.gmra.mrb[0].mxu0 %v2899
        %v5911 = vpop.f32.mrb[0].mxu0
        %v5912 = vadd.f32 %v5871, %v5911
        %v5913 = vpop.f32.mrb[0].mxu0
        %v5914 = vadd.f32 %v5873, %v5913
        %v5915 = vpop.f32.mrb[0].mxu0
        %v5916 = vpop.f32.mrb[0].mxu0
        %5917 = vdwg.mxu0
        %5918 = vmatprep.subr.bf16.mxu0 %v4861
        %5919 = vmatpush1.bf16.msra.mxu0 %v4860
        %5920 = vmatprep.subr.bf16.mxu0 %v4868
        %5921 = vmatpush1.bf16.msra.mxu0 %v4867
        %5922 = vmatprep.subr.bf16.mxu0 %v4875
        %5923 = vmatpush1.bf16.msra.mxu0 %v4874
        %5924 = vmatprep.subr.bf16.mxu0 %v4882
        %5925 = vmatpush1.bf16.msra.mxu0 %v4881
        %5926 = vmatprep.subr.bf16.mxu0 %v4889
        %5927 = vmatpush1.bf16.msra.mxu0 %v4888
        %5928 = vmatprep.subr.bf16.mxu0 %v4896
        %5929 = vmatpush1.bf16.msra.mxu0 %v4895
        %5930 = vmatprep.subr.bf16.mxu0 %v4903
        %5931 = vmatpush1.bf16.msra.mxu0 %v4902
        %5932 = vmatprep.subr.bf16.mxu0 %v4910
        %5933 = vmatpush1.bf16.msra.mxu0 %v4909
        %5934 = vmatprep.subr.bf16.mxu0 %v4917
        %5935 = vmatpush1.bf16.msra.mxu0 %v4916
        %5936 = vmatprep.subr.bf16.mxu0 %v4924
        %5937 = vmatpush1.bf16.msra.mxu0 %v4923
        %5938 = vmatprep.subr.bf16.mxu0 %v4931
        %5939 = vmatpush1.bf16.msra.mxu0 %v4930
        %5940 = vmatprep.subr.bf16.mxu0 %v4938
        %5941 = vmatpush1.bf16.msra.mxu0 %v4937
        %5942 = vmatprep.subr.bf16.mxu0 %v4945
        %5943 = vmatpush1.bf16.msra.mxu0 %v4944
        %5944 = vmatprep.subr.bf16.mxu0 %v4952
        %5945 = vmatpush1.bf16.msra.mxu0 %v4951
        %5946 = vmatprep.subr.bf16.mxu0 %v4959
        %5947 = vmatpush1.bf16.msra.mxu0 %v4958
        %5948 = vmatprep.subr.bf16.mxu0 %v4966
        %5949 = vmatpush1.bf16.msra.mxu0 %v4965
        %5950 = vmatprep.mubr.bf16.mxu0 %v2894
        %5951 = vmatmul.mubr.bf16.gmra.mrb[0].mxu0 %v2893
        %v5952 = vpop.f32.mrb[0].mxu0
        %v5953 = vadd.f32 %v3426, %v5952
        %v5954 = vpop.f32.mrb[0].mxu0
        %v5955 = vadd.f32 %v3430, %v5954
        %v5956 = vpop.f32.mrb[0].mxu0
        %v5957 = vpop.f32.mrb[0].mxu0
        %5958 = vdwg.mxu0
        %5959 = vmatprep.subr.bf16.mxu0 %v4973
        %5960 = vmatpush1.bf16.msra.mxu0 %v4972
        %5961 = vmatprep.subr.bf16.mxu0 %v4980
        %5962 = vmatpush1.bf16.msra.mxu0 %v4979
        %5963 = vmatprep.subr.bf16.mxu0 %v4987
        %5964 = vmatpush1.bf16.msra.mxu0 %v4986
        %5965 = vmatprep.subr.bf16.mxu0 %v4994
        %5966 = vmatpush1.bf16.msra.mxu0 %v4993
        %5967 = vmatprep.subr.bf16.mxu0 %v5001
        %5968 = vmatpush1.bf16.msra.mxu0 %v5000
        %5969 = vmatprep.subr.bf16.mxu0 %v5008
        %5970 = vmatpush1.bf16.msra.mxu0 %v5007
        %5971 = vmatprep.subr.bf16.mxu0 %v5015
        %5972 = vmatpush1.bf16.msra.mxu0 %v5014
        %5973 = vmatprep.subr.bf16.mxu0 %v5022
        %5974 = vmatpush1.bf16.msra.mxu0 %v5021
        %5975 = vmatprep.subr.bf16.mxu0 %v5029
        %5976 = vmatpush1.bf16.msra.mxu0 %v5028
        %5977 = vmatprep.subr.bf16.mxu0 %v5036
        %5978 = vmatpush1.bf16.msra.mxu0 %v5035
        %5979 = vmatprep.subr.bf16.mxu0 %v5043
        %5980 = vmatpush1.bf16.msra.mxu0 %v5042
        %5981 = vmatprep.subr.bf16.mxu0 %v5050
        %5982 = vmatpush1.bf16.msra.mxu0 %v5049
        %5983 = vmatprep.subr.bf16.mxu0 %v5057
        %5984 = vmatpush1.bf16.msra.mxu0 %v5056
        %5985 = vmatprep.subr.bf16.mxu0 %v5064
        %5986 = vmatpush1.bf16.msra.mxu0 %v5063
        %5987 = vmatprep.subr.bf16.mxu0 %v5071
        %5988 = vmatpush1.bf16.msra.mxu0 %v5070
        %5989 = vmatprep.subr.bf16.mxu0 %v5078
        %5990 = vmatpush1.bf16.msra.mxu0 %v5077
        %5991 = vmatprep.mubr.bf16.mxu0 %v2896
        %5992 = vmatmul.mubr.bf16.gmra.mrb[0].mxu0 %v2895
        %v5993 = vpop.f32.mrb[0].mxu0
        %v5994 = vadd.f32 %v5953, %v5993
        %v5995 = vpop.f32.mrb[0].mxu0
        %v5996 = vadd.f32 %v5955, %v5995
        %v5997 = vpop.f32.mrb[0].mxu0
        %v5998 = vpop.f32.mrb[0].mxu0
        %5999 = vdwg.mxu0
        %6000 = vmatprep.subr.bf16.mxu0 %v5085
        %6001 = vmatpush1.bf16.msra.mxu0 %v5084
        %6002 = vmatprep.subr.bf16.mxu0 %v5092
        %6003 = vmatpush1.bf16.msra.mxu0 %v5091
        %6004 = vmatprep.subr.bf16.mxu0 %v5099
        %6005 = vmatpush1.bf16.msra.mxu0 %v5098
        %6006 = vmatprep.subr.bf16.mxu0 %v5106
        %6007 = vmatpush1.bf16.msra.mxu0 %v5105
        %6008 = vmatprep.subr.bf16.mxu0 %v5113
        %6009 = vmatpush1.bf16.msra.mxu0 %v5112
        %6010 = vmatprep.subr.bf16.mxu0 %v5120
        %6011 = vmatpush1.bf16.msra.mxu0 %v5119
        %6012 = vmatprep.subr.bf16.mxu0 %v5127
        %6013 = vmatpush1.bf16.msra.mxu0 %v5126
        %6014 = vmatprep.subr.bf16.mxu0 %v5134
        %6015 = vmatpush1.bf16.msra.mxu0 %v5133
        %6016 = vmatprep.subr.bf16.mxu0 %v5141
        %6017 = vmatpush1.bf16.msra.mxu0 %v5140
        %6018 = vmatprep.subr.bf16.mxu0 %v5148
        %6019 = vmatpush1.bf16.msra.mxu0 %v5147
        %6020 = vmatprep.subr.bf16.mxu0 %v5155
        %6021 = vmatpush1.bf16.msra.mxu0 %v5154
        %6022 = vmatprep.subr.bf16.mxu0 %v5162
        %6023 = vmatpush1.bf16.msra.mxu0 %v5161
        %6024 = vmatprep.subr.bf16.mxu0 %v5169
        %6025 = vmatpush1.bf16.msra.mxu0 %v5168
        %6026 = vmatprep.subr.bf16.mxu0 %v5176
        %6027 = vmatpush1.bf16.msra.mxu0 %v5175
        %6028 = vmatprep.subr.bf16.mxu0 %v5183
        %6029 = vmatpush1.bf16.msra.mxu0 %v5182
        %6030 = vmatprep.subr.bf16.mxu0 %v5190
        %6031 = vmatpush1.bf16.msra.mxu0 %v5189
        %6032 = vmatprep.mubr.bf16.mxu0 %v2898
        %6033 = vmatmul.mubr.bf16.gmra.mrb[0].mxu0 %v2897
        %v6034 = vpop.f32.mrb[0].mxu0
        %v6035 = vadd.f32 %v5994, %v6034
        %v6036 = vpop.f32.mrb[0].mxu0
        %v6037 = vadd.f32 %v5996, %v6036
        %v6038 = vpop.f32.mrb[0].mxu0
        %v6039 = vpop.f32.mrb[0].mxu0
        %6040 = vdwg.mxu0
        %6041 = vmatprep.subr.bf16.mxu0 %v5197
        %6042 = vmatpush1.bf16.msra.mxu0 %v5196
        %6043 = vmatprep.subr.bf16.mxu0 %v5204
        %6044 = vmatpush1.bf16.msra.mxu0 %v5203
        %6045 = vmatprep.subr.bf16.mxu0 %v5211
        %6046 = vmatpush1.bf16.msra.mxu0 %v5210
        %6047 = vmatprep.subr.bf16.mxu0 %v5218
        %6048 = vmatpush1.bf16.msra.mxu0 %v5217
        %6049 = vmatprep.subr.bf16.mxu0 %v5225
        %6050 = vmatpush1.bf16.msra.mxu0 %v5224
        %6051 = vmatprep.subr.bf16.mxu0 %v5232
        %6052 = vmatpush1.bf16.msra.mxu0 %v5231
        %6053 = vmatprep.subr.bf16.mxu0 %v5239
        %6054 = vmatpush1.bf16.msra.mxu0 %v5238
        %6055 = vmatprep.subr.bf16.mxu0 %v5246
        %6056 = vmatpush1.bf16.msra.mxu0 %v5245
        %6057 = vmatprep.subr.bf16.mxu0 %v5253
        %6058 = vmatpush1.bf16.msra.mxu0 %v5252
        %6059 = vmatprep.subr.bf16.mxu0 %v5260
        %6060 = vmatpush1.bf16.msra.mxu0 %v5259
        %6061 = vmatprep.subr.bf16.mxu0 %v5267
        %6062 = vmatpush1.bf16.msra.mxu0 %v5266
        %6063 = vmatprep.subr.bf16.mxu0 %v5274
        %6064 = vmatpush1.bf16.msra.mxu0 %v5273
        %6065 = vmatprep.subr.bf16.mxu0 %v5281
        %6066 = vmatpush1.bf16.msra.mxu0 %v5280
        %6067 = vmatprep.subr.bf16.mxu0 %v5288
        %6068 = vmatpush1.bf16.msra.mxu0 %v5287
        %6069 = vmatprep.subr.bf16.mxu0 %v5295
        %6070 = vmatpush1.bf16.msra.mxu0 %v5294
        %6071 = vmatprep.subr.bf16.mxu0 %v5302
        %6072 = vmatpush1.bf16.msra.mxu0 %v5301
        %6073 = vmatprep.mubr.bf16.mxu0 %v2900
        %6074 = vmatmul.mubr.bf16.gmra.mrb[0].mxu0 %v2899
        %v6075 = vpop.f32.mrb[0].mxu0
        %v6076 = vadd.f32 %v6035, %v6075
        %v6077 = vpop.f32.mrb[0].mxu0
        %v6078 = vadd.f32 %v6037, %v6077
        %v6079 = vpop.f32.mrb[0].mxu0
        %v6080 = vpop.f32.mrb[0].mxu0
        %6081 = vdwg.mxu0
        %6082 = vmatprep.subr.bf16.mxu0 %v4863
        %6083 = vmatpush1.bf16.msra.mxu0 %v4862
        %6084 = vmatprep.subr.bf16.mxu0 %v4870
        %6085 = vmatpush1.bf16.msra.mxu0 %v4869
        %6086 = vmatprep.subr.bf16.mxu0 %v4877
        %6087 = vmatpush1.bf16.msra.mxu0 %v4876
        %6088 = vmatprep.subr.bf16.mxu0 %v4884
        %6089 = vmatpush1.bf16.msra.mxu0 %v4883
        %6090 = vmatprep.subr.bf16.mxu0 %v4891
        %6091 = vmatpush1.bf16.msra.mxu0 %v4890
        %6092 = vmatprep.subr.bf16.mxu0 %v4898
        %6093 = vmatpush1.bf16.msra.mxu0 %v4897
        %6094 = vmatprep.subr.bf16.mxu0 %v4905
        %6095 = vmatpush1.bf16.msra.mxu0 %v4904
        %6096 = vmatprep.subr.bf16.mxu0 %v4912
        %6097 = vmatpush1.bf16.msra.mxu0 %v4911
        %6098 = vmatprep.subr.bf16.mxu0 %v4919
        %6099 = vmatpush1.bf16.msra.mxu0 %v4918
        %6100 = vmatprep.subr.bf16.mxu0 %v4926
        %6101 = vmatpush1.bf16.msra.mxu0 %v4925
        %6102 = vmatprep.subr.bf16.mxu0 %v4933
        %6103 = vmatpush1.bf16.msra.mxu0 %v4932
        %6104 = vmatprep.subr.bf16.mxu0 %v4940
        %6105 = vmatpush1.bf16.msra.mxu0 %v4939
        %6106 = vmatprep.subr.bf16.mxu0 %v4947
        %6107 = vmatpush1.bf16.msra.mxu0 %v4946
        %6108 = vmatprep.subr.bf16.mxu0 %v4954
        %6109 = vmatpush1.bf16.msra.mxu0 %v4953
        %6110 = vmatprep.subr.bf16.mxu0 %v4961
        %6111 = vmatpush1.bf16.msra.mxu0 %v4960
        %6112 = vmatprep.subr.bf16.mxu0 %v4968
        %6113 = vmatpush1.bf16.msra.mxu0 %v4967
        %6114 = vmatprep.mubr.bf16.mxu0 %v2894
        %6115 = vmatmul.mubr.bf16.gmra.mrb[0].mxu0 %v2893
        %v6116 = vpop.f32.mrb[0].mxu0
        %v6117 = vadd.f32 %v3434, %v6116
        %v6118 = vpop.f32.mrb[0].mxu0
        %v6119 = vadd.f32 %v3438, %v6118
        %v6120 = vpop.f32.mrb[0].mxu0
        %v6121 = vpop.f32.mrb[0].mxu0
        %6122 = vdwg.mxu0
        %6123 = vmatprep.subr.bf16.mxu0 %v4975
        %6124 = vmatpush1.bf16.msra.mxu0 %v4974
        %6125 = vmatprep.subr.bf16.mxu0 %v4982
        %6126 = vmatpush1.bf16.msra.mxu0 %v4981
        %6127 = vmatprep.subr.bf16.mxu0 %v4989
        %6128 = vmatpush1.bf16.msra.mxu0 %v4988
        %6129 = vmatprep.subr.bf16.mxu0 %v4996
        %6130 = vmatpush1.bf16.msra.mxu0 %v4995
        %6131 = vmatprep.subr.bf16.mxu0 %v5003
        %6132 = vmatpush1.bf16.msra.mxu0 %v5002
        %6133 = vmatprep.subr.bf16.mxu0 %v5010
        %6134 = vmatpush1.bf16.msra.mxu0 %v5009
        %6135 = vmatprep.subr.bf16.mxu0 %v5017
        %6136 = vmatpush1.bf16.msra.mxu0 %v5016
        %6137 = vmatprep.subr.bf16.mxu0 %v5024
        %6138 = vmatpush1.bf16.msra.mxu0 %v5023
        %6139 = vmatprep.subr.bf16.mxu0 %v5031
        %6140 = vmatpush1.bf16.msra.mxu0 %v5030
        %6141 = vmatprep.subr.bf16.mxu0 %v5038
        %6142 = vmatpush1.bf16.msra.mxu0 %v5037
        %6143 = vmatprep.subr.bf16.mxu0 %v5045
        %6144 = vmatpush1.bf16.msra.mxu0 %v5044
        %6145 = vmatprep.subr.bf16.mxu0 %v5052
        %6146 = vmatpush1.bf16.msra.mxu0 %v5051
        %6147 = vmatprep.subr.bf16.mxu0 %v5059
        %6148 = vmatpush1.bf16.msra.mxu0 %v5058
        %6149 = vmatprep.subr.bf16.mxu0 %v5066
        %6150 = vmatpush1.bf16.msra.mxu0 %v5065
        %6151 = vmatprep.subr.bf16.mxu0 %v5073
        %6152 = vmatpush1.bf16.msra.mxu0 %v5072
        %6153 = vmatprep.subr.bf16.mxu0 %v5080
        %6154 = vmatpush1.bf16.msra.mxu0 %v5079
        %6155 = vmatprep.mubr.bf16.mxu0 %v2896
        %6156 = vmatmul.mubr.bf16.gmra.mrb[0].mxu0 %v2895
        %v6157 = vpop.f32.mrb[0].mxu0
        %v6158 = vadd.f32 %v6117, %v6157
        %v6159 = vpop.f32.mrb[0].mxu0
        %v6160 = vadd.f32 %v6119, %v6159
        %v6161 = vpop.f32.mrb[0].mxu0
        %v6162 = vpop.f32.mrb[0].mxu0
        %6163 = vdwg.mxu0
        %6164 = vmatprep.subr.bf16.mxu0 %v5087
        %6165 = vmatpush1.bf16.msra.mxu0 %v5086
        %6166 = vmatprep.subr.bf16.mxu0 %v5094
        %6167 = vmatpush1.bf16.msra.mxu0 %v5093
        %6168 = vmatprep.subr.bf16.mxu0 %v5101
        %6169 = vmatpush1.bf16.msra.mxu0 %v5100
        %6170 = vmatprep.subr.bf16.mxu0 %v5108
        %6171 = vmatpush1.bf16.msra.mxu0 %v5107
        %6172 = vmatprep.subr.bf16.mxu0 %v5115
        %6173 = vmatpush1.bf16.msra.mxu0 %v5114
        %6174 = vmatprep.subr.bf16.mxu0 %v5122
        %6175 = vmatpush1.bf16.msra.mxu0 %v5121
        %6176 = vmatprep.subr.bf16.mxu0 %v5129
        %6177 = vmatpush1.bf16.msra.mxu0 %v5128
        %6178 = vmatprep.subr.bf16.mxu0 %v5136
        %6179 = vmatpush1.bf16.msra.mxu0 %v5135
        %6180 = vmatprep.subr.bf16.mxu0 %v5143
        %6181 = vmatpush1.bf16.msra.mxu0 %v5142
        %6182 = vmatprep.subr.bf16.mxu0 %v5150
        %6183 = vmatpush1.bf16.msra.mxu0 %v5149
        %6184 = vmatprep.subr.bf16.mxu0 %v5157
        %6185 = vmatpush1.bf16.msra.mxu0 %v5156
        %6186 = vmatprep.subr.bf16.mxu0 %v5164
        %6187 = vmatpush1.bf16.msra.mxu0 %v5163
        %6188 = vmatprep.subr.bf16.mxu0 %v5171
        %6189 = vmatpush1.bf16.msra.mxu0 %v5170
        %6190 = vmatprep.subr.bf16.mxu0 %v5178
        %6191 = vmatpush1.bf16.msra.mxu0 %v5177
        %6192 = vmatprep.subr.bf16.mxu0 %v5185
        %6193 = vmatpush1.bf16.msra.mxu0 %v5184
        %6194 = vmatprep.subr.bf16.mxu0 %v5192
        %6195 = vmatpush1.bf16.msra.mxu0 %v5191
        %6196 = vmatprep.mubr.bf16.mxu0 %v2898
        %6197 = vmatmul.mubr.bf16.gmra.mrb[0].mxu0 %v2897
        %v6198 = vpop.f32.mrb[0].mxu0
        %v6199 = vadd.f32 %v6158, %v6198
        %v6200 = vpop.f32.mrb[0].mxu0
        %v6201 = vadd.f32 %v6160, %v6200
        %v6202 = vpop.f32.mrb[0].mxu0
        %v6203 = vpop.f32.mrb[0].mxu0
        %6204 = vdwg.mxu0
        %6205 = vmatprep.subr.bf16.mxu0 %v5199
        %6206 = vmatpush1.bf16.msra.mxu0 %v5198
        %6207 = vmatprep.subr.bf16.mxu0 %v5206
        %6208 = vmatpush1.bf16.msra.mxu0 %v5205
        %6209 = vmatprep.subr.bf16.mxu0 %v5213
        %6210 = vmatpush1.bf16.msra.mxu0 %v5212
        %6211 = vmatprep.subr.bf16.mxu0 %v5220
        %6212 = vmatpush1.bf16.msra.mxu0 %v5219
        %6213 = vmatprep.subr.bf16.mxu0 %v5227
        %6214 = vmatpush1.bf16.msra.mxu0 %v5226
        %6215 = vmatprep.subr.bf16.mxu0 %v5234
        %6216 = vmatpush1.bf16.msra.mxu0 %v5233
        %6217 = vmatprep.subr.bf16.mxu0 %v5241
        %6218 = vmatpush1.bf16.msra.mxu0 %v5240
        %6219 = vmatprep.subr.bf16.mxu0 %v5248
        %6220 = vmatpush1.bf16.msra.mxu0 %v5247
        %6221 = vmatprep.subr.bf16.mxu0 %v5255
        %6222 = vmatpush1.bf16.msra.mxu0 %v5254
        %6223 = vmatprep.subr.bf16.mxu0 %v5262
        %6224 = vmatpush1.bf16.msra.mxu0 %v5261
        %6225 = vmatprep.subr.bf16.mxu0 %v5269
        %6226 = vmatpush1.bf16.msra.mxu0 %v5268
        %6227 = vmatprep.subr.bf16.mxu0 %v5276
        %6228 = vmatpush1.bf16.msra.mxu0 %v5275
        %6229 = vmatprep.subr.bf16.mxu0 %v5283
        %6230 = vmatpush1.bf16.msra.mxu0 %v5282
        %6231 = vmatprep.subr.bf16.mxu0 %v5290
        %6232 = vmatpush1.bf16.msra.mxu0 %v5289
        %6233 = vmatprep.subr.bf16.mxu0 %v5297
        %6234 = vmatpush1.bf16.msra.mxu0 %v5296
        %6235 = vmatprep.subr.bf16.mxu0 %v5304
        %6236 = vmatpush1.bf16.msra.mxu0 %v5303
        %6237 = vmatprep.mubr.bf16.mxu0 %v2900
        %6238 = vmatmul.mubr.bf16.gmra.mrb[0].mxu0 %v2899
        %v6239 = vpop.f32.mrb[0].mxu0
        %v6240 = vadd.f32 %v6199, %v6239
        %v6241 = vpop.f32.mrb[0].mxu0
        %v6242 = vadd.f32 %v6201, %v6241
        %v6243 = vpop.f32.mrb[0].mxu0
        %v6244 = vpop.f32.mrb[0].mxu0
        %6245 = vdwg.mxu0
        %6246 = vmatprep.subr.bf16.mxu0 0
        %6247 = vmatpush1.bf16.msra.mxu0 %v4864
        %6248 = vmatprep.subr.bf16.mxu0 0
        %6249 = vmatpush1.bf16.msra.mxu0 %v4871
        %6250 = vmatprep.subr.bf16.mxu0 0
        %6251 = vmatpush1.bf16.msra.mxu0 %v4878
        %6252 = vmatprep.subr.bf16.mxu0 0
        %6253 = vmatpush1.bf16.msra.mxu0 %v4885
        %6254 = vmatprep.subr.bf16.mxu0 0
        %6255 = vmatpush1.bf16.msra.mxu0 %v4892
        %6256 = vmatprep.subr.bf16.mxu0 0
        %6257 = vmatpush1.bf16.msra.mxu0 %v4899
        %6258 = vmatprep.subr.bf16.mxu0 0
        %6259 = vmatpush1.bf16.msra.mxu0 %v4906
        %6260 = vmatprep.subr.bf16.mxu0 0
        %6261 = vmatpush1.bf16.msra.mxu0 %v4913
        %6262 = vmatprep.subr.bf16.mxu0 0
        %6263 = vmatpush1.bf16.msra.mxu0 %v4920
        %6264 = vmatprep.subr.bf16.mxu0 0
        %6265 = vmatpush1.bf16.msra.mxu0 %v4927
        %6266 = vmatprep.subr.bf16.mxu0 0
        %6267 = vmatpush1.bf16.msra.mxu0 %v4934
        %6268 = vmatprep.subr.bf16.mxu0 0
        %6269 = vmatpush1.bf16.msra.mxu0 %v4941
        %6270 = vmatprep.subr.bf16.mxu0 0
        %6271 = vmatpush1.bf16.msra.mxu0 %v4948
        %6272 = vmatprep.subr.bf16.mxu0 0
        %6273 = vmatpush1.bf16.msra.mxu0 %v4955
        %6274 = vmatprep.subr.bf16.mxu0 0
        %6275 = vmatpush1.bf16.msra.mxu0 %v4962
        %6276 = vmatprep.subr.bf16.mxu0 0
        %6277 = vmatpush1.bf16.msra.mxu0 %v4969
        %6278 = vmatprep.mubr.bf16.mxu0 %v2894
        %6279 = vmatmul.mubr.bf16.gmra.mrb[0].mxu0 %v2893
        %v6280 = vpop.f32.mrb[0].mxu0
        %v6281 = vadd.f32 %v3442, %v6280
        %v6282 = vpop.f32.mrb[0].mxu0
        %v6283 = vpop.f32.mrb[0].mxu0
        %v6284 = vpop.f32.mrb[0].mxu0
        %6285 = vdwg.mxu0
        %6286 = vmatprep.subr.bf16.mxu0 0
        %6287 = vmatpush1.bf16.msra.mxu0 %v4976
        %6288 = vmatprep.subr.bf16.mxu0 0
        %6289 = vmatpush1.bf16.msra.mxu0 %v4983
        %6290 = vmatprep.subr.bf16.mxu0 0
        %6291 = vmatpush1.bf16.msra.mxu0 %v4990
        %6292 = vmatprep.subr.bf16.mxu0 0
        %6293 = vmatpush1.bf16.msra.mxu0 %v4997
        %6294 = vmatprep.subr.bf16.mxu0 0
        %6295 = vmatpush1.bf16.msra.mxu0 %v5004
        %6296 = vmatprep.subr.bf16.mxu0 0
        %6297 = vmatpush1.bf16.msra.mxu0 %v5011
        %6298 = vmatprep.subr.bf16.mxu0 0
        %6299 = vmatpush1.bf16.msra.mxu0 %v5018
        %6300 = vmatprep.subr.bf16.mxu0 0
        %6301 = vmatpush1.bf16.msra.mxu0 %v5025
        %6302 = vmatprep.subr.bf16.mxu0 0
        %6303 = vmatpush1.bf16.msra.mxu0 %v5032
        %6304 = vmatprep.subr.bf16.mxu0 0
        %6305 = vmatpush1.bf16.msra.mxu0 %v5039
        %6306 = vmatprep.subr.bf16.mxu0 0
        %6307 = vmatpush1.bf16.msra.mxu0 %v5046
        %6308 = vmatprep.subr.bf16.mxu0 0
        %6309 = vmatpush1.bf16.msra.mxu0 %v5053
        %6310 = vmatprep.subr.bf16.mxu0 0
        %6311 = vmatpush1.bf16.msra.mxu0 %v5060
        %6312 = vmatprep.subr.bf16.mxu0 0
        %6313 = vmatpush1.bf16.msra.mxu0 %v5067
        %6314 = vmatprep.subr.bf16.mxu0 0
        %6315 = vmatpush1.bf16.msra.mxu0 %v5074
        %6316 = vmatprep.subr.bf16.mxu0 0
        %6317 = vmatpush1.bf16.msra.mxu0 %v5081
        %6318 = vmatprep.mubr.bf16.mxu0 %v2896
        %6319 = vmatmul.mubr.bf16.gmra.mrb[0].mxu0 %v2895
        %v6320 = vpop.f32.mrb[0].mxu0
        %v6321 = vadd.f32 %v6281, %v6320
        %v6322 = vpop.f32.mrb[0].mxu0
        %v6323 = vpop.f32.mrb[0].mxu0
        %v6324 = vpop.f32.mrb[0].mxu0
        %6325 = vdwg.mxu0
        %6326 = vmatprep.subr.bf16.mxu0 0
        %6327 = vmatpush1.bf16.msra.mxu0 %v5088
        %6328 = vmatprep.subr.bf16.mxu0 0
        %6329 = vmatpush1.bf16.msra.mxu0 %v5095
        %6330 = vmatprep.subr.bf16.mxu0 0
        %6331 = vmatpush1.bf16.msra.mxu0 %v5102
        %6332 = vmatprep.subr.bf16.mxu0 0
        %6333 = vmatpush1.bf16.msra.mxu0 %v5109
        %6334 = vmatprep.subr.bf16.mxu0 0
        %6335 = vmatpush1.bf16.msra.mxu0 %v5116
        %6336 = vmatprep.subr.bf16.mxu0 0
        %6337 = vmatpush1.bf16.msra.mxu0 %v5123
        %6338 = vmatprep.subr.bf16.mxu0 0
        %6339 = vmatpush1.bf16.msra.mxu0 %v5130
        %6340 = vmatprep.subr.bf16.mxu0 0
        %6341 = vmatpush1.bf16.msra.mxu0 %v5137
        %6342 = vmatprep.subr.bf16.mxu0 0
        %6343 = vmatpush1.bf16.msra.mxu0 %v5144
        %6344 = vmatprep.subr.bf16.mxu0 0
        %6345 = vmatpush1.bf16.msra.mxu0 %v5151
        %6346 = vmatprep.subr.bf16.mxu0 0
        %6347 = vmatpush1.bf16.msra.mxu0 %v5158
        %6348 = vmatprep.subr.bf16.mxu0 0
        %6349 = vmatpush1.bf16.msra.mxu0 %v5165
        %6350 = vmatprep.subr.bf16.mxu0 0
        %6351 = vmatpush1.bf16.msra.mxu0 %v5172
        %6352 = vmatprep.subr.bf16.mxu0 0
        %6353 = vmatpush1.bf16.msra.mxu0 %v5179
        %6354 = vmatprep.subr.bf16.mxu0 0
        %6355 = vmatpush1.bf16.msra.mxu0 %v5186
        %6356 = vmatprep.subr.bf16.mxu0 0
        %6357 = vmatpush1.bf16.msra.mxu0 %v5193
        %6358 = vmatprep.mubr.bf16.mxu0 %v2898
        %6359 = vmatmul.mubr.bf16.gmra.mrb[0].mxu0 %v2897
        %v6360 = vpop.f32.mrb[0].mxu0
        %v6361 = vadd.f32 %v6321, %v6360
        %v6362 = vpop.f32.mrb[0].mxu0
        %v6363 = vpop.f32.mrb[0].mxu0
        %v6364 = vpop.f32.mrb[0].mxu0
        %6365 = vdwg.mxu0
        %6366 = vmatprep.subr.bf16.mxu0 0
        %6367 = vmatpush1.bf16.msra.mxu0 %v5200
        %6368 = vmatprep.subr.bf16.mxu0 0
        %6369 = vmatpush1.bf16.msra.mxu0 %v5207
        %6370 = vmatprep.subr.bf16.mxu0 0
        %6371 = vmatpush1.bf16.msra.mxu0 %v5214
        %6372 = vmatprep.subr.bf16.mxu0 0
        %6373 = vmatpush1.bf16.msra.mxu0 %v5221
        %6374 = vmatprep.subr.bf16.mxu0 0
        %6375 = vmatpush1.bf16.msra.mxu0 %v5228
        %6376 = vmatprep.subr.bf16.mxu0 0
        %6377 = vmatpush1.bf16.msra.mxu0 %v5235
        %6378 = vmatprep.subr.bf16.mxu0 0
        %6379 = vmatpush1.bf16.msra.mxu0 %v5242
        %6380 = vmatprep.subr.bf16.mxu0 0
        %6381 = vmatpush1.bf16.msra.mxu0 %v5249
        %6382 = vmatprep.subr.bf16.mxu0 0
        %6383 = vmatpush1.bf16.msra.mxu0 %v5256
        %6384 = vmatprep.subr.bf16.mxu0 0
        %6385 = vmatpush1.bf16.msra.mxu0 %v5263
        %6386 = vmatprep.subr.bf16.mxu0 0
        %6387 = vmatpush1.bf16.msra.mxu0 %v5270
        %6388 = vmatprep.subr.bf16.mxu0 0
        %6389 = vmatpush1.bf16.msra.mxu0 %v5277
        %6390 = vmatprep.subr.bf16.mxu0 0
        %6391 = vmatpush1.bf16.msra.mxu0 %v5284
        %6392 = vmatprep.subr.bf16.mxu0 0
        %6393 = vmatpush1.bf16.msra.mxu0 %v5291
        %6394 = vmatprep.subr.bf16.mxu0 0
        %6395 = vmatpush1.bf16.msra.mxu0 %v5298
        %6396 = vmatprep.subr.bf16.mxu0 0
        %6397 = vmatpush1.bf16.msra.mxu0 %v5305
        %6398 = vmatprep.mubr.bf16.mxu0 %v2900
        %6399 = vmatmul.mubr.bf16.gmra.mrb[0].mxu0 %v2899
        %v6400 = vpop.f32.mrb[0].mxu0
        %v6401 = vadd.f32 %v6361, %v6400
        %v6402 = vpop.f32.mrb[0].mxu0
        %v6403 = vpop.f32.mrb[0].mxu0
        %v6404 = vpop.f32.mrb[0].mxu0
        %6405 = vdwg.mxu0
        %v6406 = vtanh.pop %v5912
        %v6407 = vtanh.pop %v5914
        %v6408 = vtanh.pop %v6076
        %v6409 = vtanh.pop %v6078
        %v6410 = vtanh.pop %v6240
        %v6411 = vtanh.pop %v6242
        %v6412 = vtanh.pop %v6401
        %6413 = vst [vmem:[%s323] sm:$0xff] %v6406
        %6414 = vst [vmem:[%s323 + $0x8] sm:$0xff] %v6407
        %6415 = vst [vmem:[%s323 + $0x10] sm:$0xff] %v6408
        %6416 = vst [vmem:[%s323 + $0x18] sm:$0xff] %v6409
        %6417 = vst [vmem:[%s323 + $0x20] sm:$0xff] %v6410
        %6418 = vst [vmem:[%s323 + $0x28] sm:$0xff] %v6411
        %vm6419 = vcmask 130048
        %6420 = vst.msk [vmem:[%s323 + $0x30] sm:$0xff] %vm6419, %v6412
        %s6421 = sand.u32 %s225, 1
        %s6422 = scalar_lea.sflag [#allocation3], %s6421
        %s6423 = sand.u32 %s225, 1
        %s6424 = smul.addr %s6423, 56
        %s6425 = scalar_lea.vmem [#allocation2], %s6424
        // Predicated region
        $region57: #{tpu_custom_call.1} parent=55 // pred_check
          %p6426 = pneg %p235
        $region58: #{tpu_custom_call.1} parent=55 // pred_check_branch
          %6428 = sbr.rel (%p6426) target = $region60
        $region59: #{tpu_custom_call.1} parent=55 // pred_region
          %s6430 = ssub.s32 896, 896
          %6431 = vsyncadd %s6422, %s6430
          %s6432 = smul.addr %s23, 7
          %s6433 = smul.addr %s6432, 128
          %s6434 = scalar_lea.hbm %s9, %s6433
          %s6436 = sshll.u32 %s6425, 4
          %s6437 = int_to_ptr.vmem [resolvable:$true] %s6436
          %6439 = dma.vmem_to_hbm [thread:$0]  %s6437, 896, %s6434, %s6422
        $region60: #{tpu_custom_call.1} parent=55 // pred_fallthru
          _
      $region56: #{tpu_custom_call.1} parent=5 // pred_fallthru
        _
      %p6440 = scmp.le.s32.totalorder 2, %s18
      // Predicated region
      $region61: #{tpu_custom_call.1} parent=5 // pred_check
        %p6441 = pneg %p6440
      $region62: #{tpu_custom_call.1} parent=5 // pred_check_branch
        %6443 = sbr.rel (%p6441) target = $region64
      $region63: #{tpu_custom_call.1} parent=5 // pred_region
        %s6444 = ssub.s32 %s18, 2
        // Predicated region
        $region65: #{tpu_custom_call.1} parent=63 // pred_check
          %p6445 = pneg %p241
        $region66: #{tpu_custom_call.1} parent=63 // pred_check_branch
          %6447 = sbr.rel (%p6445) target = $region68
        $region67: #{tpu_custom_call.1} parent=63 // pred_region
          %s6448 = sand.u32 %s226, 1
          %s6449 = scalar_lea.sflag [#allocation3], %s6448
          %s6450 = sand.u32 %s226, 1
          %s6451 = smul.addr %s6450, 56
          %s6452 = scalar_lea.vmem [#allocation2], %s6451
          %6453 = dma.done %s6449, 896
        $region68: #{tpu_custom_call.1} parent=63 // pred_fallthru
          _
      $region64: #{tpu_custom_call.1} parent=5 // pred_fallthru
        _
    $region6: #{tpu_custom_call.1} parent=1 // loop_footer
      %s22 = sadd.s32 1, %s18
    $region7: #{tpu_custom_call.1} parent=1 // loop_footer_branch
      %17 = sbr.rel target = $region3
    $region8: #{tpu_custom_call.1} parent=1 // loop_exit
      _
    %6454 = vsyncpa [#allocation3], 1
    %s6455 = scalar_lea.sflag [#allocation3], 1
    %6456 = vsyncpa %s6455, 1

</llo_original>
